<compile_context>
chip_gen: v7x
topology: tpu7x:2x2x1
jax: 0.10.0
libtpu: 0.0.40
codegen_flags: <defaults>
</compile_context>

<pallas_src>
import functools

import jax
import jax.numpy as jnp
from jax import lax
from jax.experimental import pallas as pl
from jax.experimental.pallas import tpu as pltpu


def _round_up(x, m):
    return (x + m - 1) // m * m


# ----------------------------- kernel helpers -----------------------------

def _conv3x3_im2col(load, w_ref, b_ref, a_ref, store, w_src, m_total, chunk):
    """Valid 3x3 conv + bias + PReLU on a flat (rows, Cin) buffer.

    load(s, L)      -> rows [s, s+L) of the source, shape (L, Cin).
    store(s, L, y)  <- consumes the (L, Cout) activated result for rows [s, s+L).

    Output flat row m = i*w_src + j equals
        sum_{kh,kw} src[m + kh*w_src + kw] @ w[kh, kw]
    which for valid (i, j) is exactly the valid convolution.  The 9 taps are
    fused into one MXU dot per row-chunk via a (kh-grouped) im2col lane-concat,
    K = 9*Cin; the weight must already be reshaped to (9*Cin, Cout) with
    (kh, kw, cin) row-major ordering.
    """
    for base in range(0, m_total, chunk):
        L = min(chunk, m_total - base)
        # Two-level concat (3 pieces at a time) keeps operand liveness low.
        lhs = jnp.concatenate(
            [jnp.concatenate(
                [load(base + kh * w_src + kw, L) for kw in range(3)], axis=-1)
             for kh in range(3)], axis=-1)                    # (L, 9*Cin)
        y = jnp.dot(lhs, w_ref[...], preferred_element_type=jnp.float32)
        y = y + b_ref[...]                                    # (1, Cout) bcast
        y = jnp.where(y >= 0.0, y, a_ref[...] * y)            # PReLU
        store(base, L, y)


def _pnet_kernel(x_ref,
                 w1_ref, b1_ref, a1_ref,
                 w2_ref, b2_ref, a2_ref,
                 w3_ref, b3_ref, a3_ref,
                 wh_ref, bh_ref,
                 out_ref,
                 c1_ref, p1_ref, c2_ref,
                 *, B, H, W, CH):
    H1, W1 = H - 2, W - 2                       # conv1 valid size
    Hp, Wp = -(-H1 // 2), -(-W1 // 2)           # pool (ceil_mode) size
    S1 = H * W                                  # per-image row stride, stage 1
    S2 = Hp * Wp                                # per-image row stride, stage 2
    M1 = _round_up(B * S1, 8)                   # conv1 computed rows (all imgs)
    M2 = _round_up(B * S2, 8)                   # conv2/conv3/head computed rows
    P_ROWS = p1_ref.shape[0]
    C2_ROWS = c2_ref.shape[0]

    # -------- conv1 (3->10) + PReLU : one deep dot per row chunk, all imgs ----
    def store_c1(base, L, y):
        if W1 % 2 == 1:
            # ceil_mode pool reads (garbage) column W1; neutralize so the max
            # ignores it.  Column index is per-image local since S1 % W == 0.
            col = (base + lax.broadcasted_iota(jnp.int32, (L, 1), 0)) % W
            y = jnp.where(col < W1, y, -jnp.inf)
        c1_ref[base:base + L, :] = y

    _conv3x3_im2col(lambda s, L: x_ref[0, s:s + L, :],
                    w1_ref, b1_ref, a1_ref, store_c1, W, M1, CH)

    # -------- maxpool 2x2 stride 2, ceil_mode (vectorized per pooled row) -----
    for b in range(B):
        cb, pb = b * S1, b * S2
        for hp in range(Hp):
            r0 = 2 * hp
            r1 = min(2 * hp + 1, H1 - 1)        # ceil_mode: clamp last row
            e = jnp.maximum(c1_ref[pl.ds(cb + r0 * W, Wp, 2), :],
                            c1_ref[pl.ds(cb + r1 * W, Wp, 2), :])      # even col
            o = jnp.maximum(c1_ref[pl.ds(cb + r0 * W + 1, Wp, 2), :],
                            c1_ref[pl.ds(cb + r1 * W + 1, Wp, 2), :])  # odd col
            p1_ref[pb + hp * Wp:pb + (hp + 1) * Wp, :] = jnp.maximum(e, o)
    # Zero the tail rows that conv2's taps may read for garbage output rows.
    p1_ref[B * S2:P_ROWS, :] = jnp.zeros((P_ROWS - B * S2, 10), jnp.float32)

    # -------- conv2 (10->16) + PReLU ----------------------------------------
    def store_c2(base, L, y):
        c2_ref[base:base + L, :] = y

    _conv3x3_im2col(lambda s, L: p1_ref[s:s + L, :],
                    w2_ref, b2_ref, a2_ref, store_c2, Wp, M2, CH)
    c2_ref[M2:C2_ROWS, :] = jnp.zeros((C2_ROWS - M2, 16), jnp.float32)

    # -------- conv3 (16->32) + PReLU fused with packed 1x1 heads -------------
    def store_head(base, L, a3):
        y = jnp.dot(a3, wh_ref[...], preferred_element_type=jnp.float32)
        y = y + bh_ref[...]                     # (L, 6) = [reg(4) | cls(2)]
        d = y[:, 4:5] - y[:, 5:6]               # cls0 - cls1 logit difference
        p0 = 1.0 / (1.0 + jnp.exp(-d))          # softmax([c0, c1])[0]
        lane = lax.broadcasted_iota(jnp.int32, (L, 6), 1)
        packed = jnp.where(lane < 4, y,
                           jnp.where(lane == 4, p0, 1.0 - p0))
        out_ref[0, base:base + L, :] = packed

    _conv3x3_im2col(lambda s, L: c2_ref[s:s + L, :],
                    w3_ref, b3_ref, a3_ref, store_head, Wp, M2, CH)


# ----------------------------- wrapper / params -----------------------------

def init_params(key):
    """Deterministic synthetic parameters (shapes from PNet.__init__), HWIO."""
    ks = jax.random.split(key, 13)

    def rnd(k, shape, scale=0.1):
        return (scale * jax.random.normal(k, shape)).astype(jnp.float32)

    return dict(
        w1=rnd(ks[0], (3, 3, 3, 10)),   b1=rnd(ks[1], (1, 10), 0.05),
        a1=jnp.full((1, 10), 0.25, jnp.float32) + rnd(ks[2], (1, 10), 0.02),
        w2=rnd(ks[3], (3, 3, 10, 16)),  b2=rnd(ks[4], (1, 16), 0.05),
        a2=jnp.full((1, 16), 0.25, jnp.float32) + rnd(ks[5], (1, 16), 0.02),
        w3=rnd(ks[6], (3, 3, 16, 32)),  b3=rnd(ks[7], (1, 32), 0.05),
        a3=jnp.full((1, 32), 0.25, jnp.float32) + rnd(ks[8], (1, 32), 0.02),
        w41=rnd(ks[9], (1, 1, 32, 2)),  b41=rnd(ks[10], (1, 2), 0.05),
        w42=rnd(ks[11], (1, 1, 32, 4)), b42=rnd(ks[12], (1, 4), 0.05),
    )


def pnet_pallas(x_nchw, params, images_per_step=None, row_chunk=256):
    """Returns (regression, probability) with PyTorch NCHW conventions."""
    N, Cin, H, W = x_nchw.shape
    assert Cin == 3 and H >= 12 and W >= 12

    H1, W1 = H - 2, W - 2                    # conv1 (valid 3x3)
    Hp, Wp = -(-H1 // 2), -(-W1 // 2)        # maxpool 2x2 ceil_mode
    H2, W2 = Hp - 2, Wp - 2                  # conv2
    H3, W3 = H2 - 2, W2 - 2                  # conv3 / heads
    L3 = H3 * Wp                             # packed head rows per image
    S1, S2 = H * W, Hp * Wp                  # per-image row strides

    # Images per grid step: batch along M inside the kernel, but keep the grid
    # length >= 2 whenever possible so both v7x TensorCores get a share.
    if images_per_step is None:
        B = 1 if N <= 1 else max(
            d for d in (8, 4, 2, 1) if N % d == 0 and N // d >= 2)
    else:
        B = images_per_step
    assert N % B == 0
    CH = row_chunk

    M1 = _round_up(B * S1, 8)                # conv1 computed rows
    M2 = _round_up(B * S2, 8)                # conv2/conv3/head computed rows
    TAIL1 = _round_up(2 * W + 2, 8)          # conv1 tap overhang (rows)
    TAIL2 = _round_up(2 * Wp + 2, 8)         # conv2/conv3 tap overhang (rows)
    X_ROWS = M1 + TAIL1

    # NCHW -> flat spatial-major (pixels on sublanes, channels on lanes);
    # B images stacked along rows at stride S1, zero tail for tap overhang.
    x = jnp.transpose(x_nchw, (0, 2, 3, 1)).astype(jnp.float32)
    x = x.reshape(N // B, B * S1, 3)
    x = jnp.pad(x, ((0, 0), (0, X_ROWS - B * S1), (0, 0)))

    # Conv weights reshaped for the im2col dot (K = 9*Cin, (kh,kw,cin) major ->
    # minor) and the two 1x1 heads packed into one (32, 6) matmul: [reg | cls].
    w1 = params["w1"].reshape(27, 10)
    w2 = params["w2"].reshape(90, 16)
    w3 = params["w3"].reshape(144, 32)
    wh = jnp.concatenate([params["w42"][0, 0], params["w41"][0, 0]], axis=-1)
    bh = jnp.concatenate([params["b42"], params["b41"]], axis=-1)

    plist = [w1, params["b1"], params["a1"],
             w2, params["b2"], params["a2"],
             w3, params["b3"], params["a3"],
             wh, bh]

    def rep_spec(arr):                       # replicated (grid-invariant) param
        nd = arr.ndim
        return pl.BlockSpec(arr.shape, lambda n, _nd=nd: (0,) * _nd)

    in_specs = [pl.BlockSpec((1, X_ROWS, 3), lambda n: (n, 0, 0))]
    in_specs += [rep_spec(p) for p in plist]
    out_specs = pl.BlockSpec((1, M2, 6), lambda n: (n, 0, 0))
    out_shape = jax.ShapeDtypeStruct((N // B, M2, 6), jnp.float32)

    scratch_shapes = [
        pltpu.VMEM((M1, 10), jnp.float32),           # conv1 out (stride S1)
        pltpu.VMEM((M2 + TAIL2, 10), jnp.float32),   # pool1 out (stride S2)
        pltpu.VMEM((M2 + TAIL2, 16), jnp.float32),   # conv2 out (stride S2)
    ]

    # VMEM budget (lane-padded to 128 per row): scratches + double-buffered
    # input/output blocks; floor at 32 MiB (v5e's default scoped is only 16).
    def _padded(rows, lanes):
        return rows * _round_up(lanes, 128) * 4
    vmem_est = (_padded(M1, 10) + _padded(M2 + TAIL2, 10)
                + _padded(M2 + TAIL2, 16)
                + 2 * _padded(X_ROWS, 3) + 2 * _padded(M2, 6))
    vmem_limit = int(min(max(2 * vmem_est + (8 << 20), 32 << 20), 64 << 20))

    kernel = functools.partial(_pnet_kernel, B=B, H=H, W=W, CH=CH)

    out = pl.pallas_call(
        kernel,
        out_shape=out_shape,
        grid_spec=pltpu.PrefetchScalarGridSpec(
            num_scalar_prefetch=0,
            grid=(N // B,),
            in_specs=in_specs,
            out_specs=out_specs,
            scratch_shapes=scratch_shapes,
        ),
        compiler_params=pltpu.CompilerParams(
            dimension_semantics=("parallel",),        # batch axis -> megacore
            vmem_limit_bytes=vmem_limit,
        ),
    )(x, *plist)

    # Unpack: (N//B, M2, 6) -> per-image (S2, 6) -> (H3, Wp, 6) -> valid cols
    # -> NCHW heads.
    out = out[:, :B * S2, :].reshape(N, S2, 6)
    out = out[:, :L3, :].reshape(N, H3, Wp, 6)[:, :, :W3, :]
    reg = jnp.transpose(out[..., 0:4], (0, 3, 1, 2))
    prob = jnp.transpose(out[..., 4:6], (0, 3, 1, 2))
    return reg, prob


# ----------------------------- pure-JAX reference -----------------------------

def pnet_reference(x_nchw, params):
    def conv(x, w_hwio, b):
        y = lax.conv_general_dilated(
            x, w_hwio, window_strides=(1, 1), padding="VALID",
            dimension_numbers=("NCHW", "HWIO", "NCHW"))
        return y + b.reshape(1, -1, 1, 1)

    def prelu(x, a):
        a = a.reshape(1, -1, 1, 1)
        return jnp.where(x >= 0, x, a * x)

    x = prelu(conv(x_nchw, params["w1"], params["b1"]), params["a1"])
    _, _, Hc, Wc = x.shape
    ph, pw = (-Hc) % 2, (-Wc) % 2                    # ceil_mode padding
    x = jnp.pad(x, ((0, 0), (0, 0), (0, ph), (0, pw)),
                constant_values=-jnp.inf)
    x = lax.reduce_window(x, -jnp.inf, lax.max,
                          (1, 1, 2, 2), (1, 1, 2, 2), "VALID")
    x = prelu(conv(x, params["w2"], params["b2"]), params["a2"])
    x = prelu(conv(x, params["w3"], params["b3"]), params["a3"])
    cls = conv(x, params["w41"], params["b41"])
    prob = jax.nn.softmax(cls, axis=1)
    reg = conv(x, params["w42"], params["b42"])
    return reg, prob


# ----------------------------- main -----------------------------

if __name__ == "__main__":
    key = jax.random.PRNGKey(0)
    kx, kp = jax.random.split(key)
    x = jax.random.normal(kx, (2, 3, 16, 16), dtype=jnp.float32)
    params = init_params(kp)

    reg, prob = pnet_pallas(x, params)
    jax.block_until_ready((reg, prob))

    reg_ref, prob_ref = pnet_reference(x, params)
    assert reg.shape == reg_ref.shape == (2, 4, 3, 3)
    assert prob.shape == prob_ref.shape == (2, 2, 3, 3)
    err_r = float(jnp.max(jnp.abs(reg - reg_ref)))
    err_p = float(jnp.max(jnp.abs(prob - prob_ref)))
    assert err_r < 2e-3 and err_p < 2e-3, (err_r, err_p)
    print("KERNEL_OK")
</pallas_src>

<mosaic_0001>
module attributes {stable_mosaic.version = 11 : i64} {
  func.func @_pnet_kernel(%arg0: i32, %arg1: memref<1x296x3xf32, #tpu.memory_space<vmem>>, %arg2: memref<27x10xf32, #tpu.memory_space<vmem>>, %arg3: memref<1x10xf32, #tpu.memory_space<vmem>>, %arg4: memref<1x10xf32, #tpu.memory_space<vmem>>, %arg5: memref<90x16xf32, #tpu.memory_space<vmem>>, %arg6: memref<1x16xf32, #tpu.memory_space<vmem>>, %arg7: memref<1x16xf32, #tpu.memory_space<vmem>>, %arg8: memref<144x32xf32, #tpu.memory_space<vmem>>, %arg9: memref<1x32xf32, #tpu.memory_space<vmem>>, %arg10: memref<1x32xf32, #tpu.memory_space<vmem>>, %arg11: memref<32x6xf32, #tpu.memory_space<vmem>>, %arg12: memref<1x6xf32, #tpu.memory_space<vmem>>, %arg13: memref<1x56x6xf32, #tpu.memory_space<vmem>>, %arg14: memref<256x10xf32, #tpu.memory_space<vmem>>, %arg15: memref<72x10xf32, #tpu.memory_space<vmem>>, %arg16: memref<72x16xf32, #tpu.memory_space<vmem>>) attributes {dimension_semantics = [#tpu.dimension_semantics<parallel>], iteration_bounds = array<i64: 2>, scalar_prefetch = 0 : i64, scratch_operands = 3 : i64, tpu.core_type = #tpu.core_type<tc>, window_params = [{transform_indices = @transform_0, window_bounds = array<i64: 1, 296, 3>}, {pipeline_mode = #tpu.pipeline_mode<synchronous>, transform_indices = @transform_1, window_bounds = array<i64: 27, 10>}, {pipeline_mode = #tpu.pipeline_mode<synchronous>, transform_indices = @transform_2, window_bounds = array<i64: 1, 10>}, {pipeline_mode = #tpu.pipeline_mode<synchronous>, transform_indices = @transform_3, window_bounds = array<i64: 1, 10>}, {pipeline_mode = #tpu.pipeline_mode<synchronous>, transform_indices = @transform_4, window_bounds = array<i64: 90, 16>}, {pipeline_mode = #tpu.pipeline_mode<synchronous>, transform_indices = @transform_5, window_bounds = array<i64: 1, 16>}, {pipeline_mode = #tpu.pipeline_mode<synchronous>, transform_indices = @transform_6, window_bounds = array<i64: 1, 16>}, {pipeline_mode = #tpu.pipeline_mode<synchronous>, transform_indices = @transform_7, window_bounds = array<i64: 144, 32>}, {pipeline_mode = #tpu.pipeline_mode<synchronous>, transform_indices = @transform_8, window_bounds = array<i64: 1, 32>}, {pipeline_mode = #tpu.pipeline_mode<synchronous>, transform_indices = @transform_9, window_bounds = array<i64: 1, 32>}, {pipeline_mode = #tpu.pipeline_mode<synchronous>, transform_indices = @transform_10, window_bounds = array<i64: 32, 6>}, {pipeline_mode = #tpu.pipeline_mode<synchronous>, transform_indices = @transform_11, window_bounds = array<i64: 1, 6>}, {transform_indices = @transform_12, window_bounds = array<i64: 1, 56, 6>}]} {
    %c0 = arith.constant 0 : index
    %c0_0 = arith.constant 0 : index
    %c0_1 = arith.constant 0 : index
    %0 = vector.load %arg1[%c0, %c0_0, %c0_1] : memref<1x296x3xf32, #tpu.memory_space<vmem>>, vector<1x256x3xf32>
    %1 = vector.shape_cast %0 : vector<1x256x3xf32> to vector<256x3xf32>
    %c0_2 = arith.constant 0 : index
    %c1 = arith.constant 1 : index
    %c0_3 = arith.constant 0 : index
    %2 = vector.load %arg1[%c0_2, %c1, %c0_3] : memref<1x296x3xf32, #tpu.memory_space<vmem>>, vector<1x256x3xf32>
    %3 = vector.shape_cast %2 : vector<1x256x3xf32> to vector<256x3xf32>
    %c0_4 = arith.constant 0 : index
    %c2 = arith.constant 2 : index
    %c0_5 = arith.constant 0 : index
    %4 = vector.load %arg1[%c0_4, %c2, %c0_5] : memref<1x296x3xf32, #tpu.memory_space<vmem>>, vector<1x256x3xf32>
    %5 = vector.shape_cast %4 : vector<1x256x3xf32> to vector<256x3xf32>
    %6 = tpu.concatenate %1, %3, %5 in 1 : vector<256x3xf32>, vector<256x3xf32>, vector<256x3xf32> -> vector<256x9xf32>
    %c0_6 = arith.constant 0 : index
    %c16 = arith.constant 16 : index
    %c0_7 = arith.constant 0 : index
    %7 = vector.load %arg1[%c0_6, %c16, %c0_7] : memref<1x296x3xf32, #tpu.memory_space<vmem>>, vector<1x256x3xf32>
    %8 = vector.shape_cast %7 : vector<1x256x3xf32> to vector<256x3xf32>
    %c0_8 = arith.constant 0 : index
    %c17 = arith.constant 17 : index
    %c0_9 = arith.constant 0 : index
    %9 = vector.load %arg1[%c0_8, %c17, %c0_9] : memref<1x296x3xf32, #tpu.memory_space<vmem>>, vector<1x256x3xf32>
    %10 = vector.shape_cast %9 : vector<1x256x3xf32> to vector<256x3xf32>
    %c0_10 = arith.constant 0 : index
    %c18 = arith.constant 18 : index
    %c0_11 = arith.constant 0 : index
    %11 = vector.load %arg1[%c0_10, %c18, %c0_11] : memref<1x296x3xf32, #tpu.memory_space<vmem>>, vector<1x256x3xf32>
    %12 = vector.shape_cast %11 : vector<1x256x3xf32> to vector<256x3xf32>
    %13 = tpu.concatenate %8, %10, %12 in 1 : vector<256x3xf32>, vector<256x3xf32>, vector<256x3xf32> -> vector<256x9xf32>
    %c0_12 = arith.constant 0 : index
    %c32 = arith.constant 32 : index
    %c0_13 = arith.constant 0 : index
    %14 = vector.load %arg1[%c0_12, %c32, %c0_13] : memref<1x296x3xf32, #tpu.memory_space<vmem>>, vector<1x256x3xf32>
    %15 = vector.shape_cast %14 : vector<1x256x3xf32> to vector<256x3xf32>
    %c0_14 = arith.constant 0 : index
    %c33 = arith.constant 33 : index
    %c0_15 = arith.constant 0 : index
    %16 = vector.load %arg1[%c0_14, %c33, %c0_15] : memref<1x296x3xf32, #tpu.memory_space<vmem>>, vector<1x256x3xf32>
    %17 = vector.shape_cast %16 : vector<1x256x3xf32> to vector<256x3xf32>
    %c0_16 = arith.constant 0 : index
    %c34 = arith.constant 34 : index
    %c0_17 = arith.constant 0 : index
    %18 = vector.load %arg1[%c0_16, %c34, %c0_17] : memref<1x296x3xf32, #tpu.memory_space<vmem>>, vector<1x256x3xf32>
    %19 = vector.shape_cast %18 : vector<1x256x3xf32> to vector<256x3xf32>
    %20 = tpu.concatenate %15, %17, %19 in 1 : vector<256x3xf32>, vector<256x3xf32>, vector<256x3xf32> -> vector<256x9xf32>
    %21 = tpu.concatenate %6, %13, %20 in 1 : vector<256x9xf32>, vector<256x9xf32>, vector<256x9xf32> -> vector<256x27xf32>
    %c0_18 = arith.constant 0 : index
    %c0_19 = arith.constant 0 : index
    %22 = vector.load %arg2[%c0_18, %c0_19] : memref<27x10xf32, #tpu.memory_space<vmem>>, vector<27x10xf32>
    %cst = arith.constant dense<0.000000e+00> : vector<256x10xf32>
    %23 = tpu.matmul %21, %22, %cst {dimension_numbers = #tpu.dot_dimension_numbers<[1], [0], [0], [1], [0, 0, 1, 1], [], []>} : vector<256x27xf32>, vector<27x10xf32>, vector<256x10xf32> -> vector<256x10xf32>
    %c0_20 = arith.constant 0 : index
    %c0_21 = arith.constant 0 : index
    %24 = vector.load %arg3[%c0_20, %c0_21] : memref<1x10xf32, #tpu.memory_space<vmem>>, vector<1x10xf32>
    %25 = vector.broadcast %24 : vector<1x10xf32> to vector<256x10xf32>
    %26 = arith.addf %23, %25 : vector<256x10xf32>
    %cst_22 = arith.constant 0.000000e+00 : f32
    %27 = vector.broadcast %cst_22 : f32 to vector<256x10xf32>
    %28 = arith.cmpf oge, %26, %27 : vector<256x10xf32>
    %c0_23 = arith.constant 0 : index
    %c0_24 = arith.constant 0 : index
    %29 = vector.load %arg4[%c0_23, %c0_24] : memref<1x10xf32, #tpu.memory_space<vmem>>, vector<1x10xf32>
    %30 = vector.broadcast %29 : vector<1x10xf32> to vector<256x10xf32>
    %31 = arith.mulf %30, %26 : vector<256x10xf32>
    %32 = arith.select %28, %26, %31 : vector<256x10xi1>, vector<256x10xf32>
    %c0_25 = arith.constant 0 : index
    %c0_26 = arith.constant 0 : index
    %33 = vector.load %arg14[%c0_25, %c0_26] : memref<256x10xf32, #tpu.memory_space<vmem>>, vector<256x10xf32>
    tpu.vector_store %arg14[%c0_25, %c0_26], %32 {strides = array<i32>} : memref<256x10xf32, #tpu.memory_space<vmem>>, vector<256x10xf32>,
    %c0_27 = arith.constant 0 : index
    %c0_28 = arith.constant 0 : index
    %34 = tpu.strided_load %arg14[%c0_27, %c0_28] {strides = array<i32: 2, 1>} : memref<256x10xf32, #tpu.memory_space<vmem>>, vector<7x10xf32>
    %c16_29 = arith.constant 16 : index
    %c0_30 = arith.constant 0 : index
    %35 = tpu.strided_load %arg14[%c16_29, %c0_30] {strides = array<i32: 2, 1>} : memref<256x10xf32, #tpu.memory_space<vmem>>, vector<7x10xf32>
    %36 = arith.maximumf %34, %35 : vector<7x10xf32>
    %c1_31 = arith.constant 1 : index
    %c0_32 = arith.constant 0 : index
    %37 = tpu.strided_load %arg14[%c1_31, %c0_32] {strides = array<i32: 2, 1>} : memref<256x10xf32, #tpu.memory_space<vmem>>, vector<7x10xf32>
    %c17_33 = arith.constant 17 : index
    %c0_34 = arith.constant 0 : index
    %38 = tpu.strided_load %arg14[%c17_33, %c0_34] {strides = array<i32: 2, 1>} : memref<256x10xf32, #tpu.memory_space<vmem>>, vector<7x10xf32>
    %39 = arith.maximumf %37, %38 : vector<7x10xf32>
    %40 = arith.maximumf %36, %39 : vector<7x10xf32>
    %c0_35 = arith.constant 0 : index
    %c0_36 = arith.constant 0 : index
    %41 = vector.load %arg15[%c0_35, %c0_36] : memref<72x10xf32, #tpu.memory_space<vmem>>, vector<7x10xf32>
    tpu.vector_store %arg15[%c0_35, %c0_36], %40 {strides = array<i32>} : memref<72x10xf32, #tpu.memory_space<vmem>>, vector<7x10xf32>,
    %c32_37 = arith.constant 32 : index
    %c0_38 = arith.constant 0 : index
    %42 = tpu.strided_load %arg14[%c32_37, %c0_38] {strides = array<i32: 2, 1>} : memref<256x10xf32, #tpu.memory_space<vmem>>, vector<7x10xf32>
    %c48 = arith.constant 48 : index
    %c0_39 = arith.constant 0 : index
    %43 = tpu.strided_load %arg14[%c48, %c0_39] {strides = array<i32: 2, 1>} : memref<256x10xf32, #tpu.memory_space<vmem>>, vector<7x10xf32>
    %44 = arith.maximumf %42, %43 : vector<7x10xf32>
    %c33_40 = arith.constant 33 : index
    %c0_41 = arith.constant 0 : index
    %45 = tpu.strided_load %arg14[%c33_40, %c0_41] {strides = array<i32: 2, 1>} : memref<256x10xf32, #tpu.memory_space<vmem>>, vector<7x10xf32>
    %c49 = arith.constant 49 : index
    %c0_42 = arith.constant 0 : index
    %46 = tpu.strided_load %arg14[%c49, %c0_42] {strides = array<i32: 2, 1>} : memref<256x10xf32, #tpu.memory_space<vmem>>, vector<7x10xf32>
    %47 = arith.maximumf %45, %46 : vector<7x10xf32>
    %48 = arith.maximumf %44, %47 : vector<7x10xf32>
    %c7 = arith.constant 7 : index
    %c0_43 = arith.constant 0 : index
    %49 = vector.load %arg15[%c7, %c0_43] : memref<72x10xf32, #tpu.memory_space<vmem>>, vector<7x10xf32>
    tpu.vector_store %arg15[%c7, %c0_43], %48 {strides = array<i32>} : memref<72x10xf32, #tpu.memory_space<vmem>>, vector<7x10xf32>,
    %c64 = arith.constant 64 : index
    %c0_44 = arith.constant 0 : index
    %50 = tpu.strided_load %arg14[%c64, %c0_44] {strides = array<i32: 2, 1>} : memref<256x10xf32, #tpu.memory_space<vmem>>, vector<7x10xf32>
    %c80 = arith.constant 80 : index
    %c0_45 = arith.constant 0 : index
    %51 = tpu.strided_load %arg14[%c80, %c0_45] {strides = array<i32: 2, 1>} : memref<256x10xf32, #tpu.memory_space<vmem>>, vector<7x10xf32>
    %52 = arith.maximumf %50, %51 : vector<7x10xf32>
    %c65 = arith.constant 65 : index
    %c0_46 = arith.constant 0 : index
    %53 = tpu.strided_load %arg14[%c65, %c0_46] {strides = array<i32: 2, 1>} : memref<256x10xf32, #tpu.memory_space<vmem>>, vector<7x10xf32>
    %c81 = arith.constant 81 : index
    %c0_47 = arith.constant 0 : index
    %54 = tpu.strided_load %arg14[%c81, %c0_47] {strides = array<i32: 2, 1>} : memref<256x10xf32, #tpu.memory_space<vmem>>, vector<7x10xf32>
    %55 = arith.maximumf %53, %54 : vector<7x10xf32>
    %56 = arith.maximumf %52, %55 : vector<7x10xf32>
    %c14 = arith.constant 14 : index
    %c0_48 = arith.constant 0 : index
    %57 = vector.load %arg15[%c14, %c0_48] : memref<72x10xf32, #tpu.memory_space<vmem>>, vector<7x10xf32>
    tpu.vector_store %arg15[%c14, %c0_48], %56 {strides = array<i32>} : memref<72x10xf32, #tpu.memory_space<vmem>>, vector<7x10xf32>,
    %c96 = arith.constant 96 : index
    %c0_49 = arith.constant 0 : index
    %58 = tpu.strided_load %arg14[%c96, %c0_49] {strides = array<i32: 2, 1>} : memref<256x10xf32, #tpu.memory_space<vmem>>, vector<7x10xf32>
    %c112 = arith.constant 112 : index
    %c0_50 = arith.constant 0 : index
    %59 = tpu.strided_load %arg14[%c112, %c0_50] {strides = array<i32: 2, 1>} : memref<256x10xf32, #tpu.memory_space<vmem>>, vector<7x10xf32>
    %60 = arith.maximumf %58, %59 : vector<7x10xf32>
    %c97 = arith.constant 97 : index
    %c0_51 = arith.constant 0 : index
    %61 = tpu.strided_load %arg14[%c97, %c0_51] {strides = array<i32: 2, 1>} : memref<256x10xf32, #tpu.memory_space<vmem>>, vector<7x10xf32>
    %c113 = arith.constant 113 : index
    %c0_52 = arith.constant 0 : index
    %62 = tpu.strided_load %arg14[%c113, %c0_52] {strides = array<i32: 2, 1>} : memref<256x10xf32, #tpu.memory_space<vmem>>, vector<7x10xf32>
    %63 = arith.maximumf %61, %62 : vector<7x10xf32>
    %64 = arith.maximumf %60, %63 : vector<7x10xf32>
    %c21 = arith.constant 21 : index
    %c0_53 = arith.constant 0 : index
    %65 = vector.load %arg15[%c21, %c0_53] : memref<72x10xf32, #tpu.memory_space<vmem>>, vector<7x10xf32>
    tpu.vector_store %arg15[%c21, %c0_53], %64 {strides = array<i32>} : memref<72x10xf32, #tpu.memory_space<vmem>>, vector<7x10xf32>,
    %c128 = arith.constant 128 : index
    %c0_54 = arith.constant 0 : index
    %66 = tpu.strided_load %arg14[%c128, %c0_54] {strides = array<i32: 2, 1>} : memref<256x10xf32, #tpu.memory_space<vmem>>, vector<7x10xf32>
    %c144 = arith.constant 144 : index
    %c0_55 = arith.constant 0 : index
    %67 = tpu.strided_load %arg14[%c144, %c0_55] {strides = array<i32: 2, 1>} : memref<256x10xf32, #tpu.memory_space<vmem>>, vector<7x10xf32>
    %68 = arith.maximumf %66, %67 : vector<7x10xf32>
    %c129 = arith.constant 129 : index
    %c0_56 = arith.constant 0 : index
    %69 = tpu.strided_load %arg14[%c129, %c0_56] {strides = array<i32: 2, 1>} : memref<256x10xf32, #tpu.memory_space<vmem>>, vector<7x10xf32>
    %c145 = arith.constant 145 : index
    %c0_57 = arith.constant 0 : index
    %70 = tpu.strided_load %arg14[%c145, %c0_57] {strides = array<i32: 2, 1>} : memref<256x10xf32, #tpu.memory_space<vmem>>, vector<7x10xf32>
    %71 = arith.maximumf %69, %70 : vector<7x10xf32>
    %72 = arith.maximumf %68, %71 : vector<7x10xf32>
    %c28 = arith.constant 28 : index
    %c0_58 = arith.constant 0 : index
    %73 = vector.load %arg15[%c28, %c0_58] : memref<72x10xf32, #tpu.memory_space<vmem>>, vector<7x10xf32>
    tpu.vector_store %arg15[%c28, %c0_58], %72 {strides = array<i32>} : memref<72x10xf32, #tpu.memory_space<vmem>>, vector<7x10xf32>,
    %c160 = arith.constant 160 : index
    %c0_59 = arith.constant 0 : index
    %74 = tpu.strided_load %arg14[%c160, %c0_59] {strides = array<i32: 2, 1>} : memref<256x10xf32, #tpu.memory_space<vmem>>, vector<7x10xf32>
    %c176 = arith.constant 176 : index
    %c0_60 = arith.constant 0 : index
    %75 = tpu.strided_load %arg14[%c176, %c0_60] {strides = array<i32: 2, 1>} : memref<256x10xf32, #tpu.memory_space<vmem>>, vector<7x10xf32>
    %76 = arith.maximumf %74, %75 : vector<7x10xf32>
    %c161 = arith.constant 161 : index
    %c0_61 = arith.constant 0 : index
    %77 = tpu.strided_load %arg14[%c161, %c0_61] {strides = array<i32: 2, 1>} : memref<256x10xf32, #tpu.memory_space<vmem>>, vector<7x10xf32>
    %c177 = arith.constant 177 : index
    %c0_62 = arith.constant 0 : index
    %78 = tpu.strided_load %arg14[%c177, %c0_62] {strides = array<i32: 2, 1>} : memref<256x10xf32, #tpu.memory_space<vmem>>, vector<7x10xf32>
    %79 = arith.maximumf %77, %78 : vector<7x10xf32>
    %80 = arith.maximumf %76, %79 : vector<7x10xf32>
    %c35 = arith.constant 35 : index
    %c0_63 = arith.constant 0 : index
    %81 = vector.load %arg15[%c35, %c0_63] : memref<72x10xf32, #tpu.memory_space<vmem>>, vector<7x10xf32>
    tpu.vector_store %arg15[%c35, %c0_63], %80 {strides = array<i32>} : memref<72x10xf32, #tpu.memory_space<vmem>>, vector<7x10xf32>,
    %c192 = arith.constant 192 : index
    %c0_64 = arith.constant 0 : index
    %82 = tpu.strided_load %arg14[%c192, %c0_64] {strides = array<i32: 2, 1>} : memref<256x10xf32, #tpu.memory_space<vmem>>, vector<7x10xf32>
    %c208 = arith.constant 208 : index
    %c0_65 = arith.constant 0 : index
    %83 = tpu.strided_load %arg14[%c208, %c0_65] {strides = array<i32: 2, 1>} : memref<256x10xf32, #tpu.memory_space<vmem>>, vector<7x10xf32>
    %84 = arith.maximumf %82, %83 : vector<7x10xf32>
    %c193 = arith.constant 193 : index
    %c0_66 = arith.constant 0 : index
    %85 = tpu.strided_load %arg14[%c193, %c0_66] {strides = array<i32: 2, 1>} : memref<256x10xf32, #tpu.memory_space<vmem>>, vector<7x10xf32>
    %c209 = arith.constant 209 : index
    %c0_67 = arith.constant 0 : index
    %86 = tpu.strided_load %arg14[%c209, %c0_67] {strides = array<i32: 2, 1>} : memref<256x10xf32, #tpu.memory_space<vmem>>, vector<7x10xf32>
    %87 = arith.maximumf %85, %86 : vector<7x10xf32>
    %88 = arith.maximumf %84, %87 : vector<7x10xf32>
    %c42 = arith.constant 42 : index
    %c0_68 = arith.constant 0 : index
    %89 = vector.load %arg15[%c42, %c0_68] : memref<72x10xf32, #tpu.memory_space<vmem>>, vector<7x10xf32>
    tpu.vector_store %arg15[%c42, %c0_68], %88 {strides = array<i32>} : memref<72x10xf32, #tpu.memory_space<vmem>>, vector<7x10xf32>,
    %cst_69 = arith.constant 0.000000e+00 : f32
    %90 = vector.broadcast %cst_69 : f32 to vector<23x10xf32>
    %c49_70 = arith.constant 49 : index
    %c0_71 = arith.constant 0 : index
    %91 = vector.load %arg15[%c49_70, %c0_71] : memref<72x10xf32, #tpu.memory_space<vmem>>, vector<23x10xf32>
    tpu.vector_store %arg15[%c49_70, %c0_71], %90 {strides = array<i32>} : memref<72x10xf32, #tpu.memory_space<vmem>>, vector<23x10xf32>,
    %c0_72 = arith.constant 0 : index
    %c0_73 = arith.constant 0 : index
    %92 = vector.load %arg15[%c0_72, %c0_73] : memref<72x10xf32, #tpu.memory_space<vmem>>, vector<56x10xf32>
    %c1_74 = arith.constant 1 : index
    %c0_75 = arith.constant 0 : index
    %93 = vector.load %arg15[%c1_74, %c0_75] : memref<72x10xf32, #tpu.memory_space<vmem>>, vector<56x10xf32>
    %c2_76 = arith.constant 2 : index
    %c0_77 = arith.constant 0 : index
    %94 = vector.load %arg15[%c2_76, %c0_77] : memref<72x10xf32, #tpu.memory_space<vmem>>, vector<56x10xf32>
    %95 = tpu.concatenate %92, %93, %94 in 1 : vector<56x10xf32>, vector<56x10xf32>, vector<56x10xf32> -> vector<56x30xf32>
    %c7_78 = arith.constant 7 : index
    %c0_79 = arith.constant 0 : index
    %96 = vector.load %arg15[%c7_78, %c0_79] : memref<72x10xf32, #tpu.memory_space<vmem>>, vector<56x10xf32>
    %c8 = arith.constant 8 : index
    %c0_80 = arith.constant 0 : index
    %97 = vector.load %arg15[%c8, %c0_80] : memref<72x10xf32, #tpu.memory_space<vmem>>, vector<56x10xf32>
    %c9 = arith.constant 9 : index
    %c0_81 = arith.constant 0 : index
    %98 = vector.load %arg15[%c9, %c0_81] : memref<72x10xf32, #tpu.memory_space<vmem>>, vector<56x10xf32>
    %99 = tpu.concatenate %96, %97, %98 in 1 : vector<56x10xf32>, vector<56x10xf32>, vector<56x10xf32> -> vector<56x30xf32>
    %c14_82 = arith.constant 14 : index
    %c0_83 = arith.constant 0 : index
    %100 = vector.load %arg15[%c14_82, %c0_83] : memref<72x10xf32, #tpu.memory_space<vmem>>, vector<56x10xf32>
    %c15 = arith.constant 15 : index
    %c0_84 = arith.constant 0 : index
    %101 = vector.load %arg15[%c15, %c0_84] : memref<72x10xf32, #tpu.memory_space<vmem>>, vector<56x10xf32>
    %c16_85 = arith.constant 16 : index
    %c0_86 = arith.constant 0 : index
    %102 = vector.load %arg15[%c16_85, %c0_86] : memref<72x10xf32, #tpu.memory_space<vmem>>, vector<56x10xf32>
    %103 = tpu.concatenate %100, %101, %102 in 1 : vector<56x10xf32>, vector<56x10xf32>, vector<56x10xf32> -> vector<56x30xf32>
    %104 = tpu.concatenate %95, %99, %103 in 1 : vector<56x30xf32>, vector<56x30xf32>, vector<56x30xf32> -> vector<56x90xf32>
    %c0_87 = arith.constant 0 : index
    %c0_88 = arith.constant 0 : index
    %105 = vector.load %arg5[%c0_87, %c0_88] : memref<90x16xf32, #tpu.memory_space<vmem>>, vector<90x16xf32>
    %cst_89 = arith.constant dense<0.000000e+00> : vector<56x16xf32>
    %106 = tpu.matmul %104, %105, %cst_89 {dimension_numbers = #tpu.dot_dimension_numbers<[1], [0], [0], [1], [0, 0, 1, 1], [], []>} : vector<56x90xf32>, vector<90x16xf32>, vector<56x16xf32> -> vector<56x16xf32>
    %c0_90 = arith.constant 0 : index
    %c0_91 = arith.constant 0 : index
    %107 = vector.load %arg6[%c0_90, %c0_91] : memref<1x16xf32, #tpu.memory_space<vmem>>, vector<1x16xf32>
    %108 = vector.broadcast %107 : vector<1x16xf32> to vector<56x16xf32>
    %109 = arith.addf %106, %108 : vector<56x16xf32>
    %cst_92 = arith.constant 0.000000e+00 : f32
    %110 = vector.broadcast %cst_92 : f32 to vector<56x16xf32>
    %111 = arith.cmpf oge, %109, %110 : vector<56x16xf32>
    %c0_93 = arith.constant 0 : index
    %c0_94 = arith.constant 0 : index
    %112 = vector.load %arg7[%c0_93, %c0_94] : memref<1x16xf32, #tpu.memory_space<vmem>>, vector<1x16xf32>
    %113 = vector.broadcast %112 : vector<1x16xf32> to vector<56x16xf32>
    %114 = arith.mulf %113, %109 : vector<56x16xf32>
    %115 = arith.select %111, %109, %114 : vector<56x16xi1>, vector<56x16xf32>
    %c0_95 = arith.constant 0 : index
    %c0_96 = arith.constant 0 : index
    %116 = vector.load %arg16[%c0_95, %c0_96] : memref<72x16xf32, #tpu.memory_space<vmem>>, vector<56x16xf32>
    tpu.vector_store %arg16[%c0_95, %c0_96], %115 {strides = array<i32>} : memref<72x16xf32, #tpu.memory_space<vmem>>, vector<56x16xf32>,
    %cst_97 = arith.constant 0.000000e+00 : f32
    %117 = vector.broadcast %cst_97 : f32 to vector<16x16xf32>
    %c56 = arith.constant 56 : index
    %c0_98 = arith.constant 0 : index
    %118 = vector.load %arg16[%c56, %c0_98] : memref<72x16xf32, #tpu.memory_space<vmem>>, vector<16x16xf32>
    tpu.vector_store %arg16[%c56, %c0_98], %117 {strides = array<i32>} : memref<72x16xf32, #tpu.memory_space<vmem>>, vector<16x16xf32>,
    %c0_99 = arith.constant 0 : index
    %c0_100 = arith.constant 0 : index
    %119 = vector.load %arg16[%c0_99, %c0_100] : memref<72x16xf32, #tpu.memory_space<vmem>>, vector<56x16xf32>
    %c1_101 = arith.constant 1 : index
    %c0_102 = arith.constant 0 : index
    %120 = vector.load %arg16[%c1_101, %c0_102] : memref<72x16xf32, #tpu.memory_space<vmem>>, vector<56x16xf32>
    %c2_103 = arith.constant 2 : index
    %c0_104 = arith.constant 0 : index
    %121 = vector.load %arg16[%c2_103, %c0_104] : memref<72x16xf32, #tpu.memory_space<vmem>>, vector<56x16xf32>
    %122 = tpu.concatenate %119, %120, %121 in 1 : vector<56x16xf32>, vector<56x16xf32>, vector<56x16xf32> -> vector<56x48xf32>
    %c7_105 = arith.constant 7 : index
    %c0_106 = arith.constant 0 : index
    %123 = vector.load %arg16[%c7_105, %c0_106] : memref<72x16xf32, #tpu.memory_space<vmem>>, vector<56x16xf32>
    %c8_107 = arith.constant 8 : index
    %c0_108 = arith.constant 0 : index
    %124 = vector.load %arg16[%c8_107, %c0_108] : memref<72x16xf32, #tpu.memory_space<vmem>>, vector<56x16xf32>
    %c9_109 = arith.constant 9 : index
    %c0_110 = arith.constant 0 : index
    %125 = vector.load %arg16[%c9_109, %c0_110] : memref<72x16xf32, #tpu.memory_space<vmem>>, vector<56x16xf32>
    %126 = tpu.concatenate %123, %124, %125 in 1 : vector<56x16xf32>, vector<56x16xf32>, vector<56x16xf32> -> vector<56x48xf32>
    %c14_111 = arith.constant 14 : index
    %c0_112 = arith.constant 0 : index
    %127 = vector.load %arg16[%c14_111, %c0_112] : memref<72x16xf32, #tpu.memory_space<vmem>>, vector<56x16xf32>
    %c15_113 = arith.constant 15 : index
    %c0_114 = arith.constant 0 : index
    %128 = vector.load %arg16[%c15_113, %c0_114] : memref<72x16xf32, #tpu.memory_space<vmem>>, vector<56x16xf32>
    %c16_115 = arith.constant 16 : index
    %c0_116 = arith.constant 0 : index
    %129 = vector.load %arg16[%c16_115, %c0_116] : memref<72x16xf32, #tpu.memory_space<vmem>>, vector<56x16xf32>
    %130 = tpu.concatenate %127, %128, %129 in 1 : vector<56x16xf32>, vector<56x16xf32>, vector<56x16xf32> -> vector<56x48xf32>
    %131 = tpu.concatenate %122, %126, %130 in 1 : vector<56x48xf32>, vector<56x48xf32>, vector<56x48xf32> -> vector<56x144xf32>
    %c0_117 = arith.constant 0 : index
    %c0_118 = arith.constant 0 : index
    %132 = vector.load %arg8[%c0_117, %c0_118] : memref<144x32xf32, #tpu.memory_space<vmem>>, vector<144x32xf32>
    %cst_119 = arith.constant dense<0.000000e+00> : vector<56x32xf32>
    %133 = tpu.matmul %131, %132, %cst_119 {dimension_numbers = #tpu.dot_dimension_numbers<[1], [0], [0], [1], [0, 0, 1, 1], [], []>} : vector<56x144xf32>, vector<144x32xf32>, vector<56x32xf32> -> vector<56x32xf32>
    %c0_120 = arith.constant 0 : index
    %c0_121 = arith.constant 0 : index
    %134 = vector.load %arg9[%c0_120, %c0_121] : memref<1x32xf32, #tpu.memory_space<vmem>>, vector<1x32xf32>
    %135 = vector.broadcast %134 : vector<1x32xf32> to vector<56x32xf32>
    %136 = arith.addf %133, %135 : vector<56x32xf32>
    %cst_122 = arith.constant 0.000000e+00 : f32
    %137 = vector.broadcast %cst_122 : f32 to vector<56x32xf32>
    %138 = arith.cmpf oge, %136, %137 : vector<56x32xf32>
    %c0_123 = arith.constant 0 : index
    %c0_124 = arith.constant 0 : index
    %139 = vector.load %arg10[%c0_123, %c0_124] : memref<1x32xf32, #tpu.memory_space<vmem>>, vector<1x32xf32>
    %140 = vector.broadcast %139 : vector<1x32xf32> to vector<56x32xf32>
    %141 = arith.mulf %140, %136 : vector<56x32xf32>
    %142 = arith.select %138, %136, %141 : vector<56x32xi1>, vector<56x32xf32>
    %c0_125 = arith.constant 0 : index
    %c0_126 = arith.constant 0 : index
    %143 = vector.load %arg11[%c0_125, %c0_126] : memref<32x6xf32, #tpu.memory_space<vmem>>, vector<32x6xf32>
    %cst_127 = arith.constant dense<0.000000e+00> : vector<56x6xf32>
    %144 = tpu.matmul %142, %143, %cst_127 {dimension_numbers = #tpu.dot_dimension_numbers<[1], [0], [0], [1], [0, 0, 1, 1], [], []>} : vector<56x32xf32>, vector<32x6xf32>, vector<56x6xf32> -> vector<56x6xf32>
    %c0_128 = arith.constant 0 : index
    %c0_129 = arith.constant 0 : index
    %145 = vector.load %arg12[%c0_128, %c0_129] : memref<1x6xf32, #tpu.memory_space<vmem>>, vector<1x6xf32>
    %146 = vector.broadcast %145 : vector<1x6xf32> to vector<56x6xf32>
    %147 = arith.addf %144, %146 : vector<56x6xf32>
    %148 = vector.extract_strided_slice %147 {offsets = [0, 4], sizes = [56, 1], strides = [1, 1]} : vector<56x6xf32> to vector<56x1xf32>
    %149 = vector.extract_strided_slice %147 {offsets = [0, 5], sizes = [56, 1], strides = [1, 1]} : vector<56x6xf32> to vector<56x1xf32>
    %150 = arith.subf %148, %149 : vector<56x1xf32>
    %cst_130 = arith.constant 0.000000e+00 : f32
    %151 = vector.broadcast %cst_130 : f32 to vector<56x1xf32>
    %152 = arith.subf %151, %150 : vector<56x1xf32>
    %153 = math.exp %152 : vector<56x1xf32>
    %cst_131 = arith.constant 1.000000e+00 : f32
    %154 = vector.broadcast %cst_131 : f32 to vector<56x1xf32>
    %155 = arith.addf %154, %153 : vector<56x1xf32>
    %cst_132 = arith.constant 1.000000e+00 : f32
    %156 = vector.broadcast %cst_132 : f32 to vector<56x1xf32>
    %157 = arith.divf %156, %155 : vector<56x1xf32>
    %158 = tpu.iota {dimensions = array<i32: 1>} : vector<56x6xi32>
    %c4_i32 = arith.constant 4 : i32
    %159 = vector.broadcast %c4_i32 : i32 to vector<56x6xi32>
    %160 = arith.cmpi slt, %158, %159 : vector<56x6xi32>
    %c4_i32_133 = arith.constant 4 : i32
    %161 = vector.broadcast %c4_i32_133 : i32 to vector<56x6xi32>
    %162 = arith.cmpi eq, %158, %161 : vector<56x6xi32>
    %cst_134 = arith.constant 1.000000e+00 : f32
    %163 = vector.broadcast %cst_134 : f32 to vector<56x1xf32>
    %164 = arith.subf %163, %157 : vector<56x1xf32>
    %165 = vector.shape_cast %157 : vector<56x1xf32> to vector<56x1xf32>
    %166 = vector.broadcast %165 : vector<56x1xf32> to vector<56x6xf32>
    %167 = vector.shape_cast %164 : vector<56x1xf32> to vector<56x1xf32>
    %168 = vector.broadcast %167 : vector<56x1xf32> to vector<56x6xf32>
    %169 = arith.select %162, %166, %168 : vector<56x6xi1>, vector<56x6xf32>
    %170 = arith.select %160, %147, %169 : vector<56x6xi1>, vector<56x6xf32>
    %c0_135 = arith.constant 0 : index
    %c0_136 = arith.constant 0 : index
    %c0_137 = arith.constant 0 : index
    %171 = vector.load %arg13[%c0_135, %c0_136, %c0_137] : memref<1x56x6xf32, #tpu.memory_space<vmem>>, vector<1x56x6xf32>
    %172 = vector.shape_cast %171 : vector<1x56x6xf32> to vector<56x6xf32>
    %173 = vector.shape_cast %170 : vector<56x6xf32> to vector<1x56x6xf32>
    tpu.vector_store %arg13[%c0_135, %c0_136, %c0_137], %173 {strides = array<i32>} : memref<1x56x6xf32, #tpu.memory_space<vmem>>, vector<1x56x6xf32>,
    return
  }
  func.func @transform_0(%arg0: i32) -> (i32, i32, i32) {
    %c0_i32 = arith.constant 0 : i32
    %c0_i32_0 = arith.constant 0 : i32
    %c0_i32_1 = arith.constant 0 : i32
    return %arg0, %c0_i32, %c0_i32_0 : i32, i32, i32
  }
  func.func @transform_1(%arg0: i32) -> (i32, i32) {
    %c0_i32 = arith.constant 0 : i32
    %c0_i32_0 = arith.constant 0 : i32
    %c0_i32_1 = arith.constant 0 : i32
    return %c0_i32, %c0_i32_0 : i32, i32
  }
  func.func @transform_2(%arg0: i32) -> (i32, i32) {
    %c0_i32 = arith.constant 0 : i32
    %c0_i32_0 = arith.constant 0 : i32
    %c0_i32_1 = arith.constant 0 : i32
    return %c0_i32, %c0_i32_0 : i32, i32
  }
  func.func @transform_3(%arg0: i32) -> (i32, i32) {
    %c0_i32 = arith.constant 0 : i32
    %c0_i32_0 = arith.constant 0 : i32
    %c0_i32_1 = arith.constant 0 : i32
    return %c0_i32, %c0_i32_0 : i32, i32
  }
  func.func @transform_4(%arg0: i32) -> (i32, i32) {
    %c0_i32 = arith.constant 0 : i32
    %c0_i32_0 = arith.constant 0 : i32
    %c0_i32_1 = arith.constant 0 : i32
    return %c0_i32, %c0_i32_0 : i32, i32
  }
  func.func @transform_5(%arg0: i32) -> (i32, i32) {
    %c0_i32 = arith.constant 0 : i32
    %c0_i32_0 = arith.constant 0 : i32
    %c0_i32_1 = arith.constant 0 : i32
    return %c0_i32, %c0_i32_0 : i32, i32
  }
  func.func @transform_6(%arg0: i32) -> (i32, i32) {
    %c0_i32 = arith.constant 0 : i32
    %c0_i32_0 = arith.constant 0 : i32
    %c0_i32_1 = arith.constant 0 : i32
    return %c0_i32, %c0_i32_0 : i32, i32
  }
  func.func @transform_7(%arg0: i32) -> (i32, i32) {
    %c0_i32 = arith.constant 0 : i32
    %c0_i32_0 = arith.constant 0 : i32
    %c0_i32_1 = arith.constant 0 : i32
    return %c0_i32, %c0_i32_0 : i32, i32
  }
  func.func @transform_8(%arg0: i32) -> (i32, i32) {
    %c0_i32 = arith.constant 0 : i32
    %c0_i32_0 = arith.constant 0 : i32
    %c0_i32_1 = arith.constant 0 : i32
    return %c0_i32, %c0_i32_0 : i32, i32
  }
  func.func @transform_9(%arg0: i32) -> (i32, i32) {
    %c0_i32 = arith.constant 0 : i32
    %c0_i32_0 = arith.constant 0 : i32
    %c0_i32_1 = arith.constant 0 : i32
    return %c0_i32, %c0_i32_0 : i32, i32
  }
  func.func @transform_10(%arg0: i32) -> (i32, i32) {
    %c0_i32 = arith.constant 0 : i32
    %c0_i32_0 = arith.constant 0 : i32
    %c0_i32_1 = arith.constant 0 : i32
    return %c0_i32, %c0_i32_0 : i32, i32
  }
  func.func @transform_11(%arg0: i32) -> (i32, i32) {
    %c0_i32 = arith.constant 0 : i32
    %c0_i32_0 = arith.constant 0 : i32
    %c0_i32_1 = arith.constant 0 : i32
    return %c0_i32, %c0_i32_0 : i32, i32
  }
  func.func @transform_12(%arg0: i32) -> (i32, i32, i32) {
    %c0_i32 = arith.constant 0 : i32
    %c0_i32_0 = arith.constant 0 : i32
    %c0_i32_1 = arith.constant 0 : i32
    return %arg0, %c0_i32, %c0_i32_0 : i32, i32, i32
  }
}

</mosaic_0001>

<llo_original>
// kernel: tpu_custom_call.1
$region0: #{tpu_custom_call.1}
  #allocation0 [shape = 'u32[]', space=smem, size = 0x4, offset = 0x4, fixed_abs, tag = 'smem constant byte address 0x4 - core index']
  #allocation1 [shape = 'u32[144,128]{1,0:T(1,128)}', space=vmem, size = 0x12000, scoped, tag = 'internal scratch']
  #allocation2 [shape = 'f32[256,10]{1,0:T(8,128)}', space=vmem, size = 0x20000, scoped, tag = 'scratch operand']
  #allocation3 [shape = 'f32[72,10]{1,0:T(8,128)}', space=vmem, size = 0x9000, scoped, tag = 'scratch operand']
  #allocation4 [shape = 'f32[72,16]{1,0:T(8,128)}', space=vmem, size = 0x9000, scoped, tag = 'scratch operand']
  %s0 = inlined_call_operand.vmem [shape: f32[2,296,3], index: 0, kind: input, shape index: {}]
  %s1 = inlined_call_operand.vmem [shape: f32[27,10], index: 1, kind: input, shape index: {}]
  %s2 = inlined_call_operand.vmem [shape: f32[1,10], index: 2, kind: input, shape index: {}]
  %s3 = inlined_call_operand.vmem [shape: f32[1,10], index: 3, kind: input, shape index: {}]
  %s4 = inlined_call_operand.vmem [shape: f32[90,16], index: 4, kind: input, shape index: {}]
  %s5 = inlined_call_operand.vmem [shape: f32[1,16], index: 5, kind: input, shape index: {}]
  %s6 = inlined_call_operand.vmem [shape: f32[1,16], index: 6, kind: input, shape index: {}]
  %s7 = inlined_call_operand.vmem [shape: f32[144,32], index: 7, kind: input, shape index: {}]
  %s8 = inlined_call_operand.vmem [shape: f32[1,32], index: 8, kind: input, shape index: {}]
  %s9 = inlined_call_operand.vmem [shape: f32[1,32], index: 9, kind: input, shape index: {}]
  %s10 = inlined_call_operand.vmem [shape: f32[32,6], index: 10, kind: input, shape index: {}]
  %s11 = inlined_call_operand.vmem [shape: f32[1,6], index: 11, kind: input, shape index: {}]
  %s12 = inlined_call_operand.vmem [shape: f32[2,56,6], index: 12, kind: output, shape index: {}]
  %s13 = sld [smem:[#allocation0]]
  $region81: #{tpu_custom_call.1} parent=0
    _
  %s15 = ssub.s32 1, %s13
  %s16 = scalar_select 0, %s15, %s13
  loop: start=0, step=1, limit=4
  $region2: #{tpu_custom_call.1} parent=0 // loop_pre_header
    _
  $region3: #{tpu_custom_call.1} parent=0 // loop_header
    %s18 = sphi 0, %s22
    %p19 = scmp.ge.s32.totalorder %s18, 4
    %s28 = sphi 0, %s30
    %s31 = sphi 0, %s28
    %s32 = sphi 0, %s31
    %s48 = sphi 0, %s32
    %s52 = sphi 0, %s52
    %s54 = sphi 0, %s52
    %s55 = sphi 0, %s54
    %s69 = sphi 0, %s55
    %s73 = sphi 0, %s73
    %s75 = sphi 0, %s73
    %s76 = sphi 0, %s75
    %s90 = sphi 0, %s76
    %s94 = sphi 0, %s94
    %s96 = sphi 0, %s94
    %s97 = sphi 0, %s96
    %s111 = sphi 0, %s97
    %s115 = sphi 0, %s115
    %s117 = sphi 0, %s115
    %s118 = sphi 0, %s117
    %s132 = sphi 0, %s118
    %s136 = sphi 0, %s136
    %s138 = sphi 0, %s136
    %s139 = sphi 0, %s138
    %s153 = sphi 0, %s139
    %s157 = sphi 0, %s157
    %s159 = sphi 0, %s157
    %s160 = sphi 0, %s159
    %s174 = sphi 0, %s160
    %s178 = sphi 0, %s178
    %s180 = sphi 0, %s178
    %s181 = sphi 0, %s180
    %s195 = sphi 0, %s181
    %s199 = sphi 0, %s199
    %s201 = sphi 0, %s199
    %s202 = sphi 0, %s201
    %s216 = sphi 0, %s202
    %s220 = sphi 0, %s220
    %s222 = sphi 0, %s220
    %s223 = sphi 0, %s222
    %s237 = sphi 0, %s223
    %s241 = sphi 0, %s241
    %s243 = sphi 0, %s241
    %s244 = sphi 0, %s243
    %s258 = sphi 0, %s244
    %s262 = sphi 0, %s262
    %s264 = sphi 0, %s262
    %s265 = sphi 0, %s264
    %s279 = sphi 0, %s265
    %s285 = sphi 0, %s287
    %s288 = sphi 0, %s285
    %s289 = sphi 0, %s288
    %s305 = sphi 0, %s289
  $region4: #{tpu_custom_call.1} parent=0 // loop_header_branch
    %21 = sbr.rel (%p19) target = $region8
  $region5: #{tpu_custom_call.1} parent=0 // loop_body
    %s23 = ssub.s32 %s18, 1
    %s24 = ssub.s32 %s18, 2
    %s25 = sadd.s32 %s18, 1
    %s26 = ssub.s32 %s18, %s25
    %p27 = scmp.eq.s32.totalorder %s26, 0
    %s29 = sadd.s32 %s28, 1
    %s30 = scalar_select %p27, %s28, %s29
    %p33 = pneg %p27
    %p34 = scmp.eq.s32.totalorder %s18, 1
    %p35 = por %p33, %p34
    %p36 = scmp.ne.s32.totalorder %s28, %s31
    %p37 = scmp.eq.s32.totalorder %s18, 0
    %p38 = por %p36, %p37
    %p39 = scmp.ne.s32.totalorder %s28, %s31
    %p40 = scmp.eq.s32.totalorder %s23, 1
    %p41 = por %p39, %p40
    %p42 = scmp.ne.s32.totalorder %s31, %s32
    %p43 = scmp.eq.s32.totalorder %s23, 0
    %p44 = por %p42, %p43
    %p45 = scmp.ne.s32.totalorder %s31, %s32
    %p46 = scmp.eq.s32.totalorder %s24, 1
    %p47 = por %p45, %p46
    %p49 = scmp.ne.s32.totalorder %s32, %s48
    %p50 = scmp.eq.s32.totalorder %s24, 0
    %p51 = por %p49, %p50
    %s53 = sadd.s32 %s52, 1
    %p56 = scmp.eq.s32.totalorder %s18, 1
    %p57 = scmp.ne.s32.totalorder %s52, %s54
    %p58 = scmp.eq.s32.totalorder %s18, 0
    %p59 = por %p57, %p58
    %p60 = scmp.ne.s32.totalorder %s52, %s54
    %p61 = scmp.eq.s32.totalorder %s23, 1
    %p62 = por %p60, %p61
    %p63 = scmp.ne.s32.totalorder %s54, %s55
    %p64 = scmp.eq.s32.totalorder %s23, 0
    %p65 = por %p63, %p64
    %p66 = scmp.ne.s32.totalorder %s54, %s55
    %p67 = scmp.eq.s32.totalorder %s24, 1
    %p68 = por %p66, %p67
    %p70 = scmp.ne.s32.totalorder %s55, %s69
    %p71 = scmp.eq.s32.totalorder %s24, 0
    %p72 = por %p70, %p71
    %s74 = sadd.s32 %s73, 1
    %p77 = scmp.eq.s32.totalorder %s18, 1
    %p78 = scmp.ne.s32.totalorder %s73, %s75
    %p79 = scmp.eq.s32.totalorder %s18, 0
    %p80 = por %p78, %p79
    %p81 = scmp.ne.s32.totalorder %s73, %s75
    %p82 = scmp.eq.s32.totalorder %s23, 1
    %p83 = por %p81, %p82
    %p84 = scmp.ne.s32.totalorder %s75, %s76
    %p85 = scmp.eq.s32.totalorder %s23, 0
    %p86 = por %p84, %p85
    %p87 = scmp.ne.s32.totalorder %s75, %s76
    %p88 = scmp.eq.s32.totalorder %s24, 1
    %p89 = por %p87, %p88
    %p91 = scmp.ne.s32.totalorder %s76, %s90
    %p92 = scmp.eq.s32.totalorder %s24, 0
    %p93 = por %p91, %p92
    %s95 = sadd.s32 %s94, 1
    %p98 = scmp.eq.s32.totalorder %s18, 1
    %p99 = scmp.ne.s32.totalorder %s94, %s96
    %p100 = scmp.eq.s32.totalorder %s18, 0
    %p101 = por %p99, %p100
    %p102 = scmp.ne.s32.totalorder %s94, %s96
    %p103 = scmp.eq.s32.totalorder %s23, 1
    %p104 = por %p102, %p103
    %p105 = scmp.ne.s32.totalorder %s96, %s97
    %p106 = scmp.eq.s32.totalorder %s23, 0
    %p107 = por %p105, %p106
    %p108 = scmp.ne.s32.totalorder %s96, %s97
    %p109 = scmp.eq.s32.totalorder %s24, 1
    %p110 = por %p108, %p109
    %p112 = scmp.ne.s32.totalorder %s97, %s111
    %p113 = scmp.eq.s32.totalorder %s24, 0
    %p114 = por %p112, %p113
    %s116 = sadd.s32 %s115, 1
    %p119 = scmp.eq.s32.totalorder %s18, 1
    %p120 = scmp.ne.s32.totalorder %s115, %s117
    %p121 = scmp.eq.s32.totalorder %s18, 0
    %p122 = por %p120, %p121
    %p123 = scmp.ne.s32.totalorder %s115, %s117
    %p124 = scmp.eq.s32.totalorder %s23, 1
    %p125 = por %p123, %p124
    %p126 = scmp.ne.s32.totalorder %s117, %s118
    %p127 = scmp.eq.s32.totalorder %s23, 0
    %p128 = por %p126, %p127
    %p129 = scmp.ne.s32.totalorder %s117, %s118
    %p130 = scmp.eq.s32.totalorder %s24, 1
    %p131 = por %p129, %p130
    %p133 = scmp.ne.s32.totalorder %s118, %s132
    %p134 = scmp.eq.s32.totalorder %s24, 0
    %p135 = por %p133, %p134
    %s137 = sadd.s32 %s136, 1
    %p140 = scmp.eq.s32.totalorder %s18, 1
    %p141 = scmp.ne.s32.totalorder %s136, %s138
    %p142 = scmp.eq.s32.totalorder %s18, 0
    %p143 = por %p141, %p142
    %p144 = scmp.ne.s32.totalorder %s136, %s138
    %p145 = scmp.eq.s32.totalorder %s23, 1
    %p146 = por %p144, %p145
    %p147 = scmp.ne.s32.totalorder %s138, %s139
    %p148 = scmp.eq.s32.totalorder %s23, 0
    %p149 = por %p147, %p148
    %p150 = scmp.ne.s32.totalorder %s138, %s139
    %p151 = scmp.eq.s32.totalorder %s24, 1
    %p152 = por %p150, %p151
    %p154 = scmp.ne.s32.totalorder %s139, %s153
    %p155 = scmp.eq.s32.totalorder %s24, 0
    %p156 = por %p154, %p155
    %s158 = sadd.s32 %s157, 1
    %p161 = scmp.eq.s32.totalorder %s18, 1
    %p162 = scmp.ne.s32.totalorder %s157, %s159
    %p163 = scmp.eq.s32.totalorder %s18, 0
    %p164 = por %p162, %p163
    %p165 = scmp.ne.s32.totalorder %s157, %s159
    %p166 = scmp.eq.s32.totalorder %s23, 1
    %p167 = por %p165, %p166
    %p168 = scmp.ne.s32.totalorder %s159, %s160
    %p169 = scmp.eq.s32.totalorder %s23, 0
    %p170 = por %p168, %p169
    %p171 = scmp.ne.s32.totalorder %s159, %s160
    %p172 = scmp.eq.s32.totalorder %s24, 1
    %p173 = por %p171, %p172
    %p175 = scmp.ne.s32.totalorder %s160, %s174
    %p176 = scmp.eq.s32.totalorder %s24, 0
    %p177 = por %p175, %p176
    %s179 = sadd.s32 %s178, 1
    %p182 = scmp.eq.s32.totalorder %s18, 1
    %p183 = scmp.ne.s32.totalorder %s178, %s180
    %p184 = scmp.eq.s32.totalorder %s18, 0
    %p185 = por %p183, %p184
    %p186 = scmp.ne.s32.totalorder %s178, %s180
    %p187 = scmp.eq.s32.totalorder %s23, 1
    %p188 = por %p186, %p187
    %p189 = scmp.ne.s32.totalorder %s180, %s181
    %p190 = scmp.eq.s32.totalorder %s23, 0
    %p191 = por %p189, %p190
    %p192 = scmp.ne.s32.totalorder %s180, %s181
    %p193 = scmp.eq.s32.totalorder %s24, 1
    %p194 = por %p192, %p193
    %p196 = scmp.ne.s32.totalorder %s181, %s195
    %p197 = scmp.eq.s32.totalorder %s24, 0
    %p198 = por %p196, %p197
    %s200 = sadd.s32 %s199, 1
    %p203 = scmp.eq.s32.totalorder %s18, 1
    %p204 = scmp.ne.s32.totalorder %s199, %s201
    %p205 = scmp.eq.s32.totalorder %s18, 0
    %p206 = por %p204, %p205
    %p207 = scmp.ne.s32.totalorder %s199, %s201
    %p208 = scmp.eq.s32.totalorder %s23, 1
    %p209 = por %p207, %p208
    %p210 = scmp.ne.s32.totalorder %s201, %s202
    %p211 = scmp.eq.s32.totalorder %s23, 0
    %p212 = por %p210, %p211
    %p213 = scmp.ne.s32.totalorder %s201, %s202
    %p214 = scmp.eq.s32.totalorder %s24, 1
    %p215 = por %p213, %p214
    %p217 = scmp.ne.s32.totalorder %s202, %s216
    %p218 = scmp.eq.s32.totalorder %s24, 0
    %p219 = por %p217, %p218
    %s221 = sadd.s32 %s220, 1
    %p224 = scmp.eq.s32.totalorder %s18, 1
    %p225 = scmp.ne.s32.totalorder %s220, %s222
    %p226 = scmp.eq.s32.totalorder %s18, 0
    %p227 = por %p225, %p226
    %p228 = scmp.ne.s32.totalorder %s220, %s222
    %p229 = scmp.eq.s32.totalorder %s23, 1
    %p230 = por %p228, %p229
    %p231 = scmp.ne.s32.totalorder %s222, %s223
    %p232 = scmp.eq.s32.totalorder %s23, 0
    %p233 = por %p231, %p232
    %p234 = scmp.ne.s32.totalorder %s222, %s223
    %p235 = scmp.eq.s32.totalorder %s24, 1
    %p236 = por %p234, %p235
    %p238 = scmp.ne.s32.totalorder %s223, %s237
    %p239 = scmp.eq.s32.totalorder %s24, 0
    %p240 = por %p238, %p239
    %s242 = sadd.s32 %s241, 1
    %p245 = scmp.eq.s32.totalorder %s18, 1
    %p246 = scmp.ne.s32.totalorder %s241, %s243
    %p247 = scmp.eq.s32.totalorder %s18, 0
    %p248 = por %p246, %p247
    %p249 = scmp.ne.s32.totalorder %s241, %s243
    %p250 = scmp.eq.s32.totalorder %s23, 1
    %p251 = por %p249, %p250
    %p252 = scmp.ne.s32.totalorder %s243, %s244
    %p253 = scmp.eq.s32.totalorder %s23, 0
    %p254 = por %p252, %p253
    %p255 = scmp.ne.s32.totalorder %s243, %s244
    %p256 = scmp.eq.s32.totalorder %s24, 1
    %p257 = por %p255, %p256
    %p259 = scmp.ne.s32.totalorder %s244, %s258
    %p260 = scmp.eq.s32.totalorder %s24, 0
    %p261 = por %p259, %p260
    %s263 = sadd.s32 %s262, 1
    %p266 = scmp.eq.s32.totalorder %s18, 1
    %p267 = scmp.ne.s32.totalorder %s262, %s264
    %p268 = scmp.eq.s32.totalorder %s18, 0
    %p269 = por %p267, %p268
    %p270 = scmp.ne.s32.totalorder %s262, %s264
    %p271 = scmp.eq.s32.totalorder %s23, 1
    %p272 = por %p270, %p271
    %p273 = scmp.ne.s32.totalorder %s264, %s265
    %p274 = scmp.eq.s32.totalorder %s23, 0
    %p275 = por %p273, %p274
    %p276 = scmp.ne.s32.totalorder %s264, %s265
    %p277 = scmp.eq.s32.totalorder %s24, 1
    %p278 = por %p276, %p277
    %p280 = scmp.ne.s32.totalorder %s265, %s279
    %p281 = scmp.eq.s32.totalorder %s24, 0
    %p282 = por %p280, %p281
    %s283 = ssub.s32 %s18, %s25
    %p284 = scmp.eq.s32.totalorder %s283, 0
    %s286 = sadd.s32 %s285, 1
    %s287 = scalar_select %p284, %s285, %s286
    %p290 = pneg %p284
    %p291 = scmp.eq.s32.totalorder %s18, 1
    %p292 = por %p290, %p291
    %p293 = scmp.ne.s32.totalorder %s285, %s288
    %p294 = scmp.eq.s32.totalorder %s18, 0
    %p295 = por %p293, %p294
    %p296 = scmp.ne.s32.totalorder %s285, %s288
    %p297 = scmp.eq.s32.totalorder %s23, 1
    %p298 = por %p296, %p297
    %p299 = scmp.ne.s32.totalorder %s288, %s289
    %p300 = scmp.eq.s32.totalorder %s23, 0
    %p301 = por %p299, %p300
    %p302 = scmp.ne.s32.totalorder %s288, %s289
    %p303 = scmp.eq.s32.totalorder %s24, 1
    %p304 = por %p302, %p303
    %p306 = scmp.ne.s32.totalorder %s289, %s305
    %p307 = scmp.eq.s32.totalorder %s24, 0
    %p308 = por %p306, %p307
    %p309 = scmp.le.s32.totalorder 1, %s18
    %p310 = scmp.lt.s32.totalorder %s18, 3
    %p311 = pnand %p309, %p310
    %p312 = pneg %p311
    // Predicated region
    $region9: #{tpu_custom_call.1} parent=5 // pred_check
      _
    $region10: #{tpu_custom_call.1} parent=5 // pred_check_branch
      %314 = sbr.rel (%p311) target = $region12
    $region11: #{tpu_custom_call.1} parent=5 // pred_region
      %s315 = ssub.s32 %s18, 1
      // Predicated region
      $region13: #{tpu_custom_call.1} parent=11 // pred_check
        %p316 = pneg %p65
      $region14: #{tpu_custom_call.1} parent=11 // pred_check_branch
        %318 = sbr.rel (%p316) target = $region16
      $region15: #{tpu_custom_call.1} parent=11 // pred_region
        _
      $region16: #{tpu_custom_call.1} parent=11 // pred_fallthru
        _
      // Predicated region
      $region17: #{tpu_custom_call.1} parent=11 // pred_check
        %p319 = pneg %p86
      $region18: #{tpu_custom_call.1} parent=11 // pred_check_branch
        %321 = sbr.rel (%p319) target = $region20
      $region19: #{tpu_custom_call.1} parent=11 // pred_region
        _
      $region20: #{tpu_custom_call.1} parent=11 // pred_fallthru
        _
      // Predicated region
      $region21: #{tpu_custom_call.1} parent=11 // pred_check
        %p322 = pneg %p107
      $region22: #{tpu_custom_call.1} parent=11 // pred_check_branch
        %324 = sbr.rel (%p322) target = $region24
      $region23: #{tpu_custom_call.1} parent=11 // pred_region
        _
      $region24: #{tpu_custom_call.1} parent=11 // pred_fallthru
        _
      // Predicated region
      $region25: #{tpu_custom_call.1} parent=11 // pred_check
        %p325 = pneg %p128
      $region26: #{tpu_custom_call.1} parent=11 // pred_check_branch
        %327 = sbr.rel (%p325) target = $region28
      $region27: #{tpu_custom_call.1} parent=11 // pred_region
        _
      $region28: #{tpu_custom_call.1} parent=11 // pred_fallthru
        _
      // Predicated region
      $region29: #{tpu_custom_call.1} parent=11 // pred_check
        %p328 = pneg %p149
      $region30: #{tpu_custom_call.1} parent=11 // pred_check_branch
        %330 = sbr.rel (%p328) target = $region32
      $region31: #{tpu_custom_call.1} parent=11 // pred_region
        _
      $region32: #{tpu_custom_call.1} parent=11 // pred_fallthru
        _
      // Predicated region
      $region33: #{tpu_custom_call.1} parent=11 // pred_check
        %p331 = pneg %p170
      $region34: #{tpu_custom_call.1} parent=11 // pred_check_branch
        %333 = sbr.rel (%p331) target = $region36
      $region35: #{tpu_custom_call.1} parent=11 // pred_region
        _
      $region36: #{tpu_custom_call.1} parent=11 // pred_fallthru
        _
      // Predicated region
      $region37: #{tpu_custom_call.1} parent=11 // pred_check
        %p334 = pneg %p191
      $region38: #{tpu_custom_call.1} parent=11 // pred_check_branch
        %336 = sbr.rel (%p334) target = $region40
      $region39: #{tpu_custom_call.1} parent=11 // pred_region
        _
      $region40: #{tpu_custom_call.1} parent=11 // pred_fallthru
        _
      // Predicated region
      $region41: #{tpu_custom_call.1} parent=11 // pred_check
        %p337 = pneg %p212
      $region42: #{tpu_custom_call.1} parent=11 // pred_check_branch
        %339 = sbr.rel (%p337) target = $region44
      $region43: #{tpu_custom_call.1} parent=11 // pred_region
        _
      $region44: #{tpu_custom_call.1} parent=11 // pred_fallthru
        _
      // Predicated region
      $region45: #{tpu_custom_call.1} parent=11 // pred_check
        %p340 = pneg %p233
      $region46: #{tpu_custom_call.1} parent=11 // pred_check_branch
        %342 = sbr.rel (%p340) target = $region48
      $region47: #{tpu_custom_call.1} parent=11 // pred_region
        _
      $region48: #{tpu_custom_call.1} parent=11 // pred_fallthru
        _
      // Predicated region
      $region49: #{tpu_custom_call.1} parent=11 // pred_check
        %p343 = pneg %p254
      $region50: #{tpu_custom_call.1} parent=11 // pred_check_branch
        %345 = sbr.rel (%p343) target = $region52
      $region51: #{tpu_custom_call.1} parent=11 // pred_region
        _
      $region52: #{tpu_custom_call.1} parent=11 // pred_fallthru
        _
      // Predicated region
      $region53: #{tpu_custom_call.1} parent=11 // pred_check
        %p346 = pneg %p275
      $region54: #{tpu_custom_call.1} parent=11 // pred_check_branch
        %348 = sbr.rel (%p346) target = $region56
      $region55: #{tpu_custom_call.1} parent=11 // pred_region
        _
      $region56: #{tpu_custom_call.1} parent=11 // pred_fallthru
        _
    $region12: #{tpu_custom_call.1} parent=5 // pred_fallthru
      _
    %p349 = scmp.lt.s32.totalorder %s18, 2
    // Predicated region
    $region57: #{tpu_custom_call.1} parent=5 // pred_check
      %p350 = pneg %p349
    $region58: #{tpu_custom_call.1} parent=5 // pred_check_branch
      %352 = sbr.rel (%p350) target = $region60
    $region59: #{tpu_custom_call.1} parent=5 // pred_region
      // Predicated region
      $region61: #{tpu_custom_call.1} parent=59 // pred_check
        %p353 = pneg %p38
      $region62: #{tpu_custom_call.1} parent=59 // pred_check_branch
        %355 = sbr.rel (%p353) target = $region64
      $region63: #{tpu_custom_call.1} parent=59 // pred_region
        %p356 = scmp.lt.s32.totalorder %s18, 1
        %s357 = scalar_select %p356, %s18, 1
        %s358 = smul.addr %s357, 37
        %s359 = smul.addr %s358, 8
        %s360 = scalar_lea.vmem %s0, %s359
      $region64: #{tpu_custom_call.1} parent=59 // pred_fallthru
        _
    $region60: #{tpu_custom_call.1} parent=5 // pred_fallthru
      _
    %p361 = scmp.le.s32.totalorder 1, %s18
    %p362 = scmp.lt.s32.totalorder %s18, 3
    %p363 = pnand %p361, %p362
    %p364 = pneg %p363
    // Predicated region
    $region65: #{tpu_custom_call.1} parent=5 // pred_check
      _
    $region66: #{tpu_custom_call.1} parent=5 // pred_check_branch
      %366 = sbr.rel (%p363) target = $region68
    $region67: #{tpu_custom_call.1} parent=5 // pred_region
      %s367 = ssub.s32 %s18, 1
      %p368 = scmp.lt.s32.totalorder %s23, 1
      %s369 = scalar_select %p368, %s23, 1
      %s370 = smul.addr %s369, 37
      %s371 = smul.addr %s370, 8
      %s372 = scalar_lea.vmem %s0, %s371
      %p373 = pneg %p44
      %p374 = pneg %p41
      %p375 = pneg %p65
      %p376 = pneg %p62
      %p377 = pneg %p86
      %p378 = pneg %p83
      %p379 = pneg %p107
      %p380 = pneg %p104
      %p381 = pneg %p128
      %p382 = pneg %p125
      %p383 = pneg %p149
      %p384 = pneg %p146
      %p385 = pneg %p170
      %p386 = pneg %p167
      %p387 = pneg %p191
      %p388 = pneg %p188
      %p389 = pneg %p212
      %p390 = pneg %p209
      %p391 = pneg %p233
      %p392 = pneg %p230
      %p393 = pneg %p254
      %p394 = pneg %p251
      %p395 = pneg %p275
      %p396 = pneg %p272
      %p397 = pneg %p301
      %p398 = pneg %p298
      %p399 = scmp.lt.s32.totalorder %s23, 1
      %s400 = scalar_select %p399, %s23, 1
      %s401 = smul.addr %s400, 7
      %s402 = smul.addr %s401, 8
      %s403 = scalar_lea.vmem %s12, %s402
      %p404 = scmp.lt.s32.totalorder %s23, 1
      %s405 = scalar_select %p404, %s23, 1
      %s406 = smul.addr %s405, 37
      %s407 = smul.addr %s406, 8
      %s408 = scalar_lea.vmem %s0, %s407
      %p409 = scmp.lt.s32.totalorder %s23, 1
      %s410 = scalar_select %p409, %s23, 1
      %s411 = smul.addr %s410, 7
      %s412 = smul.addr %s411, 8
      %s413 = scalar_lea.vmem %s12, %s412
      %v414 = vld [vmem:[%s408] sm:$0xff]
      %v415 = vld [vmem:[%s408 + $0x8] sm:$0xff]
      %v416 = vld [vmem:[%s408 + $0x10] sm:$0xff]
      %v417 = vld [vmem:[%s408 + $0x18] sm:$0xff]
      %v418 = vld [vmem:[%s408 + $0x20] sm:$0xff]
      %v419 = vld [vmem:[%s408 + $0x28] sm:$0xff]
      %v420 = vld [vmem:[%s408 + $0x30] sm:$0xff]
      %v421 = vld [vmem:[%s408 + $0x38] sm:$0xff]
      %v422 = vld [vmem:[%s408 + $0x40] sm:$0xff]
      %v423 = vld [vmem:[%s408 + $0x48] sm:$0xff]
      %v424 = vld [vmem:[%s408 + $0x50] sm:$0xff]
      %v425 = vld [vmem:[%s408 + $0x58] sm:$0xff]
      %v426 = vld [vmem:[%s408 + $0x60] sm:$0xff]
      %v427 = vld [vmem:[%s408 + $0x68] sm:$0xff]
      %v428 = vld [vmem:[%s408 + $0x70] sm:$0xff]
      %v429 = vld [vmem:[%s408 + $0x78] sm:$0xff]
      %v430 = vld [vmem:[%s408 + $0x80] sm:$0xff]
      %v431 = vld [vmem:[%s408 + $0x88] sm:$0xff]
      %v432 = vld [vmem:[%s408 + $0x90] sm:$0xff]
      %v433 = vld [vmem:[%s408 + $0x98] sm:$0xff]
      %v434 = vld [vmem:[%s408 + $0xa0] sm:$0xff]
      %v435 = vld [vmem:[%s408 + $0xa8] sm:$0xff]
      %v436 = vld [vmem:[%s408 + $0xb0] sm:$0xff]
      %v437 = vld [vmem:[%s408 + $0xb8] sm:$0xff]
      %v438 = vld [vmem:[%s408 + $0xc0] sm:$0xff]
      %v439 = vld [vmem:[%s408 + $0xc8] sm:$0xff]
      %v440 = vld [vmem:[%s408 + $0xd0] sm:$0xff]
      %v441 = vld [vmem:[%s408 + $0xd8] sm:$0xff]
      %v442 = vld [vmem:[%s408 + $0xe0] sm:$0xff]
      %v443 = vld [vmem:[%s408 + $0xe8] sm:$0xff]
      %v444 = vld [vmem:[%s408 + $0xf0] sm:$0xff]
      %v445 = vld [vmem:[%s408 + $0xf8] sm:$0xff]
      %v446 = vld [vmem:[%s408 + $0x1] sm:$0xff]
      %v447 = vld [vmem:[%s408 + $0x9] sm:$0xff]
      %v448 = vld [vmem:[%s408 + $0x11] sm:$0xff]
      %v449 = vld [vmem:[%s408 + $0x19] sm:$0xff]
      %v450 = vld [vmem:[%s408 + $0x21] sm:$0xff]
      %v451 = vld [vmem:[%s408 + $0x29] sm:$0xff]
      %v452 = vld [vmem:[%s408 + $0x31] sm:$0xff]
      %v453 = vld [vmem:[%s408 + $0x39] sm:$0xff]
      %v454 = vld [vmem:[%s408 + $0x41] sm:$0xff]
      %v455 = vld [vmem:[%s408 + $0x49] sm:$0xff]
      %v456 = vld [vmem:[%s408 + $0x51] sm:$0xff]
      %v457 = vld [vmem:[%s408 + $0x59] sm:$0xff]
      %v458 = vld [vmem:[%s408 + $0x61] sm:$0xff]
      %v459 = vld [vmem:[%s408 + $0x69] sm:$0xff]
      %v460 = vld [vmem:[%s408 + $0x71] sm:$0xff]
      %v461 = vld [vmem:[%s408 + $0x79] sm:$0xff]
      %v462 = vld [vmem:[%s408 + $0x81] sm:$0xff]
      %v463 = vld [vmem:[%s408 + $0x89] sm:$0xff]
      %v464 = vld [vmem:[%s408 + $0x91] sm:$0xff]
      %v465 = vld [vmem:[%s408 + $0x99] sm:$0xff]
      %v466 = vld [vmem:[%s408 + $0xa1] sm:$0xff]
      %v467 = vld [vmem:[%s408 + $0xa9] sm:$0xff]
      %v468 = vld [vmem:[%s408 + $0xb1] sm:$0xff]
      %v469 = vld [vmem:[%s408 + $0xb9] sm:$0xff]
      %v470 = vld [vmem:[%s408 + $0xc1] sm:$0xff]
      %v471 = vld [vmem:[%s408 + $0xc9] sm:$0xff]
      %v472 = vld [vmem:[%s408 + $0xd1] sm:$0xff]
      %v473 = vld [vmem:[%s408 + $0xd9] sm:$0xff]
      %v474 = vld [vmem:[%s408 + $0xe1] sm:$0xff]
      %v475 = vld [vmem:[%s408 + $0xe9] sm:$0xff]
      %v476 = vld [vmem:[%s408 + $0xf1] sm:$0xff]
      %v477 = vld [vmem:[%s408 + $0xf9] sm:$0xff]
      %v478 = vld [vmem:[%s408 + $0x2] sm:$0xff]
      %v479 = vld [vmem:[%s408 + $0xa] sm:$0xff]
      %v480 = vld [vmem:[%s408 + $0x12] sm:$0xff]
      %v481 = vld [vmem:[%s408 + $0x1a] sm:$0xff]
      %v482 = vld [vmem:[%s408 + $0x22] sm:$0xff]
      %v483 = vld [vmem:[%s408 + $0x2a] sm:$0xff]
      %v484 = vld [vmem:[%s408 + $0x32] sm:$0xff]
      %v485 = vld [vmem:[%s408 + $0x3a] sm:$0xff]
      %v486 = vld [vmem:[%s408 + $0x42] sm:$0xff]
      %v487 = vld [vmem:[%s408 + $0x4a] sm:$0xff]
      %v488 = vld [vmem:[%s408 + $0x52] sm:$0xff]
      %v489 = vld [vmem:[%s408 + $0x5a] sm:$0xff]
      %v490 = vld [vmem:[%s408 + $0x62] sm:$0xff]
      %v491 = vld [vmem:[%s408 + $0x6a] sm:$0xff]
      %v492 = vld [vmem:[%s408 + $0x72] sm:$0xff]
      %v493 = vld [vmem:[%s408 + $0x7a] sm:$0xff]
      %v494 = vld [vmem:[%s408 + $0x82] sm:$0xff]
      %v495 = vld [vmem:[%s408 + $0x8a] sm:$0xff]
      %v496 = vld [vmem:[%s408 + $0x92] sm:$0xff]
      %v497 = vld [vmem:[%s408 + $0x9a] sm:$0xff]
      %v498 = vld [vmem:[%s408 + $0xa2] sm:$0xff]
      %v499 = vld [vmem:[%s408 + $0xaa] sm:$0xff]
      %v500 = vld [vmem:[%s408 + $0xb2] sm:$0xff]
      %v501 = vld [vmem:[%s408 + $0xba] sm:$0xff]
      %v502 = vld [vmem:[%s408 + $0xc2] sm:$0xff]
      %v503 = vld [vmem:[%s408 + $0xca] sm:$0xff]
      %v504 = vld [vmem:[%s408 + $0xd2] sm:$0xff]
      %v505 = vld [vmem:[%s408 + $0xda] sm:$0xff]
      %v506 = vld [vmem:[%s408 + $0xe2] sm:$0xff]
      %v507 = vld [vmem:[%s408 + $0xea] sm:$0xff]
      %v508 = vld [vmem:[%s408 + $0xf2] sm:$0xff]
      %v509 = vld [vmem:[%s408 + $0xfa] sm:$0xff]
      %542 = vrot.lane.b32.xlu0 %v446, 3
      %v543 = vpop.permute.xlu0 %542
      %544 = vrot.lane.b32.xlu0 %v447, 3
      %v545 = vpop.permute.xlu0 %544
      %546 = vrot.lane.b32.xlu0 %v448, 3
      %v547 = vpop.permute.xlu0 %546
      %548 = vrot.lane.b32.xlu0 %v449, 3
      %v549 = vpop.permute.xlu0 %548
      %550 = vrot.lane.b32.xlu0 %v450, 3
      %v551 = vpop.permute.xlu0 %550
      %552 = vrot.lane.b32.xlu0 %v451, 3
      %v553 = vpop.permute.xlu0 %552
      %554 = vrot.lane.b32.xlu0 %v452, 3
      %v555 = vpop.permute.xlu0 %554
      %556 = vrot.lane.b32.xlu0 %v453, 3
      %v557 = vpop.permute.xlu0 %556
      %558 = vrot.lane.b32.xlu0 %v454, 3
      %v559 = vpop.permute.xlu0 %558
      %560 = vrot.lane.b32.xlu0 %v455, 3
      %v561 = vpop.permute.xlu0 %560
      %562 = vrot.lane.b32.xlu0 %v456, 3
      %v563 = vpop.permute.xlu0 %562
      %564 = vrot.lane.b32.xlu0 %v457, 3
      %v565 = vpop.permute.xlu0 %564
      %566 = vrot.lane.b32.xlu0 %v458, 3
      %v567 = vpop.permute.xlu0 %566
      %568 = vrot.lane.b32.xlu0 %v459, 3
      %v569 = vpop.permute.xlu0 %568
      %570 = vrot.lane.b32.xlu0 %v460, 3
      %v571 = vpop.permute.xlu0 %570
      %572 = vrot.lane.b32.xlu0 %v461, 3
      %v573 = vpop.permute.xlu0 %572
      %574 = vrot.lane.b32.xlu0 %v462, 3
      %v575 = vpop.permute.xlu0 %574
      %576 = vrot.lane.b32.xlu0 %v463, 3
      %v577 = vpop.permute.xlu0 %576
      %578 = vrot.lane.b32.xlu0 %v464, 3
      %v579 = vpop.permute.xlu0 %578
      %580 = vrot.lane.b32.xlu0 %v465, 3
      %v581 = vpop.permute.xlu0 %580
      %582 = vrot.lane.b32.xlu0 %v466, 3
      %v583 = vpop.permute.xlu0 %582
      %584 = vrot.lane.b32.xlu0 %v467, 3
      %v585 = vpop.permute.xlu0 %584
      %586 = vrot.lane.b32.xlu0 %v468, 3
      %v587 = vpop.permute.xlu0 %586
      %588 = vrot.lane.b32.xlu0 %v469, 3
      %v589 = vpop.permute.xlu0 %588
      %590 = vrot.lane.b32.xlu0 %v470, 3
      %v591 = vpop.permute.xlu0 %590
      %592 = vrot.lane.b32.xlu0 %v471, 3
      %v593 = vpop.permute.xlu0 %592
      %594 = vrot.lane.b32.xlu0 %v472, 3
      %v595 = vpop.permute.xlu0 %594
      %596 = vrot.lane.b32.xlu0 %v473, 3
      %v597 = vpop.permute.xlu0 %596
      %598 = vrot.lane.b32.xlu0 %v474, 3
      %v599 = vpop.permute.xlu0 %598
      %600 = vrot.lane.b32.xlu0 %v475, 3
      %v601 = vpop.permute.xlu0 %600
      %602 = vrot.lane.b32.xlu0 %v476, 3
      %v603 = vpop.permute.xlu0 %602
      %604 = vrot.lane.b32.xlu0 %v477, 3
      %v605 = vpop.permute.xlu0 %604
      %670 = vrot.lane.b32.xlu0 %v478, 6
      %v671 = vpop.permute.xlu0 %670
      %672 = vrot.lane.b32.xlu0 %v479, 6
      %v673 = vpop.permute.xlu0 %672
      %674 = vrot.lane.b32.xlu0 %v480, 6
      %v675 = vpop.permute.xlu0 %674
      %676 = vrot.lane.b32.xlu0 %v481, 6
      %v677 = vpop.permute.xlu0 %676
      %678 = vrot.lane.b32.xlu0 %v482, 6
      %v679 = vpop.permute.xlu0 %678
      %680 = vrot.lane.b32.xlu0 %v483, 6
      %v681 = vpop.permute.xlu0 %680
      %682 = vrot.lane.b32.xlu0 %v484, 6
      %v683 = vpop.permute.xlu0 %682
      %684 = vrot.lane.b32.xlu0 %v485, 6
      %v685 = vpop.permute.xlu0 %684
      %686 = vrot.lane.b32.xlu0 %v486, 6
      %v687 = vpop.permute.xlu0 %686
      %688 = vrot.lane.b32.xlu0 %v487, 6
      %v689 = vpop.permute.xlu0 %688
      %690 = vrot.lane.b32.xlu0 %v488, 6
      %v691 = vpop.permute.xlu0 %690
      %692 = vrot.lane.b32.xlu0 %v489, 6
      %v693 = vpop.permute.xlu0 %692
      %694 = vrot.lane.b32.xlu0 %v490, 6
      %v695 = vpop.permute.xlu0 %694
      %696 = vrot.lane.b32.xlu0 %v491, 6
      %v697 = vpop.permute.xlu0 %696
      %698 = vrot.lane.b32.xlu0 %v492, 6
      %v699 = vpop.permute.xlu0 %698
      %700 = vrot.lane.b32.xlu0 %v493, 6
      %v701 = vpop.permute.xlu0 %700
      %702 = vrot.lane.b32.xlu0 %v494, 6
      %v703 = vpop.permute.xlu0 %702
      %704 = vrot.lane.b32.xlu0 %v495, 6
      %v705 = vpop.permute.xlu0 %704
      %706 = vrot.lane.b32.xlu0 %v496, 6
      %v707 = vpop.permute.xlu0 %706
      %708 = vrot.lane.b32.xlu0 %v497, 6
      %v709 = vpop.permute.xlu0 %708
      %710 = vrot.lane.b32.xlu0 %v498, 6
      %v711 = vpop.permute.xlu0 %710
      %712 = vrot.lane.b32.xlu0 %v499, 6
      %v713 = vpop.permute.xlu0 %712
      %714 = vrot.lane.b32.xlu0 %v500, 6
      %v715 = vpop.permute.xlu0 %714
      %716 = vrot.lane.b32.xlu0 %v501, 6
      %v717 = vpop.permute.xlu0 %716
      %718 = vrot.lane.b32.xlu0 %v502, 6
      %v719 = vpop.permute.xlu0 %718
      %720 = vrot.lane.b32.xlu0 %v503, 6
      %v721 = vpop.permute.xlu0 %720
      %722 = vrot.lane.b32.xlu0 %v504, 6
      %v723 = vpop.permute.xlu0 %722
      %724 = vrot.lane.b32.xlu0 %v505, 6
      %v725 = vpop.permute.xlu0 %724
      %726 = vrot.lane.b32.xlu0 %v506, 6
      %v727 = vpop.permute.xlu0 %726
      %728 = vrot.lane.b32.xlu0 %v507, 6
      %v729 = vpop.permute.xlu0 %728
      %730 = vrot.lane.b32.xlu0 %v508, 6
      %v731 = vpop.permute.xlu0 %730
      %732 = vrot.lane.b32.xlu0 %v509, 6
      %v733 = vpop.permute.xlu0 %732
      %vm766 = vcmask 23552
      %v767 = vsel %vm766, %v414, %v543
      %v768 = vsel %vm766, %v415, %v545
      %v769 = vsel %vm766, %v416, %v547
      %v770 = vsel %vm766, %v417, %v549
      %v771 = vsel %vm766, %v418, %v551
      %v772 = vsel %vm766, %v419, %v553
      %v773 = vsel %vm766, %v420, %v555
      %v774 = vsel %vm766, %v421, %v557
      %v775 = vsel %vm766, %v422, %v559
      %v776 = vsel %vm766, %v423, %v561
      %v777 = vsel %vm766, %v424, %v563
      %v778 = vsel %vm766, %v425, %v565
      %v779 = vsel %vm766, %v426, %v567
      %v780 = vsel %vm766, %v427, %v569
      %v781 = vsel %vm766, %v428, %v571
      %v782 = vsel %vm766, %v429, %v573
      %v783 = vsel %vm766, %v430, %v575
      %v784 = vsel %vm766, %v431, %v577
      %v785 = vsel %vm766, %v432, %v579
      %v786 = vsel %vm766, %v433, %v581
      %v787 = vsel %vm766, %v434, %v583
      %v788 = vsel %vm766, %v435, %v585
      %v789 = vsel %vm766, %v436, %v587
      %v790 = vsel %vm766, %v437, %v589
      %v791 = vsel %vm766, %v438, %v591
      %v792 = vsel %vm766, %v439, %v593
      %v793 = vsel %vm766, %v440, %v595
      %v794 = vsel %vm766, %v441, %v597
      %v795 = vsel %vm766, %v442, %v599
      %v796 = vsel %vm766, %v443, %v601
      %v797 = vsel %vm766, %v444, %v603
      %v798 = vsel %vm766, %v445, %v605
      %vm799 = vcmask 48128
      %v800 = vsel %vm799, %v767, %v671
      %v801 = vsel %vm799, %v768, %v673
      %v802 = vsel %vm799, %v769, %v675
      %v803 = vsel %vm799, %v770, %v677
      %v804 = vsel %vm799, %v771, %v679
      %v805 = vsel %vm799, %v772, %v681
      %v806 = vsel %vm799, %v773, %v683
      %v807 = vsel %vm799, %v774, %v685
      %v808 = vsel %vm799, %v775, %v687
      %v809 = vsel %vm799, %v776, %v689
      %v810 = vsel %vm799, %v777, %v691
      %v811 = vsel %vm799, %v778, %v693
      %v812 = vsel %vm799, %v779, %v695
      %v813 = vsel %vm799, %v780, %v697
      %v814 = vsel %vm799, %v781, %v699
      %v815 = vsel %vm799, %v782, %v701
      %v816 = vsel %vm799, %v783, %v703
      %v817 = vsel %vm799, %v784, %v705
      %v818 = vsel %vm799, %v785, %v707
      %v819 = vsel %vm799, %v786, %v709
      %v820 = vsel %vm799, %v787, %v711
      %v821 = vsel %vm799, %v788, %v713
      %v822 = vsel %vm799, %v789, %v715
      %v823 = vsel %vm799, %v790, %v717
      %v824 = vsel %vm799, %v791, %v719
      %v825 = vsel %vm799, %v792, %v721
      %v826 = vsel %vm799, %v793, %v723
      %v827 = vsel %vm799, %v794, %v725
      %v828 = vsel %vm799, %v795, %v727
      %v829 = vsel %vm799, %v796, %v729
      %v830 = vsel %vm799, %v797, %v731
      %v831 = vsel %vm799, %v798, %v733
      %v832 = vld [vmem:[%s408 + $0x100] sm:$0xff]
      %v833 = vld [vmem:[%s408 + $0x108] sm:$0xff]
      %v834 = vld [vmem:[%s408 + $0x101] sm:$0xff]
      %v835 = vld [vmem:[%s408 + $0x109] sm:$0xff]
      %v836 = vld [vmem:[%s408 + $0x102] sm:$0xff]
      %v837 = vld [vmem:[%s408 + $0x10a] sm:$0xff]
      %840 = vrot.lane.b32.xlu0 %v834, 3
      %v841 = vpop.permute.xlu0 %840
      %842 = vrot.lane.b32.xlu0 %v835, 3
      %v843 = vpop.permute.xlu0 %842
      %848 = vrot.lane.b32.xlu0 %v836, 6
      %v849 = vpop.permute.xlu0 %848
      %850 = vrot.lane.b32.xlu0 %v837, 6
      %v851 = vpop.permute.xlu0 %850
      %v854 = vsel %vm766, %v832, %v841
      %v855 = vsel %vm766, %v833, %v843
      %v856 = vsel %vm799, %v854, %v849
      %v857 = vsel %vm799, %v855, %v851
      %v858 = vld [vmem:[%s408 + $0x110] sm:$0xff]
      %v859 = vld [vmem:[%s408 + $0x118] sm:$0xff]
      %v860 = vld [vmem:[%s408 + $0x111] sm:$0xff]
      %v861 = vld [vmem:[%s408 + $0x119] sm:$0xff]
      %v862 = vld [vmem:[%s408 + $0x112] sm:$0xff]
      %v863 = vld [vmem:[%s408 + $0x11a] sm:$0xff]
      %866 = vrot.lane.b32.xlu0 %v860, 3
      %v867 = vpop.permute.xlu0 %866
      %868 = vrot.lane.b32.xlu0 %v861, 3
      %v869 = vpop.permute.xlu0 %868
      %874 = vrot.lane.b32.xlu0 %v862, 6
      %v875 = vpop.permute.xlu0 %874
      %876 = vrot.lane.b32.xlu0 %v863, 6
      %v877 = vpop.permute.xlu0 %876
      %v880 = vsel %vm766, %v858, %v867
      %v881 = vsel %vm766, %v859, %v869
      %v882 = vsel %vm799, %v880, %v875
      %v883 = vsel %vm799, %v881, %v877
      %916 = vrot.lane.b32.xlu0 %v802, 9
      %v917 = vpop.permute.xlu0 %916
      %918 = vrot.lane.b32.xlu0 %v803, 9
      %v919 = vpop.permute.xlu0 %918
      %920 = vrot.lane.b32.xlu0 %v804, 9
      %v921 = vpop.permute.xlu0 %920
      %922 = vrot.lane.b32.xlu0 %v805, 9
      %v923 = vpop.permute.xlu0 %922
      %924 = vrot.lane.b32.xlu0 %v806, 9
      %v925 = vpop.permute.xlu0 %924
      %926 = vrot.lane.b32.xlu0 %v807, 9
      %v927 = vpop.permute.xlu0 %926
      %928 = vrot.lane.b32.xlu0 %v808, 9
      %v929 = vpop.permute.xlu0 %928
      %930 = vrot.lane.b32.xlu0 %v809, 9
      %v931 = vpop.permute.xlu0 %930
      %932 = vrot.lane.b32.xlu0 %v810, 9
      %v933 = vpop.permute.xlu0 %932
      %934 = vrot.lane.b32.xlu0 %v811, 9
      %v935 = vpop.permute.xlu0 %934
      %936 = vrot.lane.b32.xlu0 %v812, 9
      %v937 = vpop.permute.xlu0 %936
      %938 = vrot.lane.b32.xlu0 %v813, 9
      %v939 = vpop.permute.xlu0 %938
      %940 = vrot.lane.b32.xlu0 %v814, 9
      %v941 = vpop.permute.xlu0 %940
      %942 = vrot.lane.b32.xlu0 %v815, 9
      %v943 = vpop.permute.xlu0 %942
      %944 = vrot.lane.b32.xlu0 %v816, 9
      %v945 = vpop.permute.xlu0 %944
      %946 = vrot.lane.b32.xlu0 %v817, 9
      %v947 = vpop.permute.xlu0 %946
      %948 = vrot.lane.b32.xlu0 %v818, 9
      %v949 = vpop.permute.xlu0 %948
      %950 = vrot.lane.b32.xlu0 %v819, 9
      %v951 = vpop.permute.xlu0 %950
      %952 = vrot.lane.b32.xlu0 %v820, 9
      %v953 = vpop.permute.xlu0 %952
      %954 = vrot.lane.b32.xlu0 %v821, 9
      %v955 = vpop.permute.xlu0 %954
      %956 = vrot.lane.b32.xlu0 %v822, 9
      %v957 = vpop.permute.xlu0 %956
      %958 = vrot.lane.b32.xlu0 %v823, 9
      %v959 = vpop.permute.xlu0 %958
      %960 = vrot.lane.b32.xlu0 %v824, 9
      %v961 = vpop.permute.xlu0 %960
      %962 = vrot.lane.b32.xlu0 %v825, 9
      %v963 = vpop.permute.xlu0 %962
      %964 = vrot.lane.b32.xlu0 %v826, 9
      %v965 = vpop.permute.xlu0 %964
      %966 = vrot.lane.b32.xlu0 %v827, 9
      %v967 = vpop.permute.xlu0 %966
      %968 = vrot.lane.b32.xlu0 %v828, 9
      %v969 = vpop.permute.xlu0 %968
      %970 = vrot.lane.b32.xlu0 %v829, 9
      %v971 = vpop.permute.xlu0 %970
      %972 = vrot.lane.b32.xlu0 %v830, 9
      %v973 = vpop.permute.xlu0 %972
      %974 = vrot.lane.b32.xlu0 %v831, 9
      %v975 = vpop.permute.xlu0 %974
      %976 = vrot.lane.b32.xlu0 %v856, 9
      %v977 = vpop.permute.xlu0 %976
      %978 = vrot.lane.b32.xlu0 %v857, 9
      %v979 = vpop.permute.xlu0 %978
      %1014 = vrot.lane.b32.xlu0 %v804, 18
      %v1015 = vpop.permute.xlu0 %1014
      %1016 = vrot.lane.b32.xlu0 %v805, 18
      %v1017 = vpop.permute.xlu0 %1016
      %1018 = vrot.lane.b32.xlu0 %v806, 18
      %v1019 = vpop.permute.xlu0 %1018
      %1020 = vrot.lane.b32.xlu0 %v807, 18
      %v1021 = vpop.permute.xlu0 %1020
      %1022 = vrot.lane.b32.xlu0 %v808, 18
      %v1023 = vpop.permute.xlu0 %1022
      %1024 = vrot.lane.b32.xlu0 %v809, 18
      %v1025 = vpop.permute.xlu0 %1024
      %1026 = vrot.lane.b32.xlu0 %v810, 18
      %v1027 = vpop.permute.xlu0 %1026
      %1028 = vrot.lane.b32.xlu0 %v811, 18
      %v1029 = vpop.permute.xlu0 %1028
      %1030 = vrot.lane.b32.xlu0 %v812, 18
      %v1031 = vpop.permute.xlu0 %1030
      %1032 = vrot.lane.b32.xlu0 %v813, 18
      %v1033 = vpop.permute.xlu0 %1032
      %1034 = vrot.lane.b32.xlu0 %v814, 18
      %v1035 = vpop.permute.xlu0 %1034
      %1036 = vrot.lane.b32.xlu0 %v815, 18
      %v1037 = vpop.permute.xlu0 %1036
      %1038 = vrot.lane.b32.xlu0 %v816, 18
      %v1039 = vpop.permute.xlu0 %1038
      %1040 = vrot.lane.b32.xlu0 %v817, 18
      %v1041 = vpop.permute.xlu0 %1040
      %1042 = vrot.lane.b32.xlu0 %v818, 18
      %v1043 = vpop.permute.xlu0 %1042
      %1044 = vrot.lane.b32.xlu0 %v819, 18
      %v1045 = vpop.permute.xlu0 %1044
      %1046 = vrot.lane.b32.xlu0 %v820, 18
      %v1047 = vpop.permute.xlu0 %1046
      %1048 = vrot.lane.b32.xlu0 %v821, 18
      %v1049 = vpop.permute.xlu0 %1048
      %1050 = vrot.lane.b32.xlu0 %v822, 18
      %v1051 = vpop.permute.xlu0 %1050
      %1052 = vrot.lane.b32.xlu0 %v823, 18
      %v1053 = vpop.permute.xlu0 %1052
      %1054 = vrot.lane.b32.xlu0 %v824, 18
      %v1055 = vpop.permute.xlu0 %1054
      %1056 = vrot.lane.b32.xlu0 %v825, 18
      %v1057 = vpop.permute.xlu0 %1056
      %1058 = vrot.lane.b32.xlu0 %v826, 18
      %v1059 = vpop.permute.xlu0 %1058
      %1060 = vrot.lane.b32.xlu0 %v827, 18
      %v1061 = vpop.permute.xlu0 %1060
      %1062 = vrot.lane.b32.xlu0 %v828, 18
      %v1063 = vpop.permute.xlu0 %1062
      %1064 = vrot.lane.b32.xlu0 %v829, 18
      %v1065 = vpop.permute.xlu0 %1064
      %1066 = vrot.lane.b32.xlu0 %v830, 18
      %v1067 = vpop.permute.xlu0 %1066
      %1068 = vrot.lane.b32.xlu0 %v831, 18
      %v1069 = vpop.permute.xlu0 %1068
      %1070 = vrot.lane.b32.xlu0 %v856, 18
      %v1071 = vpop.permute.xlu0 %1070
      %1072 = vrot.lane.b32.xlu0 %v857, 18
      %v1073 = vpop.permute.xlu0 %1072
      %1074 = vrot.lane.b32.xlu0 %v882, 18
      %v1075 = vpop.permute.xlu0 %1074
      %1076 = vrot.lane.b32.xlu0 %v883, 18
      %v1077 = vpop.permute.xlu0 %1076
      %vm1110 = vcmask 72704
      %v1111 = vsel %vm1110, %v800, %v917
      %v1112 = vsel %vm1110, %v801, %v919
      %v1113 = vsel %vm1110, %v802, %v921
      %v1114 = vsel %vm1110, %v803, %v923
      %v1115 = vsel %vm1110, %v804, %v925
      %v1116 = vsel %vm1110, %v805, %v927
      %v1117 = vsel %vm1110, %v806, %v929
      %v1118 = vsel %vm1110, %v807, %v931
      %v1119 = vsel %vm1110, %v808, %v933
      %v1120 = vsel %vm1110, %v809, %v935
      %v1121 = vsel %vm1110, %v810, %v937
      %v1122 = vsel %vm1110, %v811, %v939
      %v1123 = vsel %vm1110, %v812, %v941
      %v1124 = vsel %vm1110, %v813, %v943
      %v1125 = vsel %vm1110, %v814, %v945
      %v1126 = vsel %vm1110, %v815, %v947
      %v1127 = vsel %vm1110, %v816, %v949
      %v1128 = vsel %vm1110, %v817, %v951
      %v1129 = vsel %vm1110, %v818, %v953
      %v1130 = vsel %vm1110, %v819, %v955
      %v1131 = vsel %vm1110, %v820, %v957
      %v1132 = vsel %vm1110, %v821, %v959
      %v1133 = vsel %vm1110, %v822, %v961
      %v1134 = vsel %vm1110, %v823, %v963
      %v1135 = vsel %vm1110, %v824, %v965
      %v1136 = vsel %vm1110, %v825, %v967
      %v1137 = vsel %vm1110, %v826, %v969
      %v1138 = vsel %vm1110, %v827, %v971
      %v1139 = vsel %vm1110, %v828, %v973
      %v1140 = vsel %vm1110, %v829, %v975
      %v1141 = vsel %vm1110, %v830, %v977
      %v1142 = vsel %vm1110, %v831, %v979
      %vm1143 = vcmask 146432
      %v1144 = vsel %vm1143, %v1111, %v1015
      %v1145 = vsel %vm1143, %v1112, %v1017
      %v1146 = vsel %vm1143, %v1113, %v1019
      %v1147 = vsel %vm1143, %v1114, %v1021
      %v1148 = vsel %vm1143, %v1115, %v1023
      %v1149 = vsel %vm1143, %v1116, %v1025
      %v1150 = vsel %vm1143, %v1117, %v1027
      %v1151 = vsel %vm1143, %v1118, %v1029
      %v1152 = vsel %vm1143, %v1119, %v1031
      %v1153 = vsel %vm1143, %v1120, %v1033
      %v1154 = vsel %vm1143, %v1121, %v1035
      %v1155 = vsel %vm1143, %v1122, %v1037
      %v1156 = vsel %vm1143, %v1123, %v1039
      %v1157 = vsel %vm1143, %v1124, %v1041
      %v1158 = vsel %vm1143, %v1125, %v1043
      %v1159 = vsel %vm1143, %v1126, %v1045
      %v1160 = vsel %vm1143, %v1127, %v1047
      %v1161 = vsel %vm1143, %v1128, %v1049
      %v1162 = vsel %vm1143, %v1129, %v1051
      %v1163 = vsel %vm1143, %v1130, %v1053
      %v1164 = vsel %vm1143, %v1131, %v1055
      %v1165 = vsel %vm1143, %v1132, %v1057
      %v1166 = vsel %vm1143, %v1133, %v1059
      %v1167 = vsel %vm1143, %v1134, %v1061
      %v1168 = vsel %vm1143, %v1135, %v1063
      %v1169 = vsel %vm1143, %v1136, %v1065
      %v1170 = vsel %vm1143, %v1137, %v1067
      %v1171 = vsel %vm1143, %v1138, %v1069
      %v1172 = vsel %vm1143, %v1139, %v1071
      %v1173 = vsel %vm1143, %v1140, %v1073
      %v1174 = vsel %vm1143, %v1141, %v1075
      %v1175 = vsel %vm1143, %v1142, %v1077
      %v1176 = vld [vmem:[%s1] sm:$0xff]
      %v1177 = vld [vmem:[%s1 + $0x8] sm:$0xff]
      %v1178 = vld [vmem:[%s1 + $0x10] sm:$0xff]
      %v1179 = vld [vmem:[%s1 + $0x18] sm:$0x7]
      %v1180 = vld [vmem:[%s2] sm:$0x1]
      %v1182 = vlaneseq
      %v1183 = vshrl.u32 %v1182, 7
      %v1184 = vsub.s32 0, %v1183
      %v1185 = vrot.slane %v1180, %v1184
      %vm1187 = vcmask 220160
      %v1189 = vsel %vm1187, %v1144, 0
      %v1192 = vsel %vm1187, %v1145, 0
      %v1195 = vsel %vm1187, %v1146, 0
      %v1198 = vsel %vm1187, %v1147, 0
      %v1201 = vsel %vm1187, %v1148, 0
      %v1204 = vsel %vm1187, %v1149, 0
      %v1207 = vsel %vm1187, %v1150, 0
      %v1210 = vsel %vm1187, %v1151, 0
      %v1213 = vsel %vm1187, %v1152, 0
      %v1216 = vsel %vm1187, %v1153, 0
      %v1219 = vsel %vm1187, %v1154, 0
      %v1222 = vsel %vm1187, %v1155, 0
      %v1225 = vsel %vm1187, %v1156, 0
      %v1228 = vsel %vm1187, %v1157, 0
      %v1231 = vsel %vm1187, %v1158, 0
      %v1234 = vsel %vm1187, %v1159, 0
      %v1237 = vsel %vm1187, %v1160, 0
      %v1240 = vsel %vm1187, %v1161, 0
      %v1243 = vsel %vm1187, %v1162, 0
      %v1246 = vsel %vm1187, %v1163, 0
      %v1249 = vsel %vm1187, %v1164, 0
      %v1252 = vsel %vm1187, %v1165, 0
      %v1255 = vsel %vm1187, %v1166, 0
      %v1258 = vsel %vm1187, %v1167, 0
      %v1261 = vsel %vm1187, %v1168, 0
      %v1264 = vsel %vm1187, %v1169, 0
      %v1267 = vsel %vm1187, %v1170, 0
      %v1270 = vsel %vm1187, %v1171, 0
      %v1273 = vsel %vm1187, %v1172, 0
      %v1276 = vsel %vm1187, %v1173, 0
      %v1279 = vsel %vm1187, %v1174, 0
      %v1282 = vsel %vm1187, %v1175, 0
      %vm1284 = vcmask 1042432
      %v1286 = vsel %vm1284, %v1179, 0
      %1288 = vmatprep.subr.mxu0 0.0
      %1289 = vmatpush1.msra.mxu0 %v1176
      %1290 = vmatprep.subr.mxu0 0.0
      %1291 = vmatpush1.msra.mxu0 %v1177
      %1292 = vmatprep.subr.mxu0 0.0
      %1293 = vmatpush1.msra.mxu0 %v1178
      %1294 = vmatprep.subr.mxu0 0.0
      %1295 = vmatpush1.msra.mxu0 %v1286
      %1296 = vmatprep.subr.mxu0 0.0
      %1297 = vmatpush1.msra.mxu0 0.0
      %1298 = vmatprep.subr.mxu0 0.0
      %1299 = vmatpush1.msra.mxu0 0.0
      %1300 = vmatprep.subr.mxu0 0.0
      %1301 = vmatpush1.msra.mxu0 0.0
      %1302 = vmatprep.subr.mxu0 0.0
      %1303 = vmatpush1.msra.mxu0 0.0
      %1304 = vmatprep.subr.mxu0 0.0
      %1305 = vmatpush1.msra.mxu0 0.0
      %1306 = vmatprep.subr.mxu0 0.0
      %1307 = vmatpush1.msra.mxu0 0.0
      %1308 = vmatprep.subr.mxu0 0.0
      %1309 = vmatpush1.msra.mxu0 0.0
      %1310 = vmatprep.subr.mxu0 0.0
      %1311 = vmatpush1.msra.mxu0 0.0
      %1312 = vmatprep.subr.mxu0 0.0
      %1313 = vmatpush1.msra.mxu0 0.0
      %1314 = vmatprep.subr.mxu0 0.0
      %1315 = vmatpush1.msra.mxu0 0.0
      %1316 = vmatprep.subr.mxu0 0.0
      %1317 = vmatpush1.msra.mxu0 0.0
      %1318 = vmatprep.subr.mxu0 0.0
      %1319 = vmatpush1.msra.mxu0 0.0
      %1320 = vmatprep.subr.mxu0 0.0
      %1321 = vmatpush1.msra.mxu0 0.0
      %1322 = vmatprep.subr.mxu0 0.0
      %1323 = vmatpush1.msra.mxu0 0.0
      %1324 = vmatprep.subr.mxu0 0.0
      %1325 = vmatpush1.msra.mxu0 0.0
      %1326 = vmatprep.subr.mxu0 0.0
      %1327 = vmatpush1.msra.mxu0 0.0
      %1328 = vmatprep.subr.mxu0 0.0
      %1329 = vmatpush1.msra.mxu0 0.0
      %1330 = vmatprep.subr.mxu0 0.0
      %1331 = vmatpush1.msra.mxu0 0.0
      %1332 = vmatprep.subr.mxu0 0.0
      %1333 = vmatpush1.msra.mxu0 0.0
      %1334 = vmatprep.subr.mxu0 0.0
      %1335 = vmatpush1.msra.mxu0 0.0
      %1336 = vmatprep.subr.mxu0 0.0
      %1337 = vmatpush1.msra.mxu0 0.0
      %1338 = vmatprep.subr.mxu0 0.0
      %1339 = vmatpush1.msra.mxu0 0.0
      %1340 = vmatprep.subr.mxu0 0.0
      %1341 = vmatpush1.msra.mxu0 0.0
      %1342 = vmatprep.subr.mxu0 0.0
      %1343 = vmatpush1.msra.mxu0 0.0
      %1344 = vmatprep.subr.mxu0 0.0
      %1345 = vmatpush1.msra.mxu0 0.0
      %1346 = vmatprep.subr.mxu0 0.0
      %1347 = vmatpush1.msra.mxu0 0.0
      %1348 = vmatprep.subr.mxu0 0.0
      %1349 = vmatpush1.msra.mxu0 0.0
      %1350 = vmatprep.subr.mxu0 0.0
      %1351 = vmatpush1.msra.mxu0 0.0
      %1352 = vmatprep.mubr.f32.mxu0 0.0
      %1353 = vmatmul.mubr.f32.gmra.mrb[0].mxu0 %v1189
      %v1354 = vpop.f32.mrb[0].mxu0
      %v1355 = vadd.f32 %v1185, %v1354
      %v1356 = vpop.f32.mrb[0].mxu0
      %1357 = vmatprep.mubr.f32.mxu0 0.0
      %1358 = vmatmul.mubr.f32.gmra.mrb[0].mxu0 %v1192
      %v1359 = vpop.f32.mrb[0].mxu0
      %v1360 = vadd.f32 %v1185, %v1359
      %v1361 = vpop.f32.mrb[0].mxu0
      %1362 = vmatprep.mubr.f32.mxu0 0.0
      %1363 = vmatmul.mubr.f32.gmra.mrb[0].mxu0 %v1195
      %v1364 = vpop.f32.mrb[0].mxu0
      %v1365 = vadd.f32 %v1185, %v1364
      %v1366 = vpop.f32.mrb[0].mxu0
      %1367 = vmatprep.mubr.f32.mxu0 0.0
      %1368 = vmatmul.mubr.f32.gmra.mrb[0].mxu0 %v1198
      %v1369 = vpop.f32.mrb[0].mxu0
      %v1370 = vadd.f32 %v1185, %v1369
      %v1371 = vpop.f32.mrb[0].mxu0
      %1372 = vmatprep.mubr.f32.mxu0 0.0
      %1373 = vmatmul.mubr.f32.gmra.mrb[0].mxu0 %v1201
      %v1374 = vpop.f32.mrb[0].mxu0
      %v1375 = vadd.f32 %v1185, %v1374
      %v1376 = vpop.f32.mrb[0].mxu0
      %1377 = vmatprep.mubr.f32.mxu0 0.0
      %1378 = vmatmul.mubr.f32.gmra.mrb[0].mxu0 %v1204
      %v1379 = vpop.f32.mrb[0].mxu0
      %v1380 = vadd.f32 %v1185, %v1379
      %v1381 = vpop.f32.mrb[0].mxu0
      %1382 = vmatprep.mubr.f32.mxu0 0.0
      %1383 = vmatmul.mubr.f32.gmra.mrb[0].mxu0 %v1207
      %v1384 = vpop.f32.mrb[0].mxu0
      %v1385 = vadd.f32 %v1185, %v1384
      %v1386 = vpop.f32.mrb[0].mxu0
      %1387 = vmatprep.mubr.f32.mxu0 0.0
      %1388 = vmatmul.mubr.f32.gmra.mrb[0].mxu0 %v1210
      %v1389 = vpop.f32.mrb[0].mxu0
      %v1390 = vadd.f32 %v1185, %v1389
      %v1391 = vpop.f32.mrb[0].mxu0
      %1392 = vmatprep.mubr.f32.mxu0 0.0
      %1393 = vmatmul.mubr.f32.gmra.mrb[0].mxu0 %v1213
      %v1394 = vpop.f32.mrb[0].mxu0
      %v1395 = vadd.f32 %v1185, %v1394
      %v1396 = vpop.f32.mrb[0].mxu0
      %1397 = vmatprep.mubr.f32.mxu0 0.0
      %1398 = vmatmul.mubr.f32.gmra.mrb[0].mxu0 %v1216
      %v1399 = vpop.f32.mrb[0].mxu0
      %v1400 = vadd.f32 %v1185, %v1399
      %v1401 = vpop.f32.mrb[0].mxu0
      %1402 = vmatprep.mubr.f32.mxu0 0.0
      %1403 = vmatmul.mubr.f32.gmra.mrb[0].mxu0 %v1219
      %v1404 = vpop.f32.mrb[0].mxu0
      %v1405 = vadd.f32 %v1185, %v1404
      %v1406 = vpop.f32.mrb[0].mxu0
      %1407 = vmatprep.mubr.f32.mxu0 0.0
      %1408 = vmatmul.mubr.f32.gmra.mrb[0].mxu0 %v1222
      %v1409 = vpop.f32.mrb[0].mxu0
      %v1410 = vadd.f32 %v1185, %v1409
      %v1411 = vpop.f32.mrb[0].mxu0
      %1412 = vmatprep.mubr.f32.mxu0 0.0
      %1413 = vmatmul.mubr.f32.gmra.mrb[0].mxu0 %v1225
      %v1414 = vpop.f32.mrb[0].mxu0
      %v1415 = vadd.f32 %v1185, %v1414
      %v1416 = vpop.f32.mrb[0].mxu0
      %1417 = vmatprep.mubr.f32.mxu0 0.0
      %1418 = vmatmul.mubr.f32.gmra.mrb[0].mxu0 %v1228
      %v1419 = vpop.f32.mrb[0].mxu0
      %v1420 = vadd.f32 %v1185, %v1419
      %v1421 = vpop.f32.mrb[0].mxu0
      %1422 = vmatprep.mubr.f32.mxu0 0.0
      %1423 = vmatmul.mubr.f32.gmra.mrb[0].mxu0 %v1231
      %v1424 = vpop.f32.mrb[0].mxu0
      %v1425 = vadd.f32 %v1185, %v1424
      %v1426 = vpop.f32.mrb[0].mxu0
      %1427 = vmatprep.mubr.f32.mxu0 0.0
      %1428 = vmatmul.mubr.f32.gmra.mrb[0].mxu0 %v1234
      %v1429 = vpop.f32.mrb[0].mxu0
      %v1430 = vadd.f32 %v1185, %v1429
      %v1431 = vpop.f32.mrb[0].mxu0
      %1432 = vmatprep.mubr.f32.mxu0 0.0
      %1433 = vmatmul.mubr.f32.gmra.mrb[0].mxu0 %v1237
      %v1434 = vpop.f32.mrb[0].mxu0
      %v1435 = vadd.f32 %v1185, %v1434
      %v1436 = vpop.f32.mrb[0].mxu0
      %1437 = vmatprep.mubr.f32.mxu0 0.0
      %1438 = vmatmul.mubr.f32.gmra.mrb[0].mxu0 %v1240
      %v1439 = vpop.f32.mrb[0].mxu0
      %v1440 = vadd.f32 %v1185, %v1439
      %v1441 = vpop.f32.mrb[0].mxu0
      %1442 = vmatprep.mubr.f32.mxu0 0.0
      %1443 = vmatmul.mubr.f32.gmra.mrb[0].mxu0 %v1243
      %v1444 = vpop.f32.mrb[0].mxu0
      %v1445 = vadd.f32 %v1185, %v1444
      %v1446 = vpop.f32.mrb[0].mxu0
      %1447 = vmatprep.mubr.f32.mxu0 0.0
      %1448 = vmatmul.mubr.f32.gmra.mrb[0].mxu0 %v1246
      %v1449 = vpop.f32.mrb[0].mxu0
      %v1450 = vadd.f32 %v1185, %v1449
      %v1451 = vpop.f32.mrb[0].mxu0
      %1452 = vmatprep.mubr.f32.mxu0 0.0
      %1453 = vmatmul.mubr.f32.gmra.mrb[0].mxu0 %v1249
      %v1454 = vpop.f32.mrb[0].mxu0
      %v1455 = vadd.f32 %v1185, %v1454
      %v1456 = vpop.f32.mrb[0].mxu0
      %1457 = vmatprep.mubr.f32.mxu0 0.0
      %1458 = vmatmul.mubr.f32.gmra.mrb[0].mxu0 %v1252
      %v1459 = vpop.f32.mrb[0].mxu0
      %v1460 = vadd.f32 %v1185, %v1459
      %v1461 = vpop.f32.mrb[0].mxu0
      %1462 = vmatprep.mubr.f32.mxu0 0.0
      %1463 = vmatmul.mubr.f32.gmra.mrb[0].mxu0 %v1255
      %v1464 = vpop.f32.mrb[0].mxu0
      %v1465 = vadd.f32 %v1185, %v1464
      %v1466 = vpop.f32.mrb[0].mxu0
      %1467 = vmatprep.mubr.f32.mxu0 0.0
      %1468 = vmatmul.mubr.f32.gmra.mrb[0].mxu0 %v1258
      %v1469 = vpop.f32.mrb[0].mxu0
      %v1470 = vadd.f32 %v1185, %v1469
      %v1471 = vpop.f32.mrb[0].mxu0
      %1472 = vmatprep.mubr.f32.mxu0 0.0
      %1473 = vmatmul.mubr.f32.gmra.mrb[0].mxu0 %v1261
      %v1474 = vpop.f32.mrb[0].mxu0
      %v1475 = vadd.f32 %v1185, %v1474
      %v1476 = vpop.f32.mrb[0].mxu0
      %1477 = vmatprep.mubr.f32.mxu0 0.0
      %1478 = vmatmul.mubr.f32.gmra.mrb[0].mxu0 %v1264
      %v1479 = vpop.f32.mrb[0].mxu0
      %v1480 = vadd.f32 %v1185, %v1479
      %v1481 = vpop.f32.mrb[0].mxu0
      %1482 = vmatprep.mubr.f32.mxu0 0.0
      %1483 = vmatmul.mubr.f32.gmra.mrb[0].mxu0 %v1267
      %v1484 = vpop.f32.mrb[0].mxu0
      %v1485 = vadd.f32 %v1185, %v1484
      %v1486 = vpop.f32.mrb[0].mxu0
      %1487 = vmatprep.mubr.f32.mxu0 0.0
      %1488 = vmatmul.mubr.f32.gmra.mrb[0].mxu0 %v1270
      %v1489 = vpop.f32.mrb[0].mxu0
      %v1490 = vadd.f32 %v1185, %v1489
      %v1491 = vpop.f32.mrb[0].mxu0
      %1492 = vmatprep.mubr.f32.mxu0 0.0
      %1493 = vmatmul.mubr.f32.gmra.mrb[0].mxu0 %v1273
      %v1494 = vpop.f32.mrb[0].mxu0
      %v1495 = vadd.f32 %v1185, %v1494
      %v1496 = vpop.f32.mrb[0].mxu0
      %1497 = vmatprep.mubr.f32.mxu0 0.0
      %1498 = vmatmul.mubr.f32.gmra.mrb[0].mxu0 %v1276
      %v1499 = vpop.f32.mrb[0].mxu0
      %v1500 = vadd.f32 %v1185, %v1499
      %v1501 = vpop.f32.mrb[0].mxu0
      %1502 = vmatprep.mubr.f32.mxu0 0.0
      %1503 = vmatmul.mubr.f32.gmra.mrb[0].mxu0 %v1279
      %v1504 = vpop.f32.mrb[0].mxu0
      %v1505 = vadd.f32 %v1185, %v1504
      %v1506 = vpop.f32.mrb[0].mxu0
      %1507 = vmatprep.mubr.f32.mxu0 0.0
      %1508 = vmatmul.mubr.f32.gmra.mrb[0].mxu0 %v1282
      %v1509 = vpop.f32.mrb[0].mxu0
      %v1510 = vadd.f32 %v1185, %v1509
      %v1511 = vpop.f32.mrb[0].mxu0
      %1512 = vdwg.mxu0
      %vm1513 = vcmp.ge.f32.partialorder %v1355, 0.0
      %vm1514 = vcmp.ge.f32.partialorder %v1360, 0.0
      %vm1515 = vcmp.ge.f32.partialorder %v1365, 0.0
      %vm1516 = vcmp.ge.f32.partialorder %v1370, 0.0
      %vm1517 = vcmp.ge.f32.partialorder %v1375, 0.0
      %vm1518 = vcmp.ge.f32.partialorder %v1380, 0.0
      %vm1519 = vcmp.ge.f32.partialorder %v1385, 0.0
      %vm1520 = vcmp.ge.f32.partialorder %v1390, 0.0
      %vm1521 = vcmp.ge.f32.partialorder %v1395, 0.0
      %vm1522 = vcmp.ge.f32.partialorder %v1400, 0.0
      %vm1523 = vcmp.ge.f32.partialorder %v1405, 0.0
      %vm1524 = vcmp.ge.f32.partialorder %v1410, 0.0
      %vm1525 = vcmp.ge.f32.partialorder %v1415, 0.0
      %vm1526 = vcmp.ge.f32.partialorder %v1420, 0.0
      %vm1527 = vcmp.ge.f32.partialorder %v1425, 0.0
      %vm1528 = vcmp.ge.f32.partialorder %v1430, 0.0
      %vm1529 = vcmp.ge.f32.partialorder %v1435, 0.0
      %vm1530 = vcmp.ge.f32.partialorder %v1440, 0.0
      %vm1531 = vcmp.ge.f32.partialorder %v1445, 0.0
      %vm1532 = vcmp.ge.f32.partialorder %v1450, 0.0
      %vm1533 = vcmp.ge.f32.partialorder %v1455, 0.0
      %vm1534 = vcmp.ge.f32.partialorder %v1460, 0.0
      %vm1535 = vcmp.ge.f32.partialorder %v1465, 0.0
      %vm1536 = vcmp.ge.f32.partialorder %v1470, 0.0
      %vm1537 = vcmp.ge.f32.partialorder %v1475, 0.0
      %vm1538 = vcmp.ge.f32.partialorder %v1480, 0.0
      %vm1539 = vcmp.ge.f32.partialorder %v1485, 0.0
      %vm1540 = vcmp.ge.f32.partialorder %v1490, 0.0
      %vm1541 = vcmp.ge.f32.partialorder %v1495, 0.0
      %vm1542 = vcmp.ge.f32.partialorder %v1500, 0.0
      %vm1543 = vcmp.ge.f32.partialorder %v1505, 0.0
      %vm1544 = vcmp.ge.f32.partialorder %v1510, 0.0
      %v1545 = vld [vmem:[%s3] sm:$0x1]
      %v1547 = vlaneseq
      %v1548 = vshrl.u32 %v1547, 7
      %v1549 = vsub.s32 0, %v1548
      %v1550 = vrot.slane %v1545, %v1549
      %v1552 = vmul.f32 %v1550, %v1355
      %v1553 = vmul.f32 %v1550, %v1360
      %v1554 = vmul.f32 %v1550, %v1365
      %v1555 = vmul.f32 %v1550, %v1370
      %v1556 = vmul.f32 %v1550, %v1375
      %v1557 = vmul.f32 %v1550, %v1380
      %v1558 = vmul.f32 %v1550, %v1385
      %v1559 = vmul.f32 %v1550, %v1390
      %v1560 = vmul.f32 %v1550, %v1395
      %v1561 = vmul.f32 %v1550, %v1400
      %v1562 = vmul.f32 %v1550, %v1405
      %v1563 = vmul.f32 %v1550, %v1410
      %v1564 = vmul.f32 %v1550, %v1415
      %v1565 = vmul.f32 %v1550, %v1420
      %v1566 = vmul.f32 %v1550, %v1425
      %v1567 = vmul.f32 %v1550, %v1430
      %v1568 = vmul.f32 %v1550, %v1435
      %v1569 = vmul.f32 %v1550, %v1440
      %v1570 = vmul.f32 %v1550, %v1445
      %v1571 = vmul.f32 %v1550, %v1450
      %v1572 = vmul.f32 %v1550, %v1455
      %v1573 = vmul.f32 %v1550, %v1460
      %v1574 = vmul.f32 %v1550, %v1465
      %v1575 = vmul.f32 %v1550, %v1470
      %v1576 = vmul.f32 %v1550, %v1475
      %v1577 = vmul.f32 %v1550, %v1480
      %v1578 = vmul.f32 %v1550, %v1485
      %v1579 = vmul.f32 %v1550, %v1490
      %v1580 = vmul.f32 %v1550, %v1495
      %v1581 = vmul.f32 %v1550, %v1500
      %v1582 = vmul.f32 %v1550, %v1505
      %v1583 = vmul.f32 %v1550, %v1510
      %v1584 = vsel %vm1513, %v1355, %v1552
      %v1585 = vsel %vm1514, %v1360, %v1553
      %v1586 = vsel %vm1515, %v1365, %v1554
      %v1587 = vsel %vm1516, %v1370, %v1555
      %v1588 = vsel %vm1517, %v1375, %v1556
      %v1589 = vsel %vm1518, %v1380, %v1557
      %v1590 = vsel %vm1519, %v1385, %v1558
      %v1591 = vsel %vm1520, %v1390, %v1559
      %v1592 = vsel %vm1521, %v1395, %v1560
      %v1593 = vsel %vm1522, %v1400, %v1561
      %v1594 = vsel %vm1523, %v1405, %v1562
      %v1595 = vsel %vm1524, %v1410, %v1563
      %v1596 = vsel %vm1525, %v1415, %v1564
      %v1597 = vsel %vm1526, %v1420, %v1565
      %v1598 = vsel %vm1527, %v1425, %v1566
      %v1599 = vsel %vm1528, %v1430, %v1567
      %v1600 = vsel %vm1529, %v1435, %v1568
      %v1601 = vsel %vm1530, %v1440, %v1569
      %v1602 = vsel %vm1531, %v1445, %v1570
      %v1603 = vsel %vm1532, %v1450, %v1571
      %v1604 = vsel %vm1533, %v1455, %v1572
      %v1605 = vsel %vm1534, %v1460, %v1573
      %v1606 = vsel %vm1535, %v1465, %v1574
      %v1607 = vsel %vm1536, %v1470, %v1575
      %v1608 = vsel %vm1537, %v1475, %v1576
      %v1609 = vsel %vm1538, %v1480, %v1577
      %v1610 = vsel %vm1539, %v1485, %v1578
      %v1611 = vsel %vm1540, %v1490, %v1579
      %v1612 = vsel %vm1541, %v1495, %v1580
      %v1613 = vsel %vm1542, %v1500, %v1581
      %v1614 = vsel %vm1543, %v1505, %v1582
      %v1615 = vsel %vm1544, %v1510, %v1583
      %vm1616 = vcmask 80896
      %1617 = vst.msk [vmem:[#allocation2] sm:$0xff] %vm1616, %v1584
      %1618 = vst.msk [vmem:[#allocation2 + $0x8] sm:$0xff] %vm1616, %v1585
      %1619 = vst.msk [vmem:[#allocation2 + $0x10] sm:$0xff] %vm1616, %v1586
      %1620 = vst.msk [vmem:[#allocation2 + $0x18] sm:$0xff] %vm1616, %v1587
      %1621 = vst.msk [vmem:[#allocation2 + $0x20] sm:$0xff] %vm1616, %v1588
      %1622 = vst.msk [vmem:[#allocation2 + $0x28] sm:$0xff] %vm1616, %v1589
      %1623 = vst.msk [vmem:[#allocation2 + $0x30] sm:$0xff] %vm1616, %v1590
      %1624 = vst.msk [vmem:[#allocation2 + $0x38] sm:$0xff] %vm1616, %v1591
      %1625 = vst.msk [vmem:[#allocation2 + $0x40] sm:$0xff] %vm1616, %v1592
      %1626 = vst.msk [vmem:[#allocation2 + $0x48] sm:$0xff] %vm1616, %v1593
      %1627 = vst.msk [vmem:[#allocation2 + $0x50] sm:$0xff] %vm1616, %v1594
      %1628 = vst.msk [vmem:[#allocation2 + $0x58] sm:$0xff] %vm1616, %v1595
      %1629 = vst.msk [vmem:[#allocation2 + $0x60] sm:$0xff] %vm1616, %v1596
      %1630 = vst.msk [vmem:[#allocation2 + $0x68] sm:$0xff] %vm1616, %v1597
      %1631 = vst.msk [vmem:[#allocation2 + $0x70] sm:$0xff] %vm1616, %v1598
      %1632 = vst.msk [vmem:[#allocation2 + $0x78] sm:$0xff] %vm1616, %v1599
      %1633 = vst.msk [vmem:[#allocation2 + $0x80] sm:$0xff] %vm1616, %v1600
      %1634 = vst.msk [vmem:[#allocation2 + $0x88] sm:$0xff] %vm1616, %v1601
      %1635 = vst.msk [vmem:[#allocation2 + $0x90] sm:$0xff] %vm1616, %v1602
      %1636 = vst.msk [vmem:[#allocation2 + $0x98] sm:$0xff] %vm1616, %v1603
      %1637 = vst.msk [vmem:[#allocation2 + $0xa0] sm:$0xff] %vm1616, %v1604
      %1638 = vst.msk [vmem:[#allocation2 + $0xa8] sm:$0xff] %vm1616, %v1605
      %1639 = vst.msk [vmem:[#allocation2 + $0xb0] sm:$0xff] %vm1616, %v1606
      %1640 = vst.msk [vmem:[#allocation2 + $0xb8] sm:$0xff] %vm1616, %v1607
      %1641 = vst.msk [vmem:[#allocation2 + $0xc0] sm:$0xff] %vm1616, %v1608
      %1642 = vst.msk [vmem:[#allocation2 + $0xc8] sm:$0xff] %vm1616, %v1609
      %1643 = vst.msk [vmem:[#allocation2 + $0xd0] sm:$0xff] %vm1616, %v1610
      %1644 = vst.msk [vmem:[#allocation2 + $0xd8] sm:$0xff] %vm1616, %v1611
      %1645 = vst.msk [vmem:[#allocation2 + $0xe0] sm:$0xff] %vm1616, %v1612
      %1646 = vst.msk [vmem:[#allocation2 + $0xe8] sm:$0xff] %vm1616, %v1613
      %1647 = vst.msk [vmem:[#allocation2 + $0xf0] sm:$0xff] %vm1616, %v1614
      %1648 = vst.msk [vmem:[#allocation2 + $0xf8] sm:$0xff] %vm1616, %v1615
      %v1649 = vld [vmem:[#allocation2] ss:$2 sm:$0x7f]
      %s1650 = scalar_lea.vmem [#allocation2], 16
      %v1651 = vld [vmem:[%s1650] ss:$2 sm:$0x7f]
      %v1652 = vmax.f32 %v1649, %v1651
      %s1653 = scalar_lea.vmem [#allocation2], 1
      %v1654 = vld [vmem:[%s1653] ss:$2 sm:$0x7f]
      %s1655 = scalar_lea.vmem [#allocation2], 17
      %v1656 = vld [vmem:[%s1655] ss:$2 sm:$0x7f]
      %v1657 = vmax.f32 %v1654, %v1656
      %v1658 = vmax.f32 %v1652, %v1657
      %vm1659 = vcmask 79872
      %1660 = vst.msk [vmem:[#allocation3] sm:$0x7f] %vm1659, %v1658
      %s1661 = scalar_lea.vmem [#allocation2], 32
      %v1662 = vld [vmem:[%s1661] ss:$2 sm:$0x7f]
      %s1663 = scalar_lea.vmem [#allocation2], 48
      %v1664 = vld [vmem:[%s1663] ss:$2 sm:$0x7f]
      %v1665 = vmax.f32 %v1662, %v1664
      %s1666 = scalar_lea.vmem [#allocation2], 33
      %v1667 = vld [vmem:[%s1666] ss:$2 sm:$0x7f]
      %s1668 = scalar_lea.vmem [#allocation2], 49
      %v1669 = vld [vmem:[%s1668] ss:$2 sm:$0x7f]
      %v1670 = vmax.f32 %v1667, %v1669
      %v1671 = vmax.f32 %v1665, %v1670
      %1672 = vst.msk [vmem:[#allocation3 + $0x7] sm:$0x7f] %vm1659, %v1671
      %s1673 = scalar_lea.vmem [#allocation2], 64
      %v1674 = vld [vmem:[%s1673] ss:$2 sm:$0x7f]
      %s1675 = scalar_lea.vmem [#allocation2], 80
      %v1676 = vld [vmem:[%s1675] ss:$2 sm:$0x7f]
      %v1677 = vmax.f32 %v1674, %v1676
      %s1678 = scalar_lea.vmem [#allocation2], 65
      %v1679 = vld [vmem:[%s1678] ss:$2 sm:$0x7f]
      %s1680 = scalar_lea.vmem [#allocation2], 81
      %v1681 = vld [vmem:[%s1680] ss:$2 sm:$0x7f]
      %v1682 = vmax.f32 %v1679, %v1681
      %v1683 = vmax.f32 %v1677, %v1682
      %1684 = vst.msk [vmem:[#allocation3 + $0xe] sm:$0x7f] %vm1659, %v1683
      %s1685 = scalar_lea.vmem [#allocation2], 96
      %v1686 = vld [vmem:[%s1685] ss:$2 sm:$0x7f]
      %s1687 = scalar_lea.vmem [#allocation2], 112
      %v1688 = vld [vmem:[%s1687] ss:$2 sm:$0x7f]
      %v1689 = vmax.f32 %v1686, %v1688
      %s1690 = scalar_lea.vmem [#allocation2], 97
      %v1691 = vld [vmem:[%s1690] ss:$2 sm:$0x7f]
      %s1692 = scalar_lea.vmem [#allocation2], 113
      %v1693 = vld [vmem:[%s1692] ss:$2 sm:$0x7f]
      %v1694 = vmax.f32 %v1691, %v1693
      %v1695 = vmax.f32 %v1689, %v1694
      %1696 = vst.msk [vmem:[#allocation3 + $0x15] sm:$0x7f] %vm1659, %v1695
      %s1697 = scalar_lea.vmem [#allocation2], 128
      %v1698 = vld [vmem:[%s1697] ss:$2 sm:$0x7f]
      %s1699 = scalar_lea.vmem [#allocation2], 144
      %v1700 = vld [vmem:[%s1699] ss:$2 sm:$0x7f]
      %v1701 = vmax.f32 %v1698, %v1700
      %s1702 = scalar_lea.vmem [#allocation2], 129
      %v1703 = vld [vmem:[%s1702] ss:$2 sm:$0x7f]
      %s1704 = scalar_lea.vmem [#allocation2], 145
      %v1705 = vld [vmem:[%s1704] ss:$2 sm:$0x7f]
      %v1706 = vmax.f32 %v1703, %v1705
      %v1707 = vmax.f32 %v1701, %v1706
      %1708 = vst.msk [vmem:[#allocation3 + $0x1c] sm:$0x7f] %vm1659, %v1707
      %s1709 = scalar_lea.vmem [#allocation2], 160
      %v1710 = vld [vmem:[%s1709] ss:$2 sm:$0x7f]
      %s1711 = scalar_lea.vmem [#allocation2], 176
      %v1712 = vld [vmem:[%s1711] ss:$2 sm:$0x7f]
      %v1713 = vmax.f32 %v1710, %v1712
      %s1714 = scalar_lea.vmem [#allocation2], 161
      %v1715 = vld [vmem:[%s1714] ss:$2 sm:$0x7f]
      %s1716 = scalar_lea.vmem [#allocation2], 177
      %v1717 = vld [vmem:[%s1716] ss:$2 sm:$0x7f]
      %v1718 = vmax.f32 %v1715, %v1717
      %v1719 = vmax.f32 %v1713, %v1718
      %1720 = vst.msk [vmem:[#allocation3 + $0x23] sm:$0x7f] %vm1659, %v1719
      %s1721 = scalar_lea.vmem [#allocation2], 192
      %v1722 = vld [vmem:[%s1721] ss:$2 sm:$0x7f]
      %s1723 = scalar_lea.vmem [#allocation2], 208
      %v1724 = vld [vmem:[%s1723] ss:$2 sm:$0x7f]
      %v1725 = vmax.f32 %v1722, %v1724
      %s1726 = scalar_lea.vmem [#allocation2], 193
      %v1727 = vld [vmem:[%s1726] ss:$2 sm:$0x7f]
      %s1728 = scalar_lea.vmem [#allocation2], 209
      %v1729 = vld [vmem:[%s1728] ss:$2 sm:$0x7f]
      %v1730 = vmax.f32 %v1727, %v1729
      %v1731 = vmax.f32 %v1725, %v1730
      %1732 = vst.msk [vmem:[#allocation3 + $0x2a] sm:$0x7f] %vm1659, %v1731
      %1733 = vst.msk [vmem:[#allocation3 + $0x31] sm:$0xff] %vm1616, 0.0
      %1734 = vst.msk [vmem:[#allocation3 + $0x39] sm:$0xff] %vm1616, 0.0
      %1735 = vst.msk [vmem:[#allocation3 + $0x41] sm:$0x7f] %vm1659, 0.0
      %v1736 = vld [vmem:[#allocation3] sm:$0xff]
      %v1737 = vld [vmem:[#allocation3 + $0x8] sm:$0xff]
      %v1738 = vld [vmem:[#allocation3 + $0x10] sm:$0xff]
      %v1739 = vld [vmem:[#allocation3 + $0x18] sm:$0xff]
      %v1740 = vld [vmem:[#allocation3 + $0x20] sm:$0xff]
      %v1741 = vld [vmem:[#allocation3 + $0x28] sm:$0xff]
      %v1742 = vld [vmem:[#allocation3 + $0x30] sm:$0xff]
      %v1743 = vld [vmem:[#allocation3 + $0x1] sm:$0xff]
      %v1744 = vld [vmem:[#allocation3 + $0x9] sm:$0xff]
      %v1745 = vld [vmem:[#allocation3 + $0x11] sm:$0xff]
      %v1746 = vld [vmem:[#allocation3 + $0x19] sm:$0xff]
      %v1747 = vld [vmem:[#allocation3 + $0x21] sm:$0xff]
      %v1748 = vld [vmem:[#allocation3 + $0x29] sm:$0xff]
      %v1749 = vld [vmem:[#allocation3 + $0x31] sm:$0xff]
      %v1750 = vld [vmem:[#allocation3 + $0x2] sm:$0xff]
      %v1751 = vld [vmem:[#allocation3 + $0xa] sm:$0xff]
      %v1752 = vld [vmem:[#allocation3 + $0x12] sm:$0xff]
      %v1753 = vld [vmem:[#allocation3 + $0x1a] sm:$0xff]
      %v1754 = vld [vmem:[#allocation3 + $0x22] sm:$0xff]
      %v1755 = vld [vmem:[#allocation3 + $0x2a] sm:$0xff]
      %v1756 = vld [vmem:[#allocation3 + $0x32] sm:$0xff]
      %1764 = vrot.lane.b32.xlu0 %v1743, 10
      %v1765 = vpop.permute.xlu0 %1764
      %1766 = vrot.lane.b32.xlu0 %v1744, 10
      %v1767 = vpop.permute.xlu0 %1766
      %1768 = vrot.lane.b32.xlu0 %v1745, 10
      %v1769 = vpop.permute.xlu0 %1768
      %1770 = vrot.lane.b32.xlu0 %v1746, 10
      %v1771 = vpop.permute.xlu0 %1770
      %1772 = vrot.lane.b32.xlu0 %v1747, 10
      %v1773 = vpop.permute.xlu0 %1772
      %1774 = vrot.lane.b32.xlu0 %v1748, 10
      %v1775 = vpop.permute.xlu0 %1774
      %1776 = vrot.lane.b32.xlu0 %v1749, 10
      %v1777 = vpop.permute.xlu0 %1776
      %1792 = vrot.lane.b32.xlu0 %v1750, 20
      %v1793 = vpop.permute.xlu0 %1792
      %1794 = vrot.lane.b32.xlu0 %v1751, 20
      %v1795 = vpop.permute.xlu0 %1794
      %1796 = vrot.lane.b32.xlu0 %v1752, 20
      %v1797 = vpop.permute.xlu0 %1796
      %1798 = vrot.lane.b32.xlu0 %v1753, 20
      %v1799 = vpop.permute.xlu0 %1798
      %1800 = vrot.lane.b32.xlu0 %v1754, 20
      %v1801 = vpop.permute.xlu0 %1800
      %1802 = vrot.lane.b32.xlu0 %v1755, 20
      %v1803 = vpop.permute.xlu0 %1802
      %1804 = vrot.lane.b32.xlu0 %v1756, 20
      %v1805 = vpop.permute.xlu0 %1804
      %v1813 = vsel %vm1616, %v1736, %v1765
      %v1814 = vsel %vm1616, %v1737, %v1767
      %v1815 = vsel %vm1616, %v1738, %v1769
      %v1816 = vsel %vm1616, %v1739, %v1771
      %v1817 = vsel %vm1616, %v1740, %v1773
      %v1818 = vsel %vm1616, %v1741, %v1775
      %v1819 = vsel %vm1616, %v1742, %v1777
      %vm1820 = vcmask 162816
      %v1821 = vsel %vm1820, %v1813, %v1793
      %v1822 = vsel %vm1820, %v1814, %v1795
      %v1823 = vsel %vm1820, %v1815, %v1797
      %v1824 = vsel %vm1820, %v1816, %v1799
      %v1825 = vsel %vm1820, %v1817, %v1801
      %v1826 = vsel %vm1820, %v1818, %v1803
      %v1827 = vsel %vm1820, %v1819, %v1805
      %v1828 = vld [vmem:[#allocation3 + $0x7] sm:$0xff]
      %v1829 = vld [vmem:[#allocation3 + $0xf] sm:$0xff]
      %v1830 = vld [vmem:[#allocation3 + $0x17] sm:$0xff]
      %v1831 = vld [vmem:[#allocation3 + $0x1f] sm:$0xff]
      %v1832 = vld [vmem:[#allocation3 + $0x27] sm:$0xff]
      %v1833 = vld [vmem:[#allocation3 + $0x2f] sm:$0xff]
      %v1834 = vld [vmem:[#allocation3 + $0x37] sm:$0xff]
      %v1835 = vld [vmem:[#allocation3 + $0x38] sm:$0xff]
      %v1836 = vld [vmem:[#allocation3 + $0x39] sm:$0xff]
      %1844 = vrot.lane.b32.xlu0 %v1737, 10
      %v1845 = vpop.permute.xlu0 %1844
      %1846 = vrot.lane.b32.xlu0 %v1738, 10
      %v1847 = vpop.permute.xlu0 %1846
      %1848 = vrot.lane.b32.xlu0 %v1739, 10
      %v1849 = vpop.permute.xlu0 %1848
      %1850 = vrot.lane.b32.xlu0 %v1740, 10
      %v1851 = vpop.permute.xlu0 %1850
      %1852 = vrot.lane.b32.xlu0 %v1741, 10
      %v1853 = vpop.permute.xlu0 %1852
      %1854 = vrot.lane.b32.xlu0 %v1742, 10
      %v1855 = vpop.permute.xlu0 %1854
      %1856 = vrot.lane.b32.xlu0 %v1835, 10
      %v1857 = vpop.permute.xlu0 %1856
      %1866 = vrot.lane.b32.xlu0 %v1744, 20
      %v1867 = vpop.permute.xlu0 %1866
      %1868 = vrot.lane.b32.xlu0 %v1745, 20
      %v1869 = vpop.permute.xlu0 %1868
      %1870 = vrot.lane.b32.xlu0 %v1746, 20
      %v1871 = vpop.permute.xlu0 %1870
      %1872 = vrot.lane.b32.xlu0 %v1747, 20
      %v1873 = vpop.permute.xlu0 %1872
      %1874 = vrot.lane.b32.xlu0 %v1748, 20
      %v1875 = vpop.permute.xlu0 %1874
      %1876 = vrot.lane.b32.xlu0 %v1749, 20
      %v1877 = vpop.permute.xlu0 %1876
      %1878 = vrot.lane.b32.xlu0 %v1836, 20
      %v1879 = vpop.permute.xlu0 %1878
      %v1887 = vsel %vm1616, %v1828, %v1845
      %v1888 = vsel %vm1616, %v1829, %v1847
      %v1889 = vsel %vm1616, %v1830, %v1849
      %v1890 = vsel %vm1616, %v1831, %v1851
      %v1891 = vsel %vm1616, %v1832, %v1853
      %v1892 = vsel %vm1616, %v1833, %v1855
      %v1893 = vsel %vm1616, %v1834, %v1857
      %v1894 = vsel %vm1820, %v1887, %v1867
      %v1895 = vsel %vm1820, %v1888, %v1869
      %v1896 = vsel %vm1820, %v1889, %v1871
      %v1897 = vsel %vm1820, %v1890, %v1873
      %v1898 = vsel %vm1820, %v1891, %v1875
      %v1899 = vsel %vm1820, %v1892, %v1877
      %v1900 = vsel %vm1820, %v1893, %v1879
      %v1901 = vld [vmem:[#allocation3 + $0xe] sm:$0xff]
      %v1902 = vld [vmem:[#allocation3 + $0x16] sm:$0xff]
      %v1903 = vld [vmem:[#allocation3 + $0x1e] sm:$0xff]
      %v1904 = vld [vmem:[#allocation3 + $0x26] sm:$0xff]
      %v1905 = vld [vmem:[#allocation3 + $0x2e] sm:$0xff]
      %v1906 = vld [vmem:[#allocation3 + $0x36] sm:$0xff]
      %v1907 = vld [vmem:[#allocation3 + $0x3e] sm:$0xff]
      %v1908 = vld [vmem:[#allocation3 + $0x3f] sm:$0xff]
      %v1909 = vld [vmem:[#allocation3 + $0x40] sm:$0xff]
      %1917 = vrot.lane.b32.xlu0 %v1829, 10
      %v1918 = vpop.permute.xlu0 %1917
      %1919 = vrot.lane.b32.xlu0 %v1830, 10
      %v1920 = vpop.permute.xlu0 %1919
      %1921 = vrot.lane.b32.xlu0 %v1831, 10
      %v1922 = vpop.permute.xlu0 %1921
      %1923 = vrot.lane.b32.xlu0 %v1832, 10
      %v1924 = vpop.permute.xlu0 %1923
      %1925 = vrot.lane.b32.xlu0 %v1833, 10
      %v1926 = vpop.permute.xlu0 %1925
      %1927 = vrot.lane.b32.xlu0 %v1834, 10
      %v1928 = vpop.permute.xlu0 %1927
      %1929 = vrot.lane.b32.xlu0 %v1908, 10
      %v1930 = vpop.permute.xlu0 %1929
      %1939 = vrot.lane.b32.xlu0 %v1738, 20
      %v1940 = vpop.permute.xlu0 %1939
      %1941 = vrot.lane.b32.xlu0 %v1739, 20
      %v1942 = vpop.permute.xlu0 %1941
      %1943 = vrot.lane.b32.xlu0 %v1740, 20
      %v1944 = vpop.permute.xlu0 %1943
      %1945 = vrot.lane.b32.xlu0 %v1741, 20
      %v1946 = vpop.permute.xlu0 %1945
      %1947 = vrot.lane.b32.xlu0 %v1742, 20
      %v1948 = vpop.permute.xlu0 %1947
      %1949 = vrot.lane.b32.xlu0 %v1835, 20
      %v1950 = vpop.permute.xlu0 %1949
      %1951 = vrot.lane.b32.xlu0 %v1909, 20
      %v1952 = vpop.permute.xlu0 %1951
      %v1960 = vsel %vm1616, %v1901, %v1918
      %v1961 = vsel %vm1616, %v1902, %v1920
      %v1962 = vsel %vm1616, %v1903, %v1922
      %v1963 = vsel %vm1616, %v1904, %v1924
      %v1964 = vsel %vm1616, %v1905, %v1926
      %v1965 = vsel %vm1616, %v1906, %v1928
      %v1966 = vsel %vm1616, %v1907, %v1930
      %v1967 = vsel %vm1820, %v1960, %v1940
      %v1968 = vsel %vm1820, %v1961, %v1942
      %v1969 = vsel %vm1820, %v1962, %v1944
      %v1970 = vsel %vm1820, %v1963, %v1946
      %v1971 = vsel %vm1820, %v1964, %v1948
      %v1972 = vsel %vm1820, %v1965, %v1950
      %v1973 = vsel %vm1820, %v1966, %v1952
      %1981 = vrot.lane.b32.xlu0 %v1894, 30
      %v1982 = vpop.permute.xlu0 %1981
      %1983 = vrot.lane.b32.xlu0 %v1895, 30
      %v1984 = vpop.permute.xlu0 %1983
      %1985 = vrot.lane.b32.xlu0 %v1896, 30
      %v1986 = vpop.permute.xlu0 %1985
      %1987 = vrot.lane.b32.xlu0 %v1897, 30
      %v1988 = vpop.permute.xlu0 %1987
      %1989 = vrot.lane.b32.xlu0 %v1898, 30
      %v1990 = vpop.permute.xlu0 %1989
      %1991 = vrot.lane.b32.xlu0 %v1899, 30
      %v1992 = vpop.permute.xlu0 %1991
      %1993 = vrot.lane.b32.xlu0 %v1900, 30
      %v1994 = vpop.permute.xlu0 %1993
      %2009 = vrot.lane.b32.xlu0 %v1967, 60
      %v2010 = vpop.permute.xlu0 %2009
      %2011 = vrot.lane.b32.xlu0 %v1968, 60
      %v2012 = vpop.permute.xlu0 %2011
      %2013 = vrot.lane.b32.xlu0 %v1969, 60
      %v2014 = vpop.permute.xlu0 %2013
      %2015 = vrot.lane.b32.xlu0 %v1970, 60
      %v2016 = vpop.permute.xlu0 %2015
      %2017 = vrot.lane.b32.xlu0 %v1971, 60
      %v2018 = vpop.permute.xlu0 %2017
      %2019 = vrot.lane.b32.xlu0 %v1972, 60
      %v2020 = vpop.permute.xlu0 %2019
      %2021 = vrot.lane.b32.xlu0 %v1973, 60
      %v2022 = vpop.permute.xlu0 %2021
      %vm2030 = vcmask 244736
      %v2031 = vsel %vm2030, %v1821, %v1982
      %v2032 = vsel %vm2030, %v1822, %v1984
      %v2033 = vsel %vm2030, %v1823, %v1986
      %v2034 = vsel %vm2030, %v1824, %v1988
      %v2035 = vsel %vm2030, %v1825, %v1990
      %v2036 = vsel %vm2030, %v1826, %v1992
      %v2037 = vsel %vm2030, %v1827, %v1994
      %vm2038 = vcmask 490496
      %v2039 = vsel %vm2038, %v2031, %v2010
      %v2040 = vsel %vm2038, %v2032, %v2012
      %v2041 = vsel %vm2038, %v2033, %v2014
      %v2042 = vsel %vm2038, %v2034, %v2016
      %v2043 = vsel %vm2038, %v2035, %v2018
      %v2044 = vsel %vm2038, %v2036, %v2020
      %v2045 = vsel %vm2038, %v2037, %v2022
      %v2046 = vld [vmem:[%s4] sm:$0xff]
      %v2047 = vld [vmem:[%s4 + $0x8] sm:$0xff]
      %v2048 = vld [vmem:[%s4 + $0x10] sm:$0xff]
      %v2049 = vld [vmem:[%s4 + $0x18] sm:$0xff]
      %v2050 = vld [vmem:[%s4 + $0x20] sm:$0xff]
      %v2051 = vld [vmem:[%s4 + $0x28] sm:$0xff]
      %v2052 = vld [vmem:[%s4 + $0x30] sm:$0xff]
      %v2053 = vld [vmem:[%s4 + $0x38] sm:$0xff]
      %v2054 = vld [vmem:[%s4 + $0x40] sm:$0xff]
      %v2055 = vld [vmem:[%s4 + $0x48] sm:$0xff]
      %v2056 = vld [vmem:[%s4 + $0x50] sm:$0xff]
      %v2057 = vld [vmem:[%s4 + $0x58] sm:$0x3]
      %v2058 = vld [vmem:[%s5] sm:$0x1]
      %v2060 = vlaneseq
      %v2061 = vshrl.u32 %v2060, 7
      %v2062 = vsub.s32 0, %v2061
      %v2063 = vrot.slane %v2058, %v2062
      %vm2065 = vcmask 736256
      %v2067 = vsel %vm2065, %v2039, 0
      %v2070 = vsel %vm2065, %v2040, 0
      %v2073 = vsel %vm2065, %v2041, 0
      %v2076 = vsel %vm2065, %v2042, 0
      %v2079 = vsel %vm2065, %v2043, 0
      %v2082 = vsel %vm2065, %v2044, 0
      %v2085 = vsel %vm2065, %v2045, 0
      %vm2087 = vcmask 1041408
      %v2089 = vsel %vm2087, %v2057, 0
      %2091 = vmatprep.subr.mxu0 0.0
      %2092 = vmatpush1.msra.mxu0 %v2046
      %2093 = vmatprep.subr.mxu0 0.0
      %2094 = vmatpush1.msra.mxu0 %v2047
      %2095 = vmatprep.subr.mxu0 0.0
      %2096 = vmatpush1.msra.mxu0 %v2048
      %2097 = vmatprep.subr.mxu0 0.0
      %2098 = vmatpush1.msra.mxu0 %v2049
      %2099 = vmatprep.subr.mxu0 0.0
      %2100 = vmatpush1.msra.mxu0 %v2050
      %2101 = vmatprep.subr.mxu0 0.0
      %2102 = vmatpush1.msra.mxu0 %v2051
      %2103 = vmatprep.subr.mxu0 0.0
      %2104 = vmatpush1.msra.mxu0 %v2052
      %2105 = vmatprep.subr.mxu0 0.0
      %2106 = vmatpush1.msra.mxu0 %v2053
      %2107 = vmatprep.subr.mxu0 0.0
      %2108 = vmatpush1.msra.mxu0 %v2054
      %2109 = vmatprep.subr.mxu0 0.0
      %2110 = vmatpush1.msra.mxu0 %v2055
      %2111 = vmatprep.subr.mxu0 0.0
      %2112 = vmatpush1.msra.mxu0 %v2056
      %2113 = vmatprep.subr.mxu0 0.0
      %2114 = vmatpush1.msra.mxu0 %v2089
      %2115 = vmatprep.subr.mxu0 0.0
      %2116 = vmatpush1.msra.mxu0 0.0
      %2117 = vmatprep.subr.mxu0 0.0
      %2118 = vmatpush1.msra.mxu0 0.0
      %2119 = vmatprep.subr.mxu0 0.0
      %2120 = vmatpush1.msra.mxu0 0.0
      %2121 = vmatprep.subr.mxu0 0.0
      %2122 = vmatpush1.msra.mxu0 0.0
      %2123 = vmatprep.subr.mxu0 0.0
      %2124 = vmatpush1.msra.mxu0 0.0
      %2125 = vmatprep.subr.mxu0 0.0
      %2126 = vmatpush1.msra.mxu0 0.0
      %2127 = vmatprep.subr.mxu0 0.0
      %2128 = vmatpush1.msra.mxu0 0.0
      %2129 = vmatprep.subr.mxu0 0.0
      %2130 = vmatpush1.msra.mxu0 0.0
      %2131 = vmatprep.subr.mxu0 0.0
      %2132 = vmatpush1.msra.mxu0 0.0
      %2133 = vmatprep.subr.mxu0 0.0
      %2134 = vmatpush1.msra.mxu0 0.0
      %2135 = vmatprep.subr.mxu0 0.0
      %2136 = vmatpush1.msra.mxu0 0.0
      %2137 = vmatprep.subr.mxu0 0.0
      %2138 = vmatpush1.msra.mxu0 0.0
      %2139 = vmatprep.subr.mxu0 0.0
      %2140 = vmatpush1.msra.mxu0 0.0
      %2141 = vmatprep.subr.mxu0 0.0
      %2142 = vmatpush1.msra.mxu0 0.0
      %2143 = vmatprep.subr.mxu0 0.0
      %2144 = vmatpush1.msra.mxu0 0.0
      %2145 = vmatprep.subr.mxu0 0.0
      %2146 = vmatpush1.msra.mxu0 0.0
      %2147 = vmatprep.subr.mxu0 0.0
      %2148 = vmatpush1.msra.mxu0 0.0
      %2149 = vmatprep.subr.mxu0 0.0
      %2150 = vmatpush1.msra.mxu0 0.0
      %2151 = vmatprep.subr.mxu0 0.0
      %2152 = vmatpush1.msra.mxu0 0.0
      %2153 = vmatprep.subr.mxu0 0.0
      %2154 = vmatpush1.msra.mxu0 0.0
      %2155 = vmatprep.mubr.f32.mxu0 0.0
      %2156 = vmatmul.mubr.f32.gmra.mrb[0].mxu0 %v2067
      %v2157 = vpop.f32.mrb[0].mxu0
      %v2158 = vadd.f32 %v2063, %v2157
      %v2159 = vpop.f32.mrb[0].mxu0
      %2160 = vmatprep.mubr.f32.mxu0 0.0
      %2161 = vmatmul.mubr.f32.gmra.mrb[0].mxu0 %v2070
      %v2162 = vpop.f32.mrb[0].mxu0
      %v2163 = vadd.f32 %v2063, %v2162
      %v2164 = vpop.f32.mrb[0].mxu0
      %2165 = vmatprep.mubr.f32.mxu0 0.0
      %2166 = vmatmul.mubr.f32.gmra.mrb[0].mxu0 %v2073
      %v2167 = vpop.f32.mrb[0].mxu0
      %v2168 = vadd.f32 %v2063, %v2167
      %v2169 = vpop.f32.mrb[0].mxu0
      %2170 = vmatprep.mubr.f32.mxu0 0.0
      %2171 = vmatmul.mubr.f32.gmra.mrb[0].mxu0 %v2076
      %v2172 = vpop.f32.mrb[0].mxu0
      %v2173 = vadd.f32 %v2063, %v2172
      %v2174 = vpop.f32.mrb[0].mxu0
      %2175 = vmatprep.mubr.f32.mxu0 0.0
      %2176 = vmatmul.mubr.f32.gmra.mrb[0].mxu0 %v2079
      %v2177 = vpop.f32.mrb[0].mxu0
      %v2178 = vadd.f32 %v2063, %v2177
      %v2179 = vpop.f32.mrb[0].mxu0
      %2180 = vmatprep.mubr.f32.mxu0 0.0
      %2181 = vmatmul.mubr.f32.gmra.mrb[0].mxu0 %v2082
      %v2182 = vpop.f32.mrb[0].mxu0
      %v2183 = vadd.f32 %v2063, %v2182
      %v2184 = vpop.f32.mrb[0].mxu0
      %2185 = vmatprep.mubr.f32.mxu0 0.0
      %2186 = vmatmul.mubr.f32.gmra.mrb[0].mxu0 %v2085
      %v2187 = vpop.f32.mrb[0].mxu0
      %v2188 = vadd.f32 %v2063, %v2187
      %v2189 = vpop.f32.mrb[0].mxu0
      %2190 = vdwg.mxu0
      %vm2191 = vcmp.ge.f32.partialorder %v2158, 0.0
      %vm2192 = vcmp.ge.f32.partialorder %v2163, 0.0
      %vm2193 = vcmp.ge.f32.partialorder %v2168, 0.0
      %vm2194 = vcmp.ge.f32.partialorder %v2173, 0.0
      %vm2195 = vcmp.ge.f32.partialorder %v2178, 0.0
      %vm2196 = vcmp.ge.f32.partialorder %v2183, 0.0
      %vm2197 = vcmp.ge.f32.partialorder %v2188, 0.0
      %v2198 = vld [vmem:[%s6] sm:$0x1]
      %v2200 = vlaneseq
      %v2201 = vshrl.u32 %v2200, 7
      %v2202 = vsub.s32 0, %v2201
      %v2203 = vrot.slane %v2198, %v2202
      %v2205 = vmul.f32 %v2203, %v2158
      %v2206 = vmul.f32 %v2203, %v2163
      %v2207 = vmul.f32 %v2203, %v2168
      %v2208 = vmul.f32 %v2203, %v2173
      %v2209 = vmul.f32 %v2203, %v2178
      %v2210 = vmul.f32 %v2203, %v2183
      %v2211 = vmul.f32 %v2203, %v2188
      %v2212 = vsel %vm2191, %v2158, %v2205
      %v2213 = vsel %vm2192, %v2163, %v2206
      %v2214 = vsel %vm2193, %v2168, %v2207
      %v2215 = vsel %vm2194, %v2173, %v2208
      %v2216 = vsel %vm2195, %v2178, %v2209
      %v2217 = vsel %vm2196, %v2183, %v2210
      %v2218 = vsel %vm2197, %v2188, %v2211
      %vm2219 = vcmask 130048
      %2220 = vst.msk [vmem:[#allocation4] sm:$0xff] %vm2219, %v2212
      %2221 = vst.msk [vmem:[#allocation4 + $0x8] sm:$0xff] %vm2219, %v2213
      %2222 = vst.msk [vmem:[#allocation4 + $0x10] sm:$0xff] %vm2219, %v2214
      %2223 = vst.msk [vmem:[#allocation4 + $0x18] sm:$0xff] %vm2219, %v2215
      %2224 = vst.msk [vmem:[#allocation4 + $0x20] sm:$0xff] %vm2219, %v2216
      %2225 = vst.msk [vmem:[#allocation4 + $0x28] sm:$0xff] %vm2219, %v2217
      %2226 = vst.msk [vmem:[#allocation4 + $0x30] sm:$0xff] %vm2219, %v2218
      %2227 = vst.msk [vmem:[#allocation4 + $0x38] sm:$0xff] %vm2219, 0.0
      %2228 = vst.msk [vmem:[#allocation4 + $0x40] sm:$0xff] %vm2219, 0.0
      %v2229 = vld [vmem:[#allocation4] sm:$0xff]
      %v2230 = vld [vmem:[#allocation4 + $0x8] sm:$0xff]
      %v2231 = vld [vmem:[#allocation4 + $0x10] sm:$0xff]
      %v2232 = vld [vmem:[#allocation4 + $0x18] sm:$0xff]
      %v2233 = vld [vmem:[#allocation4 + $0x20] sm:$0xff]
      %v2234 = vld [vmem:[#allocation4 + $0x28] sm:$0xff]
      %v2235 = vld [vmem:[#allocation4 + $0x30] sm:$0xff]
      %v2236 = vld [vmem:[#allocation4 + $0x1] sm:$0xff]
      %v2237 = vld [vmem:[#allocation4 + $0x9] sm:$0xff]
      %v2238 = vld [vmem:[#allocation4 + $0x11] sm:$0xff]
      %v2239 = vld [vmem:[#allocation4 + $0x19] sm:$0xff]
      %v2240 = vld [vmem:[#allocation4 + $0x21] sm:$0xff]
      %v2241 = vld [vmem:[#allocation4 + $0x29] sm:$0xff]
      %v2242 = vld [vmem:[#allocation4 + $0x31] sm:$0xff]
      %v2243 = vld [vmem:[#allocation4 + $0x2] sm:$0xff]
      %v2244 = vld [vmem:[#allocation4 + $0xa] sm:$0xff]
      %v2245 = vld [vmem:[#allocation4 + $0x12] sm:$0xff]
      %v2246 = vld [vmem:[#allocation4 + $0x1a] sm:$0xff]
      %v2247 = vld [vmem:[#allocation4 + $0x22] sm:$0xff]
      %v2248 = vld [vmem:[#allocation4 + $0x2a] sm:$0xff]
      %v2249 = vld [vmem:[#allocation4 + $0x32] sm:$0xff]
      %2257 = vrot.lane.b32.xlu0 %v2236, 16
      %v2258 = vpop.permute.xlu0 %2257
      %2259 = vrot.lane.b32.xlu0 %v2237, 16
      %v2260 = vpop.permute.xlu0 %2259
      %2261 = vrot.lane.b32.xlu0 %v2238, 16
      %v2262 = vpop.permute.xlu0 %2261
      %2263 = vrot.lane.b32.xlu0 %v2239, 16
      %v2264 = vpop.permute.xlu0 %2263
      %2265 = vrot.lane.b32.xlu0 %v2240, 16
      %v2266 = vpop.permute.xlu0 %2265
      %2267 = vrot.lane.b32.xlu0 %v2241, 16
      %v2268 = vpop.permute.xlu0 %2267
      %2269 = vrot.lane.b32.xlu0 %v2242, 16
      %v2270 = vpop.permute.xlu0 %2269
      %2285 = vrot.lane.b32.xlu0 %v2243, 32
      %v2286 = vpop.permute.xlu0 %2285
      %2287 = vrot.lane.b32.xlu0 %v2244, 32
      %v2288 = vpop.permute.xlu0 %2287
      %2289 = vrot.lane.b32.xlu0 %v2245, 32
      %v2290 = vpop.permute.xlu0 %2289
      %2291 = vrot.lane.b32.xlu0 %v2246, 32
      %v2292 = vpop.permute.xlu0 %2291
      %2293 = vrot.lane.b32.xlu0 %v2247, 32
      %v2294 = vpop.permute.xlu0 %2293
      %2295 = vrot.lane.b32.xlu0 %v2248, 32
      %v2296 = vpop.permute.xlu0 %2295
      %2297 = vrot.lane.b32.xlu0 %v2249, 32
      %v2298 = vpop.permute.xlu0 %2297
      %v2306 = vsel %vm2219, %v2229, %v2258
      %v2307 = vsel %vm2219, %v2230, %v2260
      %v2308 = vsel %vm2219, %v2231, %v2262
      %v2309 = vsel %vm2219, %v2232, %v2264
      %v2310 = vsel %vm2219, %v2233, %v2266
      %v2311 = vsel %vm2219, %v2234, %v2268
      %v2312 = vsel %vm2219, %v2235, %v2270
      %vm2313 = vcmask 261120
      %v2314 = vsel %vm2313, %v2306, %v2286
      %v2315 = vsel %vm2313, %v2307, %v2288
      %v2316 = vsel %vm2313, %v2308, %v2290
      %v2317 = vsel %vm2313, %v2309, %v2292
      %v2318 = vsel %vm2313, %v2310, %v2294
      %v2319 = vsel %vm2313, %v2311, %v2296
      %v2320 = vsel %vm2313, %v2312, %v2298
      %v2321 = vld [vmem:[#allocation4 + $0x7] sm:$0xff]
      %v2322 = vld [vmem:[#allocation4 + $0xf] sm:$0xff]
      %v2323 = vld [vmem:[#allocation4 + $0x17] sm:$0xff]
      %v2324 = vld [vmem:[#allocation4 + $0x1f] sm:$0xff]
      %v2325 = vld [vmem:[#allocation4 + $0x27] sm:$0xff]
      %v2326 = vld [vmem:[#allocation4 + $0x2f] sm:$0xff]
      %v2327 = vld [vmem:[#allocation4 + $0x37] sm:$0xff]
      %v2328 = vld [vmem:[#allocation4 + $0x38] sm:$0xff]
      %v2329 = vld [vmem:[#allocation4 + $0x39] sm:$0xff]
      %2337 = vrot.lane.b32.xlu0 %v2230, 16
      %v2338 = vpop.permute.xlu0 %2337
      %2339 = vrot.lane.b32.xlu0 %v2231, 16
      %v2340 = vpop.permute.xlu0 %2339
      %2341 = vrot.lane.b32.xlu0 %v2232, 16
      %v2342 = vpop.permute.xlu0 %2341
      %2343 = vrot.lane.b32.xlu0 %v2233, 16
      %v2344 = vpop.permute.xlu0 %2343
      %2345 = vrot.lane.b32.xlu0 %v2234, 16
      %v2346 = vpop.permute.xlu0 %2345
      %2347 = vrot.lane.b32.xlu0 %v2235, 16
      %v2348 = vpop.permute.xlu0 %2347
      %2349 = vrot.lane.b32.xlu0 %v2328, 16
      %v2350 = vpop.permute.xlu0 %2349
      %2359 = vrot.lane.b32.xlu0 %v2237, 32
      %v2360 = vpop.permute.xlu0 %2359
      %2361 = vrot.lane.b32.xlu0 %v2238, 32
      %v2362 = vpop.permute.xlu0 %2361
      %2363 = vrot.lane.b32.xlu0 %v2239, 32
      %v2364 = vpop.permute.xlu0 %2363
      %2365 = vrot.lane.b32.xlu0 %v2240, 32
      %v2366 = vpop.permute.xlu0 %2365
      %2367 = vrot.lane.b32.xlu0 %v2241, 32
      %v2368 = vpop.permute.xlu0 %2367
      %2369 = vrot.lane.b32.xlu0 %v2242, 32
      %v2370 = vpop.permute.xlu0 %2369
      %2371 = vrot.lane.b32.xlu0 %v2329, 32
      %v2372 = vpop.permute.xlu0 %2371
      %v2380 = vsel %vm2219, %v2321, %v2338
      %v2381 = vsel %vm2219, %v2322, %v2340
      %v2382 = vsel %vm2219, %v2323, %v2342
      %v2383 = vsel %vm2219, %v2324, %v2344
      %v2384 = vsel %vm2219, %v2325, %v2346
      %v2385 = vsel %vm2219, %v2326, %v2348
      %v2386 = vsel %vm2219, %v2327, %v2350
      %v2387 = vsel %vm2313, %v2380, %v2360
      %v2388 = vsel %vm2313, %v2381, %v2362
      %v2389 = vsel %vm2313, %v2382, %v2364
      %v2390 = vsel %vm2313, %v2383, %v2366
      %v2391 = vsel %vm2313, %v2384, %v2368
      %v2392 = vsel %vm2313, %v2385, %v2370
      %v2393 = vsel %vm2313, %v2386, %v2372
      %v2394 = vld [vmem:[#allocation4 + $0xe] sm:$0xff]
      %v2395 = vld [vmem:[#allocation4 + $0x16] sm:$0xff]
      %v2396 = vld [vmem:[#allocation4 + $0x1e] sm:$0xff]
      %v2397 = vld [vmem:[#allocation4 + $0x26] sm:$0xff]
      %v2398 = vld [vmem:[#allocation4 + $0x2e] sm:$0xff]
      %v2399 = vld [vmem:[#allocation4 + $0x36] sm:$0xff]
      %v2400 = vld [vmem:[#allocation4 + $0x3e] sm:$0xff]
      %v2401 = vld [vmem:[#allocation4 + $0x3f] sm:$0xff]
      %v2402 = vld [vmem:[#allocation4 + $0x40] sm:$0xff]
      %2410 = vrot.lane.b32.xlu0 %v2322, 16
      %v2411 = vpop.permute.xlu0 %2410
      %2412 = vrot.lane.b32.xlu0 %v2323, 16
      %v2413 = vpop.permute.xlu0 %2412
      %2414 = vrot.lane.b32.xlu0 %v2324, 16
      %v2415 = vpop.permute.xlu0 %2414
      %2416 = vrot.lane.b32.xlu0 %v2325, 16
      %v2417 = vpop.permute.xlu0 %2416
      %2418 = vrot.lane.b32.xlu0 %v2326, 16
      %v2419 = vpop.permute.xlu0 %2418
      %2420 = vrot.lane.b32.xlu0 %v2327, 16
      %v2421 = vpop.permute.xlu0 %2420
      %2422 = vrot.lane.b32.xlu0 %v2401, 16
      %v2423 = vpop.permute.xlu0 %2422
      %2432 = vrot.lane.b32.xlu0 %v2231, 32
      %v2433 = vpop.permute.xlu0 %2432
      %2434 = vrot.lane.b32.xlu0 %v2232, 32
      %v2435 = vpop.permute.xlu0 %2434
      %2436 = vrot.lane.b32.xlu0 %v2233, 32
      %v2437 = vpop.permute.xlu0 %2436
      %2438 = vrot.lane.b32.xlu0 %v2234, 32
      %v2439 = vpop.permute.xlu0 %2438
      %2440 = vrot.lane.b32.xlu0 %v2235, 32
      %v2441 = vpop.permute.xlu0 %2440
      %2442 = vrot.lane.b32.xlu0 %v2328, 32
      %v2443 = vpop.permute.xlu0 %2442
      %2444 = vrot.lane.b32.xlu0 %v2402, 32
      %v2445 = vpop.permute.xlu0 %2444
      %v2453 = vsel %vm2219, %v2394, %v2411
      %v2454 = vsel %vm2219, %v2395, %v2413
      %v2455 = vsel %vm2219, %v2396, %v2415
      %v2456 = vsel %vm2219, %v2397, %v2417
      %v2457 = vsel %vm2219, %v2398, %v2419
      %v2458 = vsel %vm2219, %v2399, %v2421
      %v2459 = vsel %vm2219, %v2400, %v2423
      %v2460 = vsel %vm2313, %v2453, %v2433
      %v2461 = vsel %vm2313, %v2454, %v2435
      %v2462 = vsel %vm2313, %v2455, %v2437
      %v2463 = vsel %vm2313, %v2456, %v2439
      %v2464 = vsel %vm2313, %v2457, %v2441
      %v2465 = vsel %vm2313, %v2458, %v2443
      %v2466 = vsel %vm2313, %v2459, %v2445
      %2474 = vrot.lane.b32.xlu0 %v2387, 48
      %v2475 = vpop.permute.xlu0 %2474
      %2476 = vrot.lane.b32.xlu0 %v2388, 48
      %v2477 = vpop.permute.xlu0 %2476
      %2478 = vrot.lane.b32.xlu0 %v2389, 48
      %v2479 = vpop.permute.xlu0 %2478
      %2480 = vrot.lane.b32.xlu0 %v2390, 48
      %v2481 = vpop.permute.xlu0 %2480
      %2482 = vrot.lane.b32.xlu0 %v2391, 48
      %v2483 = vpop.permute.xlu0 %2482
      %2484 = vrot.lane.b32.xlu0 %v2392, 48
      %v2485 = vpop.permute.xlu0 %2484
      %2486 = vrot.lane.b32.xlu0 %v2393, 48
      %v2487 = vpop.permute.xlu0 %2486
      %2502 = vrot.lane.b32.xlu0 %v2460, 96
      %v2503 = vpop.permute.xlu0 %2502
      %2504 = vrot.lane.b32.xlu0 %v2461, 96
      %v2505 = vpop.permute.xlu0 %2504
      %2506 = vrot.lane.b32.xlu0 %v2462, 96
      %v2507 = vpop.permute.xlu0 %2506
      %2508 = vrot.lane.b32.xlu0 %v2463, 96
      %v2509 = vpop.permute.xlu0 %2508
      %2510 = vrot.lane.b32.xlu0 %v2464, 96
      %v2511 = vpop.permute.xlu0 %2510
      %2512 = vrot.lane.b32.xlu0 %v2465, 96
      %v2513 = vpop.permute.xlu0 %2512
      %2514 = vrot.lane.b32.xlu0 %v2466, 96
      %v2515 = vpop.permute.xlu0 %2514
      %vm2523 = vcmask 392192
      %v2524 = vsel %vm2523, %v2314, %v2475
      %v2525 = vsel %vm2523, %v2315, %v2477
      %v2526 = vsel %vm2523, %v2316, %v2479
      %v2527 = vsel %vm2523, %v2317, %v2481
      %v2528 = vsel %vm2523, %v2318, %v2483
      %v2529 = vsel %vm2523, %v2319, %v2485
      %v2530 = vsel %vm2523, %v2320, %v2487
      %vm2531 = vcmask 785408
      %v2532 = vsel %vm2531, %v2524, %v2503
      %v2533 = vsel %vm2531, %v2525, %v2505
      %v2534 = vsel %vm2531, %v2526, %v2507
      %v2535 = vsel %vm2531, %v2527, %v2509
      %v2536 = vsel %vm2531, %v2528, %v2511
      %v2537 = vsel %vm2531, %v2529, %v2513
      %v2538 = vsel %vm2531, %v2530, %v2515
      %v2539 = vld [vmem:[%s7] sm:$0xff]
      %v2540 = vld [vmem:[%s7 + $0x8] sm:$0xff]
      %v2541 = vld [vmem:[%s7 + $0x10] sm:$0xff]
      %v2542 = vld [vmem:[%s7 + $0x18] sm:$0xff]
      %v2543 = vld [vmem:[%s7 + $0x20] sm:$0xff]
      %v2544 = vld [vmem:[%s7 + $0x28] sm:$0xff]
      %v2545 = vld [vmem:[%s7 + $0x30] sm:$0xff]
      %v2546 = vld [vmem:[%s7 + $0x38] sm:$0xff]
      %v2547 = vld [vmem:[%s7 + $0x40] sm:$0xff]
      %v2548 = vld [vmem:[%s7 + $0x48] sm:$0xff]
      %v2549 = vld [vmem:[%s7 + $0x50] sm:$0xff]
      %v2550 = vld [vmem:[%s7 + $0x58] sm:$0xff]
      %v2551 = vld [vmem:[%s7 + $0x60] sm:$0xff]
      %v2552 = vld [vmem:[%s7 + $0x68] sm:$0xff]
      %v2553 = vld [vmem:[%s7 + $0x70] sm:$0xff]
      %v2554 = vld [vmem:[%s7 + $0x78] sm:$0xff]
      %v2555 = vld [vmem:[%s7 + $0x80] sm:$0xff]
      %v2556 = vld [vmem:[%s7 + $0x88] sm:$0xff]
      %v2557 = vld [vmem:[%s8] sm:$0x1]
      %v2559 = vlaneseq
      %v2560 = vshrl.u32 %v2559, 7
      %v2561 = vsub.s32 0, %v2560
      %v2562 = vrot.slane %v2557, %v2561
      %v2564 = vsel %vm2219, %v2503, 0
      %v2566 = vsel %vm2219, %v2505, 0
      %v2568 = vsel %vm2219, %v2507, 0
      %v2570 = vsel %vm2219, %v2509, 0
      %v2572 = vsel %vm2219, %v2511, 0
      %v2574 = vsel %vm2219, %v2513, 0
      %v2576 = vsel %vm2219, %v2515, 0
      %2578 = vmatprep.subr.mxu0 0.0
      %2579 = vmatpush1.msra.mxu0 %v2539
      %2580 = vmatprep.subr.mxu0 0.0
      %2581 = vmatpush1.msra.mxu0 %v2540
      %2582 = vmatprep.subr.mxu0 0.0
      %2583 = vmatpush1.msra.mxu0 %v2541
      %2584 = vmatprep.subr.mxu0 0.0
      %2585 = vmatpush1.msra.mxu0 %v2542
      %2586 = vmatprep.subr.mxu0 0.0
      %2587 = vmatpush1.msra.mxu0 %v2543
      %2588 = vmatprep.subr.mxu0 0.0
      %2589 = vmatpush1.msra.mxu0 %v2544
      %2590 = vmatprep.subr.mxu0 0.0
      %2591 = vmatpush1.msra.mxu0 %v2545
      %2592 = vmatprep.subr.mxu0 0.0
      %2593 = vmatpush1.msra.mxu0 %v2546
      %2594 = vmatprep.subr.mxu0 0.0
      %2595 = vmatpush1.msra.mxu0 %v2547
      %2596 = vmatprep.subr.mxu0 0.0
      %2597 = vmatpush1.msra.mxu0 %v2548
      %2598 = vmatprep.subr.mxu0 0.0
      %2599 = vmatpush1.msra.mxu0 %v2549
      %2600 = vmatprep.subr.mxu0 0.0
      %2601 = vmatpush1.msra.mxu0 %v2550
      %2602 = vmatprep.subr.mxu0 0.0
      %2603 = vmatpush1.msra.mxu0 %v2551
      %2604 = vmatprep.subr.mxu0 0.0
      %2605 = vmatpush1.msra.mxu0 %v2552
      %2606 = vmatprep.subr.mxu0 0.0
      %2607 = vmatpush1.msra.mxu0 %v2553
      %2608 = vmatprep.subr.mxu0 0.0
      %2609 = vmatpush1.msra.mxu0 %v2554
      %2610 = vmatprep.subr.mxu0 0.0
      %2611 = vmatpush1.msra.mxu0 %v2555
      %2612 = vmatprep.subr.mxu0 0.0
      %2613 = vmatpush1.msra.mxu0 %v2556
      %2614 = vmatprep.subr.mxu0 0.0
      %2615 = vmatpush1.msra.mxu0 0.0
      %2616 = vmatprep.subr.mxu0 0.0
      %2617 = vmatpush1.msra.mxu0 0.0
      %2618 = vmatprep.subr.mxu0 0.0
      %2619 = vmatpush1.msra.mxu0 0.0
      %2620 = vmatprep.subr.mxu0 0.0
      %2621 = vmatpush1.msra.mxu0 0.0
      %2622 = vmatprep.subr.mxu0 0.0
      %2623 = vmatpush1.msra.mxu0 0.0
      %2624 = vmatprep.subr.mxu0 0.0
      %2625 = vmatpush1.msra.mxu0 0.0
      %2626 = vmatprep.subr.mxu0 0.0
      %2627 = vmatpush1.msra.mxu0 0.0
      %2628 = vmatprep.subr.mxu0 0.0
      %2629 = vmatpush1.msra.mxu0 0.0
      %2630 = vmatprep.subr.mxu0 0.0
      %2631 = vmatpush1.msra.mxu0 0.0
      %2632 = vmatprep.subr.mxu0 0.0
      %2633 = vmatpush1.msra.mxu0 0.0
      %2634 = vmatprep.subr.mxu0 0.0
      %2635 = vmatpush1.msra.mxu0 0.0
      %2636 = vmatprep.subr.mxu0 0.0
      %2637 = vmatpush1.msra.mxu0 0.0
      %2638 = vmatprep.subr.mxu0 0.0
      %2639 = vmatpush1.msra.mxu0 0.0
      %2640 = vmatprep.subr.mxu0 0.0
      %2641 = vmatpush1.msra.mxu0 0.0
      %2642 = vmatprep.mubr.f32.mxu0 %v2564
      %2643 = vmatmul.mubr.f32.gmra.mrb[0].mxu0 %v2532
      %v2644 = vpop.f32.mrb[0].mxu0
      %v2645 = vadd.f32 %v2562, %v2644
      %v2646 = vpop.f32.mrb[0].mxu0
      %2647 = vmatprep.mubr.f32.mxu0 %v2566
      %2648 = vmatmul.mubr.f32.gmra.mrb[0].mxu0 %v2533
      %v2649 = vpop.f32.mrb[0].mxu0
      %v2650 = vadd.f32 %v2562, %v2649
      %v2651 = vpop.f32.mrb[0].mxu0
      %2652 = vmatprep.mubr.f32.mxu0 %v2568
      %2653 = vmatmul.mubr.f32.gmra.mrb[0].mxu0 %v2534
      %v2654 = vpop.f32.mrb[0].mxu0
      %v2655 = vadd.f32 %v2562, %v2654
      %v2656 = vpop.f32.mrb[0].mxu0
      %2657 = vmatprep.mubr.f32.mxu0 %v2570
      %2658 = vmatmul.mubr.f32.gmra.mrb[0].mxu0 %v2535
      %v2659 = vpop.f32.mrb[0].mxu0
      %v2660 = vadd.f32 %v2562, %v2659
      %v2661 = vpop.f32.mrb[0].mxu0
      %2662 = vmatprep.mubr.f32.mxu0 %v2572
      %2663 = vmatmul.mubr.f32.gmra.mrb[0].mxu0 %v2536
      %v2664 = vpop.f32.mrb[0].mxu0
      %v2665 = vadd.f32 %v2562, %v2664
      %v2666 = vpop.f32.mrb[0].mxu0
      %2667 = vmatprep.mubr.f32.mxu0 %v2574
      %2668 = vmatmul.mubr.f32.gmra.mrb[0].mxu0 %v2537
      %v2669 = vpop.f32.mrb[0].mxu0
      %v2670 = vadd.f32 %v2562, %v2669
      %v2671 = vpop.f32.mrb[0].mxu0
      %2672 = vmatprep.mubr.f32.mxu0 %v2576
      %2673 = vmatmul.mubr.f32.gmra.mrb[0].mxu0 %v2538
      %v2674 = vpop.f32.mrb[0].mxu0
      %v2675 = vadd.f32 %v2562, %v2674
      %v2676 = vpop.f32.mrb[0].mxu0
      %2677 = vdwg.mxu0
      %vm2678 = vcmp.ge.f32.partialorder %v2645, 0.0
      %vm2679 = vcmp.ge.f32.partialorder %v2650, 0.0
      %vm2680 = vcmp.ge.f32.partialorder %v2655, 0.0
      %vm2681 = vcmp.ge.f32.partialorder %v2660, 0.0
      %vm2682 = vcmp.ge.f32.partialorder %v2665, 0.0
      %vm2683 = vcmp.ge.f32.partialorder %v2670, 0.0
      %vm2684 = vcmp.ge.f32.partialorder %v2675, 0.0
      %v2685 = vld [vmem:[%s9] sm:$0x1]
      %v2687 = vlaneseq
      %v2688 = vshrl.u32 %v2687, 7
      %v2689 = vsub.s32 0, %v2688
      %v2690 = vrot.slane %v2685, %v2689
      %v2692 = vmul.f32 %v2690, %v2645
      %v2693 = vmul.f32 %v2690, %v2650
      %v2694 = vmul.f32 %v2690, %v2655
      %v2695 = vmul.f32 %v2690, %v2660
      %v2696 = vmul.f32 %v2690, %v2665
      %v2697 = vmul.f32 %v2690, %v2670
      %v2698 = vmul.f32 %v2690, %v2675
      %v2699 = vsel %vm2678, %v2645, %v2692
      %v2700 = vsel %vm2679, %v2650, %v2693
      %v2701 = vsel %vm2680, %v2655, %v2694
      %v2702 = vsel %vm2681, %v2660, %v2695
      %v2703 = vsel %vm2682, %v2665, %v2696
      %v2704 = vsel %vm2683, %v2670, %v2697
      %v2705 = vsel %vm2684, %v2675, %v2698
      %v2706 = vld [vmem:[%s10] sm:$0xff]
      %v2707 = vld [vmem:[%s10 + $0x8] sm:$0xff]
      %v2708 = vld [vmem:[%s10 + $0x10] sm:$0xff]
      %v2709 = vld [vmem:[%s10 + $0x18] sm:$0xff]
      %v2710 = vld [vmem:[%s11] sm:$0x1]
      %v2712 = vlaneseq
      %v2713 = vshrl.u32 %v2712, 7
      %v2714 = vsub.s32 0, %v2713
      %v2715 = vrot.slane %v2710, %v2714
      %v2718 = vsel %vm2313, %v2699, 0
      %v2721 = vsel %vm2313, %v2700, 0
      %v2724 = vsel %vm2313, %v2701, 0
      %v2727 = vsel %vm2313, %v2702, 0
      %v2730 = vsel %vm2313, %v2703, 0
      %v2733 = vsel %vm2313, %v2704, 0
      %v2736 = vsel %vm2313, %v2705, 0
      %2738 = vmatprep.subr.mxu0 0.0
      %2739 = vmatpush1.msra.mxu0 %v2706
      %2740 = vmatprep.subr.mxu0 0.0
      %2741 = vmatpush1.msra.mxu0 %v2707
      %2742 = vmatprep.subr.mxu0 0.0
      %2743 = vmatpush1.msra.mxu0 %v2708
      %2744 = vmatprep.subr.mxu0 0.0
      %2745 = vmatpush1.msra.mxu0 %v2709
      %2746 = vmatprep.subr.mxu0 0.0
      %2747 = vmatpush1.msra.mxu0 0.0
      %2748 = vmatprep.subr.mxu0 0.0
      %2749 = vmatpush1.msra.mxu0 0.0
      %2750 = vmatprep.subr.mxu0 0.0
      %2751 = vmatpush1.msra.mxu0 0.0
      %2752 = vmatprep.subr.mxu0 0.0
      %2753 = vmatpush1.msra.mxu0 0.0
      %2754 = vmatprep.subr.mxu0 0.0
      %2755 = vmatpush1.msra.mxu0 0.0
      %2756 = vmatprep.subr.mxu0 0.0
      %2757 = vmatpush1.msra.mxu0 0.0
      %2758 = vmatprep.subr.mxu0 0.0
      %2759 = vmatpush1.msra.mxu0 0.0
      %2760 = vmatprep.subr.mxu0 0.0
      %2761 = vmatpush1.msra.mxu0 0.0
      %2762 = vmatprep.subr.mxu0 0.0
      %2763 = vmatpush1.msra.mxu0 0.0
      %2764 = vmatprep.subr.mxu0 0.0
      %2765 = vmatpush1.msra.mxu0 0.0
      %2766 = vmatprep.subr.mxu0 0.0
      %2767 = vmatpush1.msra.mxu0 0.0
      %2768 = vmatprep.subr.mxu0 0.0
      %2769 = vmatpush1.msra.mxu0 0.0
      %2770 = vmatprep.subr.mxu0 0.0
      %2771 = vmatpush1.msra.mxu0 0.0
      %2772 = vmatprep.subr.mxu0 0.0
      %2773 = vmatpush1.msra.mxu0 0.0
      %2774 = vmatprep.subr.mxu0 0.0
      %2775 = vmatpush1.msra.mxu0 0.0
      %2776 = vmatprep.subr.mxu0 0.0
      %2777 = vmatpush1.msra.mxu0 0.0
      %2778 = vmatprep.subr.mxu0 0.0
      %2779 = vmatpush1.msra.mxu0 0.0
      %2780 = vmatprep.subr.mxu0 0.0
      %2781 = vmatpush1.msra.mxu0 0.0
      %2782 = vmatprep.subr.mxu0 0.0
      %2783 = vmatpush1.msra.mxu0 0.0
      %2784 = vmatprep.subr.mxu0 0.0
      %2785 = vmatpush1.msra.mxu0 0.0
      %2786 = vmatprep.subr.mxu0 0.0
      %2787 = vmatpush1.msra.mxu0 0.0
      %2788 = vmatprep.subr.mxu0 0.0
      %2789 = vmatpush1.msra.mxu0 0.0
      %2790 = vmatprep.subr.mxu0 0.0
      %2791 = vmatpush1.msra.mxu0 0.0
      %2792 = vmatprep.subr.mxu0 0.0
      %2793 = vmatpush1.msra.mxu0 0.0
      %2794 = vmatprep.subr.mxu0 0.0
      %2795 = vmatpush1.msra.mxu0 0.0
      %2796 = vmatprep.subr.mxu0 0.0
      %2797 = vmatpush1.msra.mxu0 0.0
      %2798 = vmatprep.subr.mxu0 0.0
      %2799 = vmatpush1.msra.mxu0 0.0
      %2800 = vmatprep.subr.mxu0 0.0
      %2801 = vmatpush1.msra.mxu0 0.0
      %2802 = vmatprep.mubr.f32.mxu0 0.0
      %2803 = vmatmul.mubr.f32.gmra.mrb[0].mxu0 %v2718
      %v2804 = vpop.f32.mrb[0].mxu0
      %v2805 = vadd.f32 %v2715, %v2804
      %v2806 = vpop.f32.mrb[0].mxu0
      %2807 = vmatprep.mubr.f32.mxu0 0.0
      %2808 = vmatmul.mubr.f32.gmra.mrb[0].mxu0 %v2721
      %v2809 = vpop.f32.mrb[0].mxu0
      %v2810 = vadd.f32 %v2715, %v2809
      %v2811 = vpop.f32.mrb[0].mxu0
      %2812 = vmatprep.mubr.f32.mxu0 0.0
      %2813 = vmatmul.mubr.f32.gmra.mrb[0].mxu0 %v2724
      %v2814 = vpop.f32.mrb[0].mxu0
      %v2815 = vadd.f32 %v2715, %v2814
      %v2816 = vpop.f32.mrb[0].mxu0
      %2817 = vmatprep.mubr.f32.mxu0 0.0
      %2818 = vmatmul.mubr.f32.gmra.mrb[0].mxu0 %v2727
      %v2819 = vpop.f32.mrb[0].mxu0
      %v2820 = vadd.f32 %v2715, %v2819
      %v2821 = vpop.f32.mrb[0].mxu0
      %2822 = vmatprep.mubr.f32.mxu0 0.0
      %2823 = vmatmul.mubr.f32.gmra.mrb[0].mxu0 %v2730
      %v2824 = vpop.f32.mrb[0].mxu0
      %v2825 = vadd.f32 %v2715, %v2824
      %v2826 = vpop.f32.mrb[0].mxu0
      %2827 = vmatprep.mubr.f32.mxu0 0.0
      %2828 = vmatmul.mubr.f32.gmra.mrb[0].mxu0 %v2733
      %v2829 = vpop.f32.mrb[0].mxu0
      %v2830 = vadd.f32 %v2715, %v2829
      %v2831 = vpop.f32.mrb[0].mxu0
      %2832 = vmatprep.mubr.f32.mxu0 0.0
      %2833 = vmatmul.mubr.f32.gmra.mrb[0].mxu0 %v2736
      %v2834 = vpop.f32.mrb[0].mxu0
      %v2835 = vadd.f32 %v2715, %v2834
      %v2836 = vpop.f32.mrb[0].mxu0
      %2837 = vdwg.mxu0
      %2845 = vrot.lane.b32.xlu0 %v2805, 127
      %v2846 = vpop.permute.xlu0 %2845
      %2847 = vrot.lane.b32.xlu0 %v2810, 127
      %v2848 = vpop.permute.xlu0 %2847
      %2849 = vrot.lane.b32.xlu0 %v2815, 127
      %v2850 = vpop.permute.xlu0 %2849
      %2851 = vrot.lane.b32.xlu0 %v2820, 127
      %v2852 = vpop.permute.xlu0 %2851
      %2853 = vrot.lane.b32.xlu0 %v2825, 127
      %v2854 = vpop.permute.xlu0 %2853
      %2855 = vrot.lane.b32.xlu0 %v2830, 127
      %v2856 = vpop.permute.xlu0 %2855
      %2857 = vrot.lane.b32.xlu0 %v2835, 127
      %v2858 = vpop.permute.xlu0 %2857
      %v2866 = vsub.f32 %v2805, %v2846
      %v2867 = vsub.f32 %v2810, %v2848
      %v2868 = vsub.f32 %v2815, %v2850
      %v2869 = vsub.f32 %v2820, %v2852
      %v2870 = vsub.f32 %v2825, %v2854
      %v2871 = vsub.f32 %v2830, %v2856
      %v2872 = vsub.f32 %v2835, %v2858
      %v2873 = vsub.f32 0.0, %v2866
      %v2874 = vsub.f32 0.0, %v2867
      %v2875 = vsub.f32 0.0, %v2868
      %v2876 = vsub.f32 0.0, %v2869
      %v2877 = vsub.f32 0.0, %v2870
      %v2878 = vsub.f32 0.0, %v2871
      %v2879 = vsub.f32 0.0, %v2872
      %v2880 = vmul.f32 %v2873, 1.442695
      %v2881 = vpow.pop %v2880
      %v2882 = vmul.f32 %v2874, 1.442695
      %v2883 = vpow.pop %v2882
      %v2884 = vmul.f32 %v2875, 1.442695
      %v2885 = vpow.pop %v2884
      %v2886 = vmul.f32 %v2876, 1.442695
      %v2887 = vpow.pop %v2886
      %v2888 = vmul.f32 %v2877, 1.442695
      %v2889 = vpow.pop %v2888
      %v2890 = vmul.f32 %v2878, 1.442695
      %v2891 = vpow.pop %v2890
      %v2892 = vmul.f32 %v2879, 1.442695
      %v2893 = vpow.pop %v2892
      %v2894 = vadd.f32 %v2881, 1.0
      %v2895 = vadd.f32 %v2883, 1.0
      %v2896 = vadd.f32 %v2885, 1.0
      %v2897 = vadd.f32 %v2887, 1.0
      %v2898 = vadd.f32 %v2889, 1.0
      %v2899 = vadd.f32 %v2891, 1.0
      %v2900 = vadd.f32 %v2893, 1.0
      %v2901 = vrcp.pop %v2894
      %v2902 = vmul.f32 1.0, %v2901
      %v2903 = vrcp.pop %v2895
      %v2904 = vmul.f32 1.0, %v2903
      %v2905 = vrcp.pop %v2896
      %v2906 = vmul.f32 1.0, %v2905
      %v2907 = vrcp.pop %v2897
      %v2908 = vmul.f32 1.0, %v2907
      %v2909 = vrcp.pop %v2898
      %v2910 = vmul.f32 1.0, %v2909
      %v2911 = vrcp.pop %v2899
      %v2912 = vmul.f32 1.0, %v2911
      %v2913 = vrcp.pop %v2900
      %v2914 = vmul.f32 1.0, %v2913
      %v2915 = vlaneseq
      %v2916 = vand.u32 %v2915, 127
      %vm2917 = vcmp.lt.s32.totalorder %v2916, 4
      %vm2918 = vcmp.eq.s32.totalorder %v2916, 4
      %v2919 = vsub.f32 1.0, %v2902
      %v2920 = vsub.f32 1.0, %v2904
      %v2921 = vsub.f32 1.0, %v2906
      %v2922 = vsub.f32 1.0, %v2908
      %v2923 = vsub.f32 1.0, %v2910
      %v2924 = vsub.f32 1.0, %v2912
      %v2925 = vsub.f32 1.0, %v2914
      %2927 = vset.pattern.permute.xlu0 4
      %2928 = vperm.xlu0 %2927, %v2902
      %v2929 = vpop.permute.xlu0 %2928
      %2932 = vset.pattern.permute.xlu0 4
      %2933 = vperm.xlu0 %2932, %v2904
      %v2934 = vpop.permute.xlu0 %2933
      %2937 = vset.pattern.permute.xlu0 4
      %2938 = vperm.xlu0 %2937, %v2906
      %v2939 = vpop.permute.xlu0 %2938
      %2942 = vset.pattern.permute.xlu0 4
      %2943 = vperm.xlu0 %2942, %v2908
      %v2944 = vpop.permute.xlu0 %2943
      %2947 = vset.pattern.permute.xlu0 4
      %2948 = vperm.xlu0 %2947, %v2910
      %v2949 = vpop.permute.xlu0 %2948
      %2952 = vset.pattern.permute.xlu0 4
      %2953 = vperm.xlu0 %2952, %v2912
      %v2954 = vpop.permute.xlu0 %2953
      %2957 = vset.pattern.permute.xlu0 4
      %2958 = vperm.xlu0 %2957, %v2914
      %v2959 = vpop.permute.xlu0 %2958
      %2962 = vset.pattern.permute.xlu0 4
      %2963 = vperm.xlu0 %2962, %v2919
      %v2964 = vpop.permute.xlu0 %2963
      %2967 = vset.pattern.permute.xlu0 4
      %2968 = vperm.xlu0 %2967, %v2920
      %v2969 = vpop.permute.xlu0 %2968
      %2972 = vset.pattern.permute.xlu0 4
      %2973 = vperm.xlu0 %2972, %v2921
      %v2974 = vpop.permute.xlu0 %2973
      %2977 = vset.pattern.permute.xlu0 4
      %2978 = vperm.xlu0 %2977, %v2922
      %v2979 = vpop.permute.xlu0 %2978
      %2982 = vset.pattern.permute.xlu0 4
      %2983 = vperm.xlu0 %2982, %v2923
      %v2984 = vpop.permute.xlu0 %2983
      %2987 = vset.pattern.permute.xlu0 4
      %2988 = vperm.xlu0 %2987, %v2924
      %v2989 = vpop.permute.xlu0 %2988
      %2992 = vset.pattern.permute.xlu0 4
      %2993 = vperm.xlu0 %2992, %v2925
      %v2994 = vpop.permute.xlu0 %2993
      %v2996 = vsel %vm2918, %v2929, %v2964
      %v2997 = vsel %vm2918, %v2934, %v2969
      %v2998 = vsel %vm2918, %v2939, %v2974
      %v2999 = vsel %vm2918, %v2944, %v2979
      %v3000 = vsel %vm2918, %v2949, %v2984
      %v3001 = vsel %vm2918, %v2954, %v2989
      %v3002 = vsel %vm2918, %v2959, %v2994
      %v3003 = vsel %vm2917, %v2805, %v2996
      %v3004 = vsel %vm2917, %v2810, %v2997
      %v3005 = vsel %vm2917, %v2815, %v2998
      %v3006 = vsel %vm2917, %v2820, %v2999
      %v3007 = vsel %vm2917, %v2825, %v3000
      %v3008 = vsel %vm2917, %v2830, %v3001
      %v3009 = vsel %vm2917, %v2835, %v3002
      %3010 = vst.msk [vmem:[%s413] sm:$0xff] %vm799, %v3003
      %3011 = vst.msk [vmem:[%s413 + $0x8] sm:$0xff] %vm799, %v3004
      %3012 = vst.msk [vmem:[%s413 + $0x10] sm:$0xff] %vm799, %v3005
      %3013 = vst.msk [vmem:[%s413 + $0x18] sm:$0xff] %vm799, %v3006
      %3014 = vst.msk [vmem:[%s413 + $0x20] sm:$0xff] %vm799, %v3007
      %3015 = vst.msk [vmem:[%s413 + $0x28] sm:$0xff] %vm799, %v3008
      %3016 = vst.msk [vmem:[%s413 + $0x30] sm:$0xff] %vm799, %v3009
      %p3017 = scmp.lt.s32.totalorder %s23, 1
      %s3018 = scalar_select %p3017, %s23, 1
      %s3019 = smul.addr %s3018, 7
      %s3020 = smul.addr %s3019, 8
      %s3021 = scalar_lea.vmem %s12, %s3020
      // Predicated region
      $region69: #{tpu_custom_call.1} parent=67 // pred_check
        %p3022 = pneg %p298
      $region70: #{tpu_custom_call.1} parent=67 // pred_check_branch
        %3024 = sbr.rel (%p3022) target = $region72
      $region71: #{tpu_custom_call.1} parent=67 // pred_region
        _
      $region72: #{tpu_custom_call.1} parent=67 // pred_fallthru
        _
    $region68: #{tpu_custom_call.1} parent=5 // pred_fallthru
      _
    %p3025 = scmp.le.s32.totalorder 2, %s18
    // Predicated region
    $region73: #{tpu_custom_call.1} parent=5 // pred_check
      %p3026 = pneg %p3025
    $region74: #{tpu_custom_call.1} parent=5 // pred_check_branch
      %3028 = sbr.rel (%p3026) target = $region76
    $region75: #{tpu_custom_call.1} parent=5 // pred_region
      %s3029 = ssub.s32 %s18, 2
      // Predicated region
      $region77: #{tpu_custom_call.1} parent=75 // pred_check
        %p3030 = pneg %p304
      $region78: #{tpu_custom_call.1} parent=75 // pred_check_branch
        %3032 = sbr.rel (%p3030) target = $region80
      $region79: #{tpu_custom_call.1} parent=75 // pred_region
        %p3033 = scmp.lt.s32.totalorder %s24, 1
        %s3034 = scalar_select %p3033, %s24, 1
        %s3035 = smul.addr %s3034, 7
        %s3036 = smul.addr %s3035, 8
        %s3037 = scalar_lea.vmem %s12, %s3036
      $region80: #{tpu_custom_call.1} parent=75 // pred_fallthru
        _
    $region76: #{tpu_custom_call.1} parent=5 // pred_fallthru
      _
  $region6: #{tpu_custom_call.1} parent=0 // loop_footer
    %s22 = sadd.s32 1, %s18
  $region7: #{tpu_custom_call.1} parent=0 // loop_footer_branch
    %17 = sbr.rel target = $region3
  $region8: #{tpu_custom_call.1} parent=0 // loop_exit
    _

</llo_original>
